<compile_context>
chip_gen: v7x
topology: tpu7x:2x2x1
jax: 0.10.0
libtpu: 0.0.40
codegen_flags: <defaults>
</compile_context>

<pallas_src>
import functools

import jax
import jax.numpy as jnp
from jax.experimental import pallas as pl
from jax.experimental.pallas import tpu as pltpu

# ----- const surrogate ------------------------------------------------------
DIM = 8                    # const.dimension
DIM_S = 4                  # const.dimension_s
DIM_MM = DIM * DIM         # const.dimension_mm == dimension * dimension

IN_FEATURES = 16
HIDDEN = 32
H1_WIDTH = 256             # fused layer-1 width: 6*32 real + 64 zero pad


def _round_up(v, m):
    return (v + m - 1) // m * m


def _vpu_supports_bf16():
    """Heuristic: v6e / v7x have a bf16 VALU; v5e and older do not."""
    try:
        kind = jax.devices()[0].device_kind.lower()
    except Exception:
        return True
    return not any(tag in kind for tag in ("v2", "v3", "v4", "v5"))


# ----- fused forward kernel --------------------------------------------------
def _dnn_fused_kernel(x_ref, w1_ref, b1_ref, wy_ref, by_ref, wlo_ref, blo_ref,
                      wu2_ref, bu2_ref, selp_ref, mhi_ref, o_ref, *,
                      num_alpha, bf16_vpu):
    f32 = jnp.float32
    bf16 = jnp.bfloat16

    x = x_ref[...]                                                   # (TL, 16)

    # One fused layer-1 matmul for all six MLPs; tanh on the EUP.
    h = jnp.tanh(jnp.dot(x, w1_ref[...], preferred_element_type=f32)
                 + b1_ref[...])                                      # (TL, 256)
    h_lo = h[:, :128]      # [mlp_0 | mlp_1 | mlp_2 | mlp_3] hiddens (128-aligned slice)
    h_hi = h[:, 128:]      # [mlp_4 | mlp_5 | zero pad ] hiddens

    # u0 already placed into every alpha's 32-wide output slot (small, f32).
    acc0 = (jnp.dot(h_lo, wlo_ref[...], preferred_element_type=f32)
            + blo_ref[...])                                          # (TL, OW)

    # Packed u2 of mlp_4|mlp_5: bf16 MXU operands, f32 accumulation.
    u2 = (jnp.dot(h_hi.astype(bf16), wu2_ref[...],
                  preferred_element_type=f32) + bu2_ref[...])        # (TL, 4096)
    if bf16_vpu:
        u2 = u2.astype(bf16)

    mhi = mhi_ref[...]                                               # (1, 128): 1 on lanes >= 64
    mlo = 1.0 - mhi

    def body(a, acc):
        # y for this alpha; both 64-lane halves of yy equal y (weight
        # duplication in the wrapper), so z = [y | y^2] needs no lane concat.
        yy = (jnp.dot(h_lo, wy_ref[a], preferred_element_type=f32)
              + by_ref[a])                                           # (TL, 128)
        z = yy * mlo + (yy * yy) * mhi                               # (TL, 128)
        if bf16_vpu:
            z = z.astype(bf16)
        # Tile z across all 32 chunks (128-aligned concat), multiply with the
        # packed u2, then one bf16 matmul does chunk-sum + output placement.
        ztiled = jnp.concatenate([z] * (DIM * DIM_S), axis=-1)       # (TL, 4096)
        prod = u2 * ztiled
        if not bf16_vpu:
            prod = prod.astype(bf16)
        return acc + jnp.dot(prod, selp_ref[a], preferred_element_type=f32)

    acc = jax.lax.fori_loop(0, num_alpha, body, acc0)
    o_ref[...] = acc.astype(o_ref.dtype)


# ----- wrapper: weight packing + pallas_call ---------------------------------
def pack_params(params, alpha_list, out_width):
    A = len(alpha_list)
    dds = DIM * DIM_S          # 32
    dmm = DIM_MM               # 64
    f32 = jnp.float32
    bf16 = jnp.bfloat16

    def p(i):
        return params[f"mlp_{i}"]

    # --- fused layer 1: lanes [0:96)=mlp_0/1/2, [96:128)=mlp_3,
    #                    [128:192)=mlp_4/5, [192:256)=zero pad.
    w1 = jnp.concatenate([p(i)[0] for i in range(6)]
                         + [jnp.zeros((IN_FEATURES, 64), f32)], axis=1)      # (16, 256)
    b1 = jnp.concatenate([p(i)[1] for i in range(6)]
                         + [jnp.zeros((64,), f32)], axis=0).reshape(1, -1)   # (1, 256)

    # --- per-alpha y weights on h_lo (K padded to 128): rows 0..95 hold
    # sum_k alpha^k * W2_k stacked, rows 96..127 (mlp_3 hidden) are zero;
    # duplicated into both 64-lane halves so the kernel gets [y | y].
    wy, by = [], []
    for alpha in alpha_list:
        alpha = float(alpha)
        wa = jnp.concatenate([(alpha ** k) * p(k)[2] for k in range(3)], axis=0)   # (96, 64)
        wa = jnp.concatenate([wa, jnp.zeros((HIDDEN, dmm), f32)], axis=0)          # (128, 64)
        ba = sum((alpha ** k) * p(k)[3] for k in range(3)).reshape(1, -1)          # (1, 64)
        wy.append(jnp.concatenate([wa, wa], axis=1))                               # (128, 128)
        by.append(jnp.concatenate([ba, ba], axis=1))                               # (1, 128)
    wyp = jnp.stack(wy, axis=0)                                                    # (A, 128, 128)
    byp = jnp.stack(by, axis=0)                                                    # (A, 1, 128)

    # --- u0 on h_lo: rows 0..95 zero, rows 96..127 = mlp_3's W2 replicated
    # into every alpha's 32-wide output slot, zero-padded to out_width.
    pad = out_width - A * dds
    w0 = p(3)[2]                                                                   # (32, 32)
    b0 = p(3)[3].reshape(1, -1)                                                    # (1, 32)
    w0_rep = jnp.concatenate([w0] * A + ([jnp.zeros((HIDDEN, pad), f32)] if pad else []), axis=1)
    wlo = jnp.concatenate([jnp.zeros((3 * HIDDEN, out_width), f32), w0_rep], axis=0)  # (128, OW)
    blo = jnp.concatenate([b0] * A + ([jnp.zeros((1, pad), f32)] if pad else []), axis=1)  # (1, OW)

    # --- packed u2 weights on h_hi (K padded to 128, stored bf16 for the MXU):
    # chunk i (128 lanes) = [w4[:, i, :64] | w5[:, i, :64]].
    w4 = p(4)[2].reshape(HIDDEN, dds, dmm)
    w5 = p(5)[2].reshape(HIDDEN, dds, dmm)
    zero = jnp.zeros_like(w4)
    wu2 = jnp.concatenate([jnp.concatenate([w4, zero], axis=-1),
                           jnp.concatenate([zero, w5], axis=-1)], axis=0)          # (64, 32, 128)
    wu2 = wu2.reshape(2 * HIDDEN, dds * 2 * dmm)                                   # (64, 4096)
    wu2 = jnp.concatenate([wu2, jnp.zeros_like(wu2)], axis=0).astype(bf16)         # (128, 4096)
    b4 = p(4)[3].reshape(dds, dmm)
    b5 = p(5)[3].reshape(dds, dmm)
    bu2 = jnp.concatenate([b4, b5], axis=-1).reshape(1, dds * 2 * dmm)             # (1, 4096) f32

    # --- fused chunk-sum + output-placement selector per alpha (exact in bf16):
    # selp[a][i*128 + j, a*32 + i] = 1.
    sel = jnp.repeat(jnp.eye(dds, dtype=f32), 2 * dmm, axis=0)                     # (4096, 32)
    selp = jnp.stack(
        [jnp.pad(sel, ((0, 0), (a * dds, out_width - (a + 1) * dds)))
         for a in range(A)], axis=0).astype(bf16)                                  # (A, 4096, OW)

    # --- z mask: 0 on lanes [0, 64) (y half), 1 on lanes [64, 128) (y^2 half).
    mhi = (jnp.arange(2 * dmm) >= dmm).astype(f32).reshape(1, -1)                  # (1, 128)

    return (w1, b1, wyp, byp, wlo, blo, wu2, bu2, selp, mhi)


def dnn_forward(params, x, alpha_list, *, block_l=256, bf16_vpu=None):
    if bf16_vpu is None:
        bf16_vpu = _vpu_supports_bf16()

    L = x.shape[0]
    A = len(alpha_list)
    dds = DIM * DIM_S
    ow = _round_up(A * dds, 128)          # lane-dense output width

    packed = pack_params(params, alpha_list, ow)
    (w1, b1, wyp, byp, wlo, blo, wu2, bu2, selp, mhi) = packed

    # Row tiling. Blocks are multiples of 8 sublanes; ensure >= 2 grid steps
    # whenever possible so v7x's second TensorCore gets work under "parallel".
    block_l = _round_up(max(block_l, 8), 8)
    lp = _round_up(L, 8)
    if lp > 8:
        tl = min(block_l, _round_up(pl.cdiv(lp, 2), 8))
    else:
        tl = lp
    lp = _round_up(lp, tl)
    xp = x if lp == L else jnp.pad(x, ((0, lp - L), (0, 0)))
    grid = (lp // tl,)

    def full2d(arr):
        return pl.BlockSpec(arr.shape, lambda i: (0, 0))

    def full3d(arr):
        return pl.BlockSpec(arr.shape, lambda i: (0, 0, 0))

    # Advisory cost estimate for the XLA scheduler.
    dmm2 = 2 * DIM_MM
    flops_per_row = (
        2 * IN_FEATURES * H1_WIDTH            # fused layer 1
        + 2 * 128 * ow                        # u0 placement matmul
        + 2 * 128 * (dds * dmm2)              # packed u2 matmul
        + A * (2 * 128 * dmm2                 # per-alpha y matmul
               + 6 * dmm2                     # z mask / square
               + 2 * (dds * dmm2)             # tile + elementwise multiply
               + 2 * (dds * dmm2) * ow)       # fused chunk-sum + placement matmul
    )
    weight_bytes = sum(int(a.size) * a.dtype.itemsize for a in packed)
    cost = pl.CostEstimate(
        flops=int(lp) * int(flops_per_row),
        transcendentals=int(lp) * H1_WIDTH,
        bytes_accessed=4 * int(lp) * (IN_FEATURES + ow) + int(weight_bytes),
    )

    out2d = pl.pallas_call(
        functools.partial(_dnn_fused_kernel, num_alpha=A, bf16_vpu=bf16_vpu),
        out_shape=jax.ShapeDtypeStruct((lp, ow), jnp.float32),
        grid=grid,
        in_specs=[
            pl.BlockSpec((tl, IN_FEATURES), lambda i: (i, 0)),
            full2d(w1), full2d(b1),
            full3d(wyp), full3d(byp),
            full2d(wlo), full2d(blo),
            full2d(wu2), full2d(bu2),
            full3d(selp), full2d(mhi),
        ],
        out_specs=pl.BlockSpec((tl, ow), lambda i: (i, 0)),
        compiler_params=pltpu.CompilerParams(
            dimension_semantics=("parallel",),
            # 48 MiB: comfortable for TL<=512 on v5e/v6e (128 MiB physical)
            # and leaves headroom under v7x's 64 MiB physical VMEM.
            vmem_limit_bytes=48 * 1024 * 1024,
        ),
        cost_estimate=cost,
    )(xp, w1, b1, wyp, byp, wlo, blo, wu2, bu2, selp, mhi)

    return out2d[:L, :A * dds].reshape(L, A, DIM, DIM_S)


# ----- synthetic MLPs (deterministic init) -----------------------------------
def init_mlp_params(key, in_dim, hidden, out_dim, scale=0.1):
    k1, k2 = jax.random.split(key)
    w1 = scale * jax.random.normal(k1, (in_dim, hidden), jnp.float32)
    b1 = jnp.zeros((hidden,), jnp.float32)
    w2 = scale * jax.random.normal(k2, (hidden, out_dim), jnp.float32)
    b2 = jnp.zeros((out_dim,), jnp.float32)
    return (w1, b1, w2, b2)


def init_dnn_params(key):
    keys = jax.random.split(key, 6)
    params = {}
    for i in range(3):                                   # mlp_0/1/2 -> (D, D)
        params[f"mlp_{i}"] = init_mlp_params(keys[i], IN_FEATURES, HIDDEN, DIM * DIM)
    params["mlp_3"] = init_mlp_params(keys[3], IN_FEATURES, HIDDEN, DIM * DIM_S)
    for i in (4, 5):                                     # mlp_4/5 -> (D*Ds, D*D)
        params[f"mlp_{i}"] = init_mlp_params(keys[i], IN_FEATURES, HIDDEN,
                                             DIM * DIM_S * DIM_MM)
    return params


# ----- pure-JAX reference (mirrors the torch forward) -------------------------
def dnn_forward_ref(params, x, alpha_list):
    hi = jax.lax.Precision.HIGHEST

    def mlp(p, xx):
        w1, b1, w2, b2 = p
        return jnp.dot(jnp.tanh(jnp.dot(xx, w1, precision=hi) + b1), w2,
                       precision=hi) + b2

    L = x.shape[0]
    u1 = [mlp(params[f"mlp_{i}"], x) for i in range(3)]
    u2 = [mlp(params[f"mlp_{i}"], x).reshape(L, DIM * DIM_S, DIM_MM) for i in (4, 5)]
    u0 = mlp(params["mlp_3"], x)
    res = []
    for alpha in alpha_list:
        y = u1[0] + alpha * u1[1] + alpha * alpha * u1[2]
        tmp = jnp.zeros((L, DIM * DIM_S), jnp.float32)
        for idx, u_ in enumerate(u2):
            z = y ** (idx + 1)
            tmp = tmp + jnp.einsum("lij,lj->li", u_, z, precision=hi)
        tmp = tmp + u0
        res.append(tmp.reshape(L, 1, DIM, DIM_S))
    return jnp.concatenate(res, axis=1)


if __name__ == "__main__":
    key = jax.random.PRNGKey(0)
    kp, kx = jax.random.split(key)
    params = init_dnn_params(kp)

    L = 2                                   # batch (== len(x) in the torch code)
    x = jax.random.normal(kx, (L, IN_FEATURES), jnp.float32)
    alpha_list = (0.5, 1.0, 2.0)

    out = dnn_forward(params, x, alpha_list)
    out = jax.block_until_ready(out)
    assert out.shape == (L, len(alpha_list), DIM, DIM_S)

    ref = dnn_forward_ref(params, x, alpha_list)
    # bf16 MXU operands on the dominant matmuls (per perf review) -> validate
    # with a scale-aware tolerance instead of a raw f32 1e-3 tolerance.
    err = float(jnp.max(jnp.abs(out - ref)))
    scale = float(jnp.max(jnp.abs(ref)))
    assert err <= 3e-2 * max(scale, 1.0), f"mismatch vs reference: err={err}, scale={scale}"

    print("KERNEL_OK")
</pallas_src>

<mosaic_0001>
module attributes {stable_mosaic.version = 11 : i64} {
  func.func @_dnn_fused_kernel(%arg0: i32, %arg1: memref<8x16xf32, #tpu.memory_space<vmem>>, %arg2: memref<16x256xf32, #tpu.memory_space<vmem>>, %arg3: memref<1x256xf32, #tpu.memory_space<vmem>>, %arg4: memref<3x128x128xf32, #tpu.memory_space<vmem>>, %arg5: memref<3x1x128xf32, #tpu.memory_space<vmem>>, %arg6: memref<128x128xf32, #tpu.memory_space<vmem>>, %arg7: memref<1x128xf32, #tpu.memory_space<vmem>>, %arg8: memref<128x4096xbf16, #tpu.memory_space<vmem>>, %arg9: memref<1x4096xf32, #tpu.memory_space<vmem>>, %arg10: memref<3x4096x128xbf16, #tpu.memory_space<vmem>>, %arg11: memref<1x128xf32, #tpu.memory_space<vmem>>, %arg12: memref<8x128xf32, #tpu.memory_space<vmem>>) attributes {dimension_semantics = [#tpu.dimension_semantics<parallel>], iteration_bounds = array<i64: 1>, scalar_prefetch = 0 : i64, scratch_operands = 0 : i64, tpu.core_type = #tpu.core_type<tc>, window_params = [{transform_indices = @transform_0, window_bounds = array<i64: 8, 16>}, {pipeline_mode = #tpu.pipeline_mode<synchronous>, transform_indices = @transform_1, window_bounds = array<i64: 16, 256>}, {pipeline_mode = #tpu.pipeline_mode<synchronous>, transform_indices = @transform_2, window_bounds = array<i64: 1, 256>}, {pipeline_mode = #tpu.pipeline_mode<synchronous>, transform_indices = @transform_3, window_bounds = array<i64: 3, 128, 128>}, {pipeline_mode = #tpu.pipeline_mode<synchronous>, transform_indices = @transform_4, window_bounds = array<i64: 3, 1, 128>}, {pipeline_mode = #tpu.pipeline_mode<synchronous>, transform_indices = @transform_5, window_bounds = array<i64: 128, 128>}, {pipeline_mode = #tpu.pipeline_mode<synchronous>, transform_indices = @transform_6, window_bounds = array<i64: 1, 128>}, {pipeline_mode = #tpu.pipeline_mode<synchronous>, transform_indices = @transform_7, window_bounds = array<i64: 128, 4096>}, {pipeline_mode = #tpu.pipeline_mode<synchronous>, transform_indices = @transform_8, window_bounds = array<i64: 1, 4096>}, {pipeline_mode = #tpu.pipeline_mode<synchronous>, transform_indices = @transform_9, window_bounds = array<i64: 3, 4096, 128>}, {pipeline_mode = #tpu.pipeline_mode<synchronous>, transform_indices = @transform_10, window_bounds = array<i64: 1, 128>}, {transform_indices = @transform_11, window_bounds = array<i64: 8, 128>}]} {
    %c0 = arith.constant 0 : index
    %c0_0 = arith.constant 0 : index
    %0 = vector.load %arg1[%c0, %c0_0] : memref<8x16xf32, #tpu.memory_space<vmem>>, vector<8x16xf32>
    %c0_1 = arith.constant 0 : index
    %c0_2 = arith.constant 0 : index
    %1 = vector.load %arg2[%c0_1, %c0_2] : memref<16x256xf32, #tpu.memory_space<vmem>>, vector<16x256xf32>
    %cst = arith.constant dense<0.000000e+00> : vector<8x256xf32>
    %2 = tpu.matmul %0, %1, %cst {dimension_numbers = #tpu.dot_dimension_numbers<[1], [0], [0], [1], [0, 0, 1, 1], [], []>} : vector<8x16xf32>, vector<16x256xf32>, vector<8x256xf32> -> vector<8x256xf32>
    %c0_3 = arith.constant 0 : index
    %c0_4 = arith.constant 0 : index
    %3 = vector.load %arg3[%c0_3, %c0_4] : memref<1x256xf32, #tpu.memory_space<vmem>>, vector<1x256xf32>
    %4 = vector.broadcast %3 : vector<1x256xf32> to vector<8x256xf32>
    %5 = arith.addf %2, %4 : vector<8x256xf32>
    %6 = math.tanh %5 : vector<8x256xf32>
    %7 = vector.extract_strided_slice %6 {offsets = [0, 0], sizes = [8, 128], strides = [1, 1]} : vector<8x256xf32> to vector<8x128xf32>
    %8 = vector.extract_strided_slice %6 {offsets = [0, 128], sizes = [8, 128], strides = [1, 1]} : vector<8x256xf32> to vector<8x128xf32>
    %c0_5 = arith.constant 0 : index
    %c0_6 = arith.constant 0 : index
    %9 = vector.load %arg6[%c0_5, %c0_6] : memref<128x128xf32, #tpu.memory_space<vmem>>, vector<128x128xf32>
    %cst_7 = arith.constant dense<0.000000e+00> : vector<8x128xf32>
    %10 = tpu.matmul %7, %9, %cst_7 {dimension_numbers = #tpu.dot_dimension_numbers<[1], [0], [0], [1], [0, 0, 1, 1], [], []>} : vector<8x128xf32>, vector<128x128xf32>, vector<8x128xf32> -> vector<8x128xf32>
    %c0_8 = arith.constant 0 : index
    %c0_9 = arith.constant 0 : index
    %11 = vector.load %arg7[%c0_8, %c0_9] : memref<1x128xf32, #tpu.memory_space<vmem>>, vector<1x128xf32>
    %12 = vector.broadcast %11 : vector<1x128xf32> to vector<8x128xf32>
    %13 = arith.addf %10, %12 : vector<8x128xf32>
    %14 = arith.truncf %8 : vector<8x128xf32> to vector<8x128xbf16>
    %c0_10 = arith.constant 0 : index
    %c0_11 = arith.constant 0 : index
    %15 = vector.load %arg8[%c0_10, %c0_11] : memref<128x4096xbf16, #tpu.memory_space<vmem>>, vector<128x4096xbf16>
    %cst_12 = arith.constant dense<0.000000e+00> : vector<8x4096xf32>
    %16 = tpu.matmul %14, %15, %cst_12 {dimension_numbers = #tpu.dot_dimension_numbers<[1], [0], [0], [1], [0, 0, 1, 1], [], []>} : vector<8x128xbf16>, vector<128x4096xbf16>, vector<8x4096xf32> -> vector<8x4096xf32>
    %c0_13 = arith.constant 0 : index
    %c0_14 = arith.constant 0 : index
    %17 = vector.load %arg9[%c0_13, %c0_14] : memref<1x4096xf32, #tpu.memory_space<vmem>>, vector<1x4096xf32>
    %18 = vector.broadcast %17 : vector<1x4096xf32> to vector<8x4096xf32>
    %19 = arith.addf %16, %18 : vector<8x4096xf32>
    %20 = arith.truncf %19 : vector<8x4096xf32> to vector<8x4096xbf16>
    %c0_15 = arith.constant 0 : index
    %c0_16 = arith.constant 0 : index
    %21 = vector.load %arg11[%c0_15, %c0_16] : memref<1x128xf32, #tpu.memory_space<vmem>>, vector<1x128xf32>
    %cst_17 = arith.constant 1.000000e+00 : f32
    %22 = vector.broadcast %cst_17 : f32 to vector<1x128xf32>
    %23 = arith.subf %22, %21 : vector<1x128xf32>
    %c0_i32 = arith.constant 0 : i32
    %c3_i32 = arith.constant 3 : i32
    %24 = arith.addi %c0_i32, %c3_i32 : i32
    %c1_i32 = arith.constant 1 : i32
    %25 = scf.for %arg13 = %c0_i32 to %24 step %c1_i32 iter_args(%arg14 = %13) -> (vector<8x128xf32>)  : i32 {
      %27 = arith.index_cast %arg13 : i32 to index
      %c0_21 = arith.constant 0 : index
      %c0_22 = arith.constant 0 : index
      %28 = vector.load %arg4[%27, %c0_21, %c0_22] : memref<3x128x128xf32, #tpu.memory_space<vmem>>, vector<1x128x128xf32>
      %29 = vector.shape_cast %28 : vector<1x128x128xf32> to vector<128x128xf32>
      %cst_23 = arith.constant dense<0.000000e+00> : vector<8x128xf32>
      %30 = tpu.matmul %7, %29, %cst_23 {dimension_numbers = #tpu.dot_dimension_numbers<[1], [0], [0], [1], [0, 0, 1, 1], [], []>} : vector<8x128xf32>, vector<128x128xf32>, vector<8x128xf32> -> vector<8x128xf32>
      %31 = arith.index_cast %arg13 : i32 to index
      %c0_24 = arith.constant 0 : index
      %c0_25 = arith.constant 0 : index
      %32 = vector.load %arg5[%31, %c0_24, %c0_25] : memref<3x1x128xf32, #tpu.memory_space<vmem>>, vector<1x1x128xf32>
      %33 = vector.shape_cast %32 : vector<1x1x128xf32> to vector<1x128xf32>
      %34 = vector.broadcast %33 : vector<1x128xf32> to vector<8x128xf32>
      %35 = arith.addf %30, %34 : vector<8x128xf32>
      %36 = vector.broadcast %23 : vector<1x128xf32> to vector<8x128xf32>
      %37 = arith.mulf %35, %36 : vector<8x128xf32>
      %38 = arith.mulf %35, %35 : vector<8x128xf32>
      %39 = vector.broadcast %21 : vector<1x128xf32> to vector<8x128xf32>
      %40 = arith.mulf %38, %39 : vector<8x128xf32>
      %41 = arith.addf %37, %40 : vector<8x128xf32>
      %42 = arith.truncf %41 : vector<8x128xf32> to vector<8x128xbf16>
      %43 = tpu.concatenate %42, %42, %42, %42, %42, %42, %42, %42, %42, %42, %42, %42, %42, %42, %42, %42 in 1 : vector<8x128xbf16>, vector<8x128xbf16>, vector<8x128xbf16>, vector<8x128xbf16>, vector<8x128xbf16>, vector<8x128xbf16>, vector<8x128xbf16>, vector<8x128xbf16>, vector<8x128xbf16>, vector<8x128xbf16>, vector<8x128xbf16>, vector<8x128xbf16>, vector<8x128xbf16>, vector<8x128xbf16>, vector<8x128xbf16>, vector<8x128xbf16> -> vector<8x2048xbf16>
      %44 = tpu.concatenate %42, %42, %42, %42, %42, %42, %42, %42, %42, %42, %42, %42, %42, %42, %42, %42 in 1 : vector<8x128xbf16>, vector<8x128xbf16>, vector<8x128xbf16>, vector<8x128xbf16>, vector<8x128xbf16>, vector<8x128xbf16>, vector<8x128xbf16>, vector<8x128xbf16>, vector<8x128xbf16>, vector<8x128xbf16>, vector<8x128xbf16>, vector<8x128xbf16>, vector<8x128xbf16>, vector<8x128xbf16>, vector<8x128xbf16>, vector<8x128xbf16> -> vector<8x2048xbf16>
      %45 = tpu.concatenate %43, %44 in 1 : vector<8x2048xbf16>, vector<8x2048xbf16> -> vector<8x4096xbf16>
      %46 = arith.mulf %20, %45 : vector<8x4096xbf16>
      %47 = arith.index_cast %arg13 : i32 to index
      %c0_26 = arith.constant 0 : index
      %c0_27 = arith.constant 0 : index
      %48 = vector.load %arg10[%47, %c0_26, %c0_27] : memref<3x4096x128xbf16, #tpu.memory_space<vmem>>, vector<1x4096x128xbf16>
      %49 = vector.shape_cast %48 : vector<1x4096x128xbf16> to vector<4096x128xbf16>
      %cst_28 = arith.constant dense<0.000000e+00> : vector<8x128xf32>
      %50 = tpu.matmul %46, %49, %cst_28 {dimension_numbers = #tpu.dot_dimension_numbers<[1], [0], [0], [1], [0, 0, 1, 1], [], []>} : vector<8x4096xbf16>, vector<4096x128xbf16>, vector<8x128xf32> -> vector<8x128xf32>
      %51 = arith.addf %arg14, %50 : vector<8x128xf32>
      scf.yield %51 : vector<8x128xf32>
    }
    %c3_i32_18 = arith.constant 3 : i32
    %c0_19 = arith.constant 0 : index
    %c0_20 = arith.constant 0 : index
    %26 = vector.load %arg12[%c0_19, %c0_20] : memref<8x128xf32, #tpu.memory_space<vmem>>, vector<8x128xf32>
    tpu.vector_store %arg12[%c0_19, %c0_20], %25 {strides = array<i32>} : memref<8x128xf32, #tpu.memory_space<vmem>>, vector<8x128xf32>,
    return
  }
  func.func @transform_0(%arg0: i32) -> (i32, i32) {
    %c0_i32 = arith.constant 0 : i32
    %c0_i32_0 = arith.constant 0 : i32
    return %arg0, %c0_i32 : i32, i32
  }
  func.func @transform_1(%arg0: i32) -> (i32, i32) {
    %c0_i32 = arith.constant 0 : i32
    %c0_i32_0 = arith.constant 0 : i32
    %c0_i32_1 = arith.constant 0 : i32
    return %c0_i32, %c0_i32_0 : i32, i32
  }
  func.func @transform_2(%arg0: i32) -> (i32, i32) {
    %c0_i32 = arith.constant 0 : i32
    %c0_i32_0 = arith.constant 0 : i32
    %c0_i32_1 = arith.constant 0 : i32
    return %c0_i32, %c0_i32_0 : i32, i32
  }
  func.func @transform_3(%arg0: i32) -> (i32, i32, i32) {
    %c0_i32 = arith.constant 0 : i32
    %c0_i32_0 = arith.constant 0 : i32
    %c0_i32_1 = arith.constant 0 : i32
    %c0_i32_2 = arith.constant 0 : i32
    return %c0_i32, %c0_i32_0, %c0_i32_1 : i32, i32, i32
  }
  func.func @transform_4(%arg0: i32) -> (i32, i32, i32) {
    %c0_i32 = arith.constant 0 : i32
    %c0_i32_0 = arith.constant 0 : i32
    %c0_i32_1 = arith.constant 0 : i32
    %c0_i32_2 = arith.constant 0 : i32
    return %c0_i32, %c0_i32_0, %c0_i32_1 : i32, i32, i32
  }
  func.func @transform_5(%arg0: i32) -> (i32, i32) {
    %c0_i32 = arith.constant 0 : i32
    %c0_i32_0 = arith.constant 0 : i32
    %c0_i32_1 = arith.constant 0 : i32
    return %c0_i32, %c0_i32_0 : i32, i32
  }
  func.func @transform_6(%arg0: i32) -> (i32, i32) {
    %c0_i32 = arith.constant 0 : i32
    %c0_i32_0 = arith.constant 0 : i32
    %c0_i32_1 = arith.constant 0 : i32
    return %c0_i32, %c0_i32_0 : i32, i32
  }
  func.func @transform_7(%arg0: i32) -> (i32, i32) {
    %c0_i32 = arith.constant 0 : i32
    %c0_i32_0 = arith.constant 0 : i32
    %c0_i32_1 = arith.constant 0 : i32
    return %c0_i32, %c0_i32_0 : i32, i32
  }
  func.func @transform_8(%arg0: i32) -> (i32, i32) {
    %c0_i32 = arith.constant 0 : i32
    %c0_i32_0 = arith.constant 0 : i32
    %c0_i32_1 = arith.constant 0 : i32
    return %c0_i32, %c0_i32_0 : i32, i32
  }
  func.func @transform_9(%arg0: i32) -> (i32, i32, i32) {
    %c0_i32 = arith.constant 0 : i32
    %c0_i32_0 = arith.constant 0 : i32
    %c0_i32_1 = arith.constant 0 : i32
    %c0_i32_2 = arith.constant 0 : i32
    return %c0_i32, %c0_i32_0, %c0_i32_1 : i32, i32, i32
  }
  func.func @transform_10(%arg0: i32) -> (i32, i32) {
    %c0_i32 = arith.constant 0 : i32
    %c0_i32_0 = arith.constant 0 : i32
    %c0_i32_1 = arith.constant 0 : i32
    return %c0_i32, %c0_i32_0 : i32, i32
  }
  func.func @transform_11(%arg0: i32) -> (i32, i32) {
    %c0_i32 = arith.constant 0 : i32
    %c0_i32_0 = arith.constant 0 : i32
    return %arg0, %c0_i32 : i32, i32
  }
}

</mosaic_0001>

<llo_original>
// kernel: tpu_custom_call.1
$region0: #{tpu_custom_call.1}
  #allocation0 [shape = 'u32[]', space=smem, size = 0x4, offset = 0x4, fixed_abs, tag = 'smem constant byte address 0x4 - core index']
  #allocation1 [shape = 'u32[144,128]{1,0:T(1,128)}', space=vmem, size = 0x12000, scoped, tag = 'internal scratch']
  %s0 = inlined_call_operand.hbm [shape: f32[8,16], index: 0, kind: input, shape index: {}]
  %s1 = inlined_call_operand.hbm [shape: f32[16,256], index: 1, kind: input, shape index: {}]
  %s2 = inlined_call_operand.hbm [shape: f32[1,256], index: 2, kind: input, shape index: {}]
  %s3 = inlined_call_operand.hbm [shape: f32[3,128,128], index: 3, kind: input, shape index: {}]
  %s4 = inlined_call_operand.hbm [shape: f32[3,1,128], index: 4, kind: input, shape index: {}]
  %s5 = inlined_call_operand.hbm [shape: f32[128,128], index: 5, kind: input, shape index: {}]
  %s6 = inlined_call_operand.hbm [shape: f32[1,128], index: 6, kind: input, shape index: {}]
  %s7 = inlined_call_operand.hbm [shape: bf16[128,4096], index: 7, kind: input, shape index: {}]
  %s8 = inlined_call_operand.hbm [shape: f32[1,4096], index: 8, kind: input, shape index: {}]
  %s9 = inlined_call_operand.hbm [shape: bf16[3,4096,128], index: 9, kind: input, shape index: {}]
  %s10 = inlined_call_operand.hbm [shape: f32[1,128], index: 10, kind: input, shape index: {}]
  %s11 = inlined_call_operand.hbm [shape: f32[8,128], index: 11, kind: output, shape index: {}]
  %s12 = sld [smem:[#allocation0]]
  $region105: #{tpu_custom_call.1} parent=0
    _
  %s14 = ssub.s32 1, %s12
  %s15 = scalar_select 0, %s14, %s12
  $region1: #{tpu_custom_call.1} parent=0
    #allocation2 [shape = 'u8[4096]{0}', space=vmem, size = 0x1000, scoped, tag = 'input window, operand 0, single buffered']
    #allocation3 [shape = 's32[1]{0}', space=sflag, size = 0x4, scoped, tag = 'scoped memory for tpu_custom_call.1']
    #allocation4 [shape = 's32[1]{0}', space=sflag, size = 0x4, scoped, tag = 'scoped memory for tpu_custom_call.1']
    #allocation5 [shape = 'u8[16384]{0}', space=vmem, size = 0x4000, scoped, tag = 'input window, operand 1, single buffered']
    #allocation6 [shape = 's32[1]{0}', space=sflag, size = 0x4, scoped, tag = 'scoped memory for tpu_custom_call.1']
    #allocation7 [shape = 'u8[1024]{0}', space=vmem, size = 0x400, scoped, tag = 'input window, operand 2, single buffered']
    #allocation8 [shape = 'u8[196608]{0}', space=vmem, size = 0x30000, scoped, tag = 'input window, operand 3, single buffered']
    #allocation9 [shape = 's32[1]{0}', space=sflag, size = 0x4, scoped, tag = 'scoped memory for tpu_custom_call.1']
    #allocation10 [shape = 'u8[1536]{0}', space=vmem, size = 0x800, scoped, tag = 'input window, operand 4, single buffered']
    #allocation11 [shape = 'u8[65536]{0}', space=vmem, size = 0x10000, scoped, tag = 'input window, operand 5, single buffered']
    #allocation12 [shape = 's32[1]{0}', space=sflag, size = 0x4, scoped, tag = 'scoped memory for tpu_custom_call.1']
    #allocation13 [shape = 'u8[512]{0}', space=vmem, size = 0x400, scoped, tag = 'input window, operand 6, single buffered']
    #allocation14 [shape = 'u8[1048576]{0}', space=vmem, size = 0x100000, scoped, tag = 'input window, operand 7, single buffered']
    #allocation15 [shape = 's32[1]{0}', space=sflag, size = 0x4, scoped, tag = 'scoped memory for tpu_custom_call.1']
    #allocation16 [shape = 'u8[16384]{0}', space=vmem, size = 0x4000, scoped, tag = 'input window, operand 8, single buffered']
    #allocation17 [shape = 'u8[3145728]{0}', space=vmem, size = 0x300000, scoped, tag = 'input window, operand 9, single buffered']
    #allocation18 [shape = 's32[1]{0}', space=sflag, size = 0x4, scoped, tag = 'scoped memory for tpu_custom_call.1']
    #allocation19 [shape = 'u8[512]{0}', space=vmem, size = 0x400, scoped, tag = 'input window, operand 10, single buffered']
    #allocation20 [shape = 'u8[4096]{0}', space=vmem, size = 0x1000, scoped, tag = 'output window, operand 0, single buffered']
    %16 = vsyncpa [#allocation3], 0
    %17 = vsyncpa [#allocation6], 0
    %18 = vsyncpa [#allocation9], 0
    %19 = vsyncpa [#allocation12], 0
    %20 = vsyncpa [#allocation15], 0
    %21 = vsyncpa [#allocation18], 0
    %22 = vsyncpa [#allocation4], 0
    // Predicated region
    $region2: #{tpu_custom_call.1} parent=1 // pred_check
      _
    $region3: #{tpu_custom_call.1} parent=1 // pred_check_branch
      %24 = sbr.rel (0) target = $region5
    $region4: #{tpu_custom_call.1} parent=1 // pred_region
      %s26 = ssub.s32 128, 128
      %27 = vsyncadd [#allocation3], %s26
      %s29 = sshll.u32 [#allocation2], 4
      %s30 = int_to_ptr.vmem [resolvable:$true] %s29
      %32 = dma.hbm_to_vmem [thread:$0]  %s0, 128, %s30, [#allocation3]
    $region5: #{tpu_custom_call.1} parent=1 // pred_fallthru
      _
    // Predicated region
    $region6: #{tpu_custom_call.1} parent=1 // pred_check
      _
    $region7: #{tpu_custom_call.1} parent=1 // pred_check_branch
      %34 = sbr.rel (0) target = $region9
    $region8: #{tpu_custom_call.1} parent=1 // pred_region
      %s36 = ssub.s32 512, 512
      %37 = vsyncadd [#allocation6], %s36
      %s38 = sshll.u32 [#allocation5], 4
      %s39 = int_to_ptr.vmem [resolvable:$true] %s38
      %44 = dma.hbm_to_vmem [thread:$0]  %s1, 512, %s39, [#allocation6], 256, 256, 16
    $region9: #{tpu_custom_call.1} parent=1 // pred_fallthru
      _
    // Predicated region
    $region10: #{tpu_custom_call.1} parent=1 // pred_check
      _
    $region11: #{tpu_custom_call.1} parent=1 // pred_check_branch
      %46 = sbr.rel (0) target = $region13
    $region12: #{tpu_custom_call.1} parent=1 // pred_region
      %s48 = ssub.s32 32, 32
      %49 = vsyncadd [#allocation6], %s48
      %s51 = sshll.u32 [#allocation7], 4
      %s52 = int_to_ptr.vmem [resolvable:$true] %s51
      %54 = dma.hbm_to_vmem [thread:$0]  %s2, 32, %s52, [#allocation6]
    $region13: #{tpu_custom_call.1} parent=1 // pred_fallthru
      _
    // Predicated region
    $region14: #{tpu_custom_call.1} parent=1 // pred_check
      _
    $region15: #{tpu_custom_call.1} parent=1 // pred_check_branch
      %56 = sbr.rel (0) target = $region17
    $region16: #{tpu_custom_call.1} parent=1 // pred_region
      %s58 = ssub.s32 6144, 6144
      %59 = vsyncadd [#allocation9], %s58
      %s60 = sshll.u32 [#allocation8], 4
      %s61 = int_to_ptr.vmem [resolvable:$true] %s60
      %66 = dma.hbm_to_vmem [thread:$0]  %s3, 6144, %s61, [#allocation9], 128, 128, 8
    $region17: #{tpu_custom_call.1} parent=1 // pred_fallthru
      _
    // Predicated region
    $region18: #{tpu_custom_call.1} parent=1 // pred_check
      _
    $region19: #{tpu_custom_call.1} parent=1 // pred_check_branch
      %68 = sbr.rel (0) target = $region21
    $region20: #{tpu_custom_call.1} parent=1 // pred_region
      %s70 = ssub.s32 48, 48
      %71 = vsyncadd [#allocation9], %s70
      %s72 = sshll.u32 [#allocation10], 4
      %s73 = int_to_ptr.vmem [resolvable:$true] %s72
      %78 = dma.hbm_to_vmem [thread:$0]  %s4, 48, %s73, [#allocation9], 16, 16, 1
    $region21: #{tpu_custom_call.1} parent=1 // pred_fallthru
      _
    // Predicated region
    $region22: #{tpu_custom_call.1} parent=1 // pred_check
      _
    $region23: #{tpu_custom_call.1} parent=1 // pred_check_branch
      %80 = sbr.rel (0) target = $region25
    $region24: #{tpu_custom_call.1} parent=1 // pred_region
      %s82 = ssub.s32 2048, 2048
      %83 = vsyncadd [#allocation12], %s82
      %s84 = sshll.u32 [#allocation11], 4
      %s85 = int_to_ptr.vmem [resolvable:$true] %s84
      %90 = dma.hbm_to_vmem [thread:$0]  %s5, 2048, %s85, [#allocation12], 128, 128, 8
    $region25: #{tpu_custom_call.1} parent=1 // pred_fallthru
      _
    // Predicated region
    $region26: #{tpu_custom_call.1} parent=1 // pred_check
      _
    $region27: #{tpu_custom_call.1} parent=1 // pred_check_branch
      %92 = sbr.rel (0) target = $region29
    $region28: #{tpu_custom_call.1} parent=1 // pred_region
      %s94 = ssub.s32 16, 16
      %95 = vsyncadd [#allocation12], %s94
      %s97 = sshll.u32 [#allocation13], 4
      %s98 = int_to_ptr.vmem [resolvable:$true] %s97
      %100 = dma.hbm_to_vmem [thread:$0]  %s6, 16, %s98, [#allocation12]
    $region29: #{tpu_custom_call.1} parent=1 // pred_fallthru
      _
    // Predicated region
    $region30: #{tpu_custom_call.1} parent=1 // pred_check
      _
    $region31: #{tpu_custom_call.1} parent=1 // pred_check_branch
      %102 = sbr.rel (0) target = $region33
    $region32: #{tpu_custom_call.1} parent=1 // pred_region
      %s104 = ssub.s32 32768, 32768
      %105 = vsyncadd [#allocation15], %s104
      %s106 = sshll.u32 [#allocation14], 4
      %s107 = int_to_ptr.vmem [resolvable:$true] %s106
      %112 = dma.hbm_to_vmem [thread:$0]  %s7, 32768, %s107, [#allocation15], 2048, 2048, 128
    $region33: #{tpu_custom_call.1} parent=1 // pred_fallthru
      _
    // Predicated region
    $region34: #{tpu_custom_call.1} parent=1 // pred_check
      _
    $region35: #{tpu_custom_call.1} parent=1 // pred_check_branch
      %114 = sbr.rel (0) target = $region37
    $region36: #{tpu_custom_call.1} parent=1 // pred_region
      %s116 = ssub.s32 512, 512
      %117 = vsyncadd [#allocation15], %s116
      %s119 = sshll.u32 [#allocation16], 4
      %s120 = int_to_ptr.vmem [resolvable:$true] %s119
      %122 = dma.hbm_to_vmem [thread:$0]  %s8, 512, %s120, [#allocation15]
    $region37: #{tpu_custom_call.1} parent=1 // pred_fallthru
      _
    // Predicated region
    $region38: #{tpu_custom_call.1} parent=1 // pred_check
      _
    $region39: #{tpu_custom_call.1} parent=1 // pred_check_branch
      %124 = sbr.rel (0) target = $region41
    $region40: #{tpu_custom_call.1} parent=1 // pred_region
      %s126 = ssub.s32 98304, 98304
      %127 = vsyncadd [#allocation18], %s126
      %s128 = sshll.u32 [#allocation17], 4
      %s129 = int_to_ptr.vmem [resolvable:$true] %s128
      %134 = dma.hbm_to_vmem [thread:$0]  %s9, 98304, %s129, [#allocation18], 64, 64, 4
    $region41: #{tpu_custom_call.1} parent=1 // pred_fallthru
      _
    // Predicated region
    $region42: #{tpu_custom_call.1} parent=1 // pred_check
      _
    $region43: #{tpu_custom_call.1} parent=1 // pred_check_branch
      %136 = sbr.rel (0) target = $region45
    $region44: #{tpu_custom_call.1} parent=1 // pred_region
      %s138 = ssub.s32 16, 16
      %139 = vsyncadd [#allocation18], %s138
      %s141 = sshll.u32 [#allocation19], 4
      %s142 = int_to_ptr.vmem [resolvable:$true] %s141
      %144 = dma.hbm_to_vmem [thread:$0]  %s10, 16, %s142, [#allocation18]
    $region45: #{tpu_custom_call.1} parent=1 // pred_fallthru
      _
    // Predicated region
    $region46: #{tpu_custom_call.1} parent=1 // pred_check
      _
    $region47: #{tpu_custom_call.1} parent=1 // pred_check_branch
      %146 = sbr.rel (0) target = $region49
    $region48: #{tpu_custom_call.1} parent=1 // pred_region
      %147 = dma.done [#allocation3], 128
    $region49: #{tpu_custom_call.1} parent=1 // pred_fallthru
      _
    // Predicated region
    $region50: #{tpu_custom_call.1} parent=1 // pred_check
      _
    $region51: #{tpu_custom_call.1} parent=1 // pred_check_branch
      %149 = sbr.rel (0) target = $region53
    $region52: #{tpu_custom_call.1} parent=1 // pred_region
      %150 = dma.done [#allocation6], 512
    $region53: #{tpu_custom_call.1} parent=1 // pred_fallthru
      _
    // Predicated region
    $region54: #{tpu_custom_call.1} parent=1 // pred_check
      _
    $region55: #{tpu_custom_call.1} parent=1 // pred_check_branch
      %152 = sbr.rel (0) target = $region57
    $region56: #{tpu_custom_call.1} parent=1 // pred_region
      %153 = dma.done [#allocation6], 32
    $region57: #{tpu_custom_call.1} parent=1 // pred_fallthru
      _
    // Predicated region
    $region58: #{tpu_custom_call.1} parent=1 // pred_check
      _
    $region59: #{tpu_custom_call.1} parent=1 // pred_check_branch
      %155 = sbr.rel (0) target = $region61
    $region60: #{tpu_custom_call.1} parent=1 // pred_region
      %156 = dma.done [#allocation9], 6144
    $region61: #{tpu_custom_call.1} parent=1 // pred_fallthru
      _
    // Predicated region
    $region62: #{tpu_custom_call.1} parent=1 // pred_check
      _
    $region63: #{tpu_custom_call.1} parent=1 // pred_check_branch
      %158 = sbr.rel (0) target = $region65
    $region64: #{tpu_custom_call.1} parent=1 // pred_region
      %159 = dma.done [#allocation9], 48
    $region65: #{tpu_custom_call.1} parent=1 // pred_fallthru
      _
    // Predicated region
    $region66: #{tpu_custom_call.1} parent=1 // pred_check
      _
    $region67: #{tpu_custom_call.1} parent=1 // pred_check_branch
      %161 = sbr.rel (0) target = $region69
    $region68: #{tpu_custom_call.1} parent=1 // pred_region
      %162 = dma.done [#allocation12], 2048
    $region69: #{tpu_custom_call.1} parent=1 // pred_fallthru
      _
    // Predicated region
    $region70: #{tpu_custom_call.1} parent=1 // pred_check
      _
    $region71: #{tpu_custom_call.1} parent=1 // pred_check_branch
      %164 = sbr.rel (0) target = $region73
    $region72: #{tpu_custom_call.1} parent=1 // pred_region
      %165 = dma.done [#allocation12], 16
    $region73: #{tpu_custom_call.1} parent=1 // pred_fallthru
      _
    // Predicated region
    $region74: #{tpu_custom_call.1} parent=1 // pred_check
      _
    $region75: #{tpu_custom_call.1} parent=1 // pred_check_branch
      %167 = sbr.rel (0) target = $region77
    $region76: #{tpu_custom_call.1} parent=1 // pred_region
      %168 = dma.done [#allocation15], 32768
    $region77: #{tpu_custom_call.1} parent=1 // pred_fallthru
      _
    // Predicated region
    $region78: #{tpu_custom_call.1} parent=1 // pred_check
      _
    $region79: #{tpu_custom_call.1} parent=1 // pred_check_branch
      %170 = sbr.rel (0) target = $region81
    $region80: #{tpu_custom_call.1} parent=1 // pred_region
      %171 = dma.done [#allocation15], 512
    $region81: #{tpu_custom_call.1} parent=1 // pred_fallthru
      _
    // Predicated region
    $region82: #{tpu_custom_call.1} parent=1 // pred_check
      _
    $region83: #{tpu_custom_call.1} parent=1 // pred_check_branch
      %173 = sbr.rel (0) target = $region85
    $region84: #{tpu_custom_call.1} parent=1 // pred_region
      %174 = dma.done [#allocation18], 98304
    $region85: #{tpu_custom_call.1} parent=1 // pred_fallthru
      _
    // Predicated region
    $region86: #{tpu_custom_call.1} parent=1 // pred_check
      _
    $region87: #{tpu_custom_call.1} parent=1 // pred_check_branch
      %176 = sbr.rel (0) target = $region89
    $region88: #{tpu_custom_call.1} parent=1 // pred_region
      %177 = dma.done [#allocation18], 16
    $region89: #{tpu_custom_call.1} parent=1 // pred_fallthru
      _
    %v179 = vld [vmem:[#allocation2] sm:$0xff]
    %v180 = vld [vmem:[#allocation5] sm:$0xff]
    %v181 = vld [vmem:[#allocation5 + $0x8] sm:$0xff]
    %v182 = vld [vmem:[#allocation5 + $0x10] sm:$0xff]
    %v183 = vld [vmem:[#allocation5 + $0x18] sm:$0xff]
    %v184 = vld [vmem:[#allocation7] sm:$0x3]
    %v186 = vlaneseq
    %v187 = vshrl.u32 %v186, 7
    %v188 = vsub.s32 0, %v187
    %v189 = vrot.slane %v184, %v188
    %v190 = vlaneseq
    %v191 = vshrl.u32 %v190, 7
    %v192 = vsub.s32 1, %v191
    %v193 = vrot.slane %v184, %v192
    %vm196 = vcmask 130048
    %v198 = vsel %vm196, %v179, 0
    %200 = vmatprep.subr.mxu0 %v181
    %201 = vmatpush1.msra.mxu0 %v180
    %202 = vmatprep.subr.mxu0 %v183
    %203 = vmatpush1.msra.mxu0 %v182
    %204 = vmatprep.subr.mxu0 0.0
    %205 = vmatpush1.msra.mxu0 0.0
    %206 = vmatprep.subr.mxu0 0.0
    %207 = vmatpush1.msra.mxu0 0.0
    %208 = vmatprep.subr.mxu0 0.0
    %209 = vmatpush1.msra.mxu0 0.0
    %210 = vmatprep.subr.mxu0 0.0
    %211 = vmatpush1.msra.mxu0 0.0
    %212 = vmatprep.subr.mxu0 0.0
    %213 = vmatpush1.msra.mxu0 0.0
    %214 = vmatprep.subr.mxu0 0.0
    %215 = vmatpush1.msra.mxu0 0.0
    %216 = vmatprep.subr.mxu0 0.0
    %217 = vmatpush1.msra.mxu0 0.0
    %218 = vmatprep.subr.mxu0 0.0
    %219 = vmatpush1.msra.mxu0 0.0
    %220 = vmatprep.subr.mxu0 0.0
    %221 = vmatpush1.msra.mxu0 0.0
    %222 = vmatprep.subr.mxu0 0.0
    %223 = vmatpush1.msra.mxu0 0.0
    %224 = vmatprep.subr.mxu0 0.0
    %225 = vmatpush1.msra.mxu0 0.0
    %226 = vmatprep.subr.mxu0 0.0
    %227 = vmatpush1.msra.mxu0 0.0
    %228 = vmatprep.subr.mxu0 0.0
    %229 = vmatpush1.msra.mxu0 0.0
    %230 = vmatprep.subr.mxu0 0.0
    %231 = vmatpush1.msra.mxu0 0.0
    %232 = vmatprep.subr.mxu0 0.0
    %233 = vmatpush1.msra.mxu0 0.0
    %234 = vmatprep.subr.mxu0 0.0
    %235 = vmatpush1.msra.mxu0 0.0
    %236 = vmatprep.subr.mxu0 0.0
    %237 = vmatpush1.msra.mxu0 0.0
    %238 = vmatprep.subr.mxu0 0.0
    %239 = vmatpush1.msra.mxu0 0.0
    %240 = vmatprep.subr.mxu0 0.0
    %241 = vmatpush1.msra.mxu0 0.0
    %242 = vmatprep.subr.mxu0 0.0
    %243 = vmatpush1.msra.mxu0 0.0
    %244 = vmatprep.subr.mxu0 0.0
    %245 = vmatpush1.msra.mxu0 0.0
    %246 = vmatprep.subr.mxu0 0.0
    %247 = vmatpush1.msra.mxu0 0.0
    %248 = vmatprep.subr.mxu0 0.0
    %249 = vmatpush1.msra.mxu0 0.0
    %250 = vmatprep.subr.mxu0 0.0
    %251 = vmatpush1.msra.mxu0 0.0
    %252 = vmatprep.subr.mxu0 0.0
    %253 = vmatpush1.msra.mxu0 0.0
    %254 = vmatprep.subr.mxu0 0.0
    %255 = vmatpush1.msra.mxu0 0.0
    %256 = vmatprep.subr.mxu0 0.0
    %257 = vmatpush1.msra.mxu0 0.0
    %258 = vmatprep.subr.mxu0 0.0
    %259 = vmatpush1.msra.mxu0 0.0
    %260 = vmatprep.subr.mxu0 0.0
    %261 = vmatpush1.msra.mxu0 0.0
    %262 = vmatprep.subr.mxu0 0.0
    %263 = vmatpush1.msra.mxu0 0.0
    %264 = vmatprep.mubr.f32.mxu0 0.0
    %265 = vmatmul.mubr.f32.gmra.mrb[0].mxu0 %v198
    %v266 = vpop.f32.mrb[0].mxu0
    %v267 = vadd.f32 %v189, %v266
    %v268 = vpop.f32.mrb[0].mxu0
    %v269 = vadd.f32 %v193, %v268
    %270 = vdwg.mxu0
    %v271 = vtanh.pop %v267
    %v272 = vtanh.pop %v269
    %v273 = vld [vmem:[#allocation11] sm:$0xff]
    %v274 = vld [vmem:[#allocation11 + $0x8] sm:$0xff]
    %v275 = vld [vmem:[#allocation11 + $0x10] sm:$0xff]
    %v276 = vld [vmem:[#allocation11 + $0x18] sm:$0xff]
    %v277 = vld [vmem:[#allocation11 + $0x20] sm:$0xff]
    %v278 = vld [vmem:[#allocation11 + $0x28] sm:$0xff]
    %v279 = vld [vmem:[#allocation11 + $0x30] sm:$0xff]
    %v280 = vld [vmem:[#allocation11 + $0x38] sm:$0xff]
    %v281 = vld [vmem:[#allocation11 + $0x40] sm:$0xff]
    %v282 = vld [vmem:[#allocation11 + $0x48] sm:$0xff]
    %v283 = vld [vmem:[#allocation11 + $0x50] sm:$0xff]
    %v284 = vld [vmem:[#allocation11 + $0x58] sm:$0xff]
    %v285 = vld [vmem:[#allocation11 + $0x60] sm:$0xff]
    %v286 = vld [vmem:[#allocation11 + $0x68] sm:$0xff]
    %v287 = vld [vmem:[#allocation11 + $0x70] sm:$0xff]
    %v288 = vld [vmem:[#allocation11 + $0x78] sm:$0xff]
    %v289 = vld [vmem:[#allocation13] sm:$0x1]
    %v291 = vlaneseq
    %v292 = vshrl.u32 %v291, 7
    %v293 = vsub.s32 0, %v292
    %v294 = vrot.slane %v289, %v293
    %296 = vmatprep.subr.mxu0 0.0
    %297 = vmatpush1.msra.mxu0 %v273
    %298 = vmatprep.subr.mxu0 0.0
    %299 = vmatpush1.msra.mxu0 %v274
    %300 = vmatprep.subr.mxu0 0.0
    %301 = vmatpush1.msra.mxu0 %v275
    %302 = vmatprep.subr.mxu0 0.0
    %303 = vmatpush1.msra.mxu0 %v276
    %304 = vmatprep.subr.mxu0 0.0
    %305 = vmatpush1.msra.mxu0 %v277
    %306 = vmatprep.subr.mxu0 0.0
    %307 = vmatpush1.msra.mxu0 %v278
    %308 = vmatprep.subr.mxu0 0.0
    %309 = vmatpush1.msra.mxu0 %v279
    %310 = vmatprep.subr.mxu0 0.0
    %311 = vmatpush1.msra.mxu0 %v280
    %312 = vmatprep.subr.mxu0 0.0
    %313 = vmatpush1.msra.mxu0 %v281
    %314 = vmatprep.subr.mxu0 0.0
    %315 = vmatpush1.msra.mxu0 %v282
    %316 = vmatprep.subr.mxu0 0.0
    %317 = vmatpush1.msra.mxu0 %v283
    %318 = vmatprep.subr.mxu0 0.0
    %319 = vmatpush1.msra.mxu0 %v284
    %320 = vmatprep.subr.mxu0 0.0
    %321 = vmatpush1.msra.mxu0 %v285
    %322 = vmatprep.subr.mxu0 0.0
    %323 = vmatpush1.msra.mxu0 %v286
    %324 = vmatprep.subr.mxu0 0.0
    %325 = vmatpush1.msra.mxu0 %v287
    %326 = vmatprep.subr.mxu0 0.0
    %327 = vmatpush1.msra.mxu0 %v288
    %328 = vmatprep.subr.mxu0 0.0
    %329 = vmatpush1.msra.mxu0 0.0
    %330 = vmatprep.subr.mxu0 0.0
    %331 = vmatpush1.msra.mxu0 0.0
    %332 = vmatprep.subr.mxu0 0.0
    %333 = vmatpush1.msra.mxu0 0.0
    %334 = vmatprep.subr.mxu0 0.0
    %335 = vmatpush1.msra.mxu0 0.0
    %336 = vmatprep.subr.mxu0 0.0
    %337 = vmatpush1.msra.mxu0 0.0
    %338 = vmatprep.subr.mxu0 0.0
    %339 = vmatpush1.msra.mxu0 0.0
    %340 = vmatprep.subr.mxu0 0.0
    %341 = vmatpush1.msra.mxu0 0.0
    %342 = vmatprep.subr.mxu0 0.0
    %343 = vmatpush1.msra.mxu0 0.0
    %344 = vmatprep.subr.mxu0 0.0
    %345 = vmatpush1.msra.mxu0 0.0
    %346 = vmatprep.subr.mxu0 0.0
    %347 = vmatpush1.msra.mxu0 0.0
    %348 = vmatprep.subr.mxu0 0.0
    %349 = vmatpush1.msra.mxu0 0.0
    %350 = vmatprep.subr.mxu0 0.0
    %351 = vmatpush1.msra.mxu0 0.0
    %352 = vmatprep.subr.mxu0 0.0
    %353 = vmatpush1.msra.mxu0 0.0
    %354 = vmatprep.subr.mxu0 0.0
    %355 = vmatpush1.msra.mxu0 0.0
    %356 = vmatprep.subr.mxu0 0.0
    %357 = vmatpush1.msra.mxu0 0.0
    %358 = vmatprep.subr.mxu0 0.0
    %359 = vmatpush1.msra.mxu0 0.0
    %360 = vmatprep.mubr.f32.mxu0 0.0
    %361 = vmatmul.mubr.f32.gmra.mrb[0].mxu0 %v271
    %v362 = vpop.f32.mrb[0].mxu0
    %v363 = vadd.f32 %v294, %v362
    %v364 = vpop.f32.mrb[0].mxu0
    %365 = vdwg.mxu0
    %v366 = vpack.c.bf16 %v272, %v272
    %v367 = vld [vmem:[#allocation14] sm:$0xff]
    %v368 = vld [vmem:[#allocation14 + $0x8] sm:$0xff]
    %v369 = vld [vmem:[#allocation14 + $0x10] sm:$0xff]
    %v370 = vld [vmem:[#allocation14 + $0x18] sm:$0xff]
    %v371 = vld [vmem:[#allocation14 + $0x20] sm:$0xff]
    %v372 = vld [vmem:[#allocation14 + $0x28] sm:$0xff]
    %v373 = vld [vmem:[#allocation14 + $0x30] sm:$0xff]
    %v374 = vld [vmem:[#allocation14 + $0x38] sm:$0xff]
    %v375 = vld [vmem:[#allocation14 + $0x40] sm:$0xff]
    %v376 = vld [vmem:[#allocation14 + $0x48] sm:$0xff]
    %v377 = vld [vmem:[#allocation14 + $0x50] sm:$0xff]
    %v378 = vld [vmem:[#allocation14 + $0x58] sm:$0xff]
    %v379 = vld [vmem:[#allocation14 + $0x60] sm:$0xff]
    %v380 = vld [vmem:[#allocation14 + $0x68] sm:$0xff]
    %v381 = vld [vmem:[#allocation14 + $0x70] sm:$0xff]
    %v382 = vld [vmem:[#allocation14 + $0x78] sm:$0xff]
    %v383 = vld [vmem:[#allocation14 + $0x80] sm:$0xff]
    %v384 = vld [vmem:[#allocation14 + $0x88] sm:$0xff]
    %v385 = vld [vmem:[#allocation14 + $0x90] sm:$0xff]
    %v386 = vld [vmem:[#allocation14 + $0x98] sm:$0xff]
    %v387 = vld [vmem:[#allocation14 + $0xa0] sm:$0xff]
    %v388 = vld [vmem:[#allocation14 + $0xa8] sm:$0xff]
    %v389 = vld [vmem:[#allocation14 + $0xb0] sm:$0xff]
    %v390 = vld [vmem:[#allocation14 + $0xb8] sm:$0xff]
    %v391 = vld [vmem:[#allocation14 + $0xc0] sm:$0xff]
    %v392 = vld [vmem:[#allocation14 + $0xc8] sm:$0xff]
    %v393 = vld [vmem:[#allocation14 + $0xd0] sm:$0xff]
    %v394 = vld [vmem:[#allocation14 + $0xd8] sm:$0xff]
    %v395 = vld [vmem:[#allocation14 + $0xe0] sm:$0xff]
    %v396 = vld [vmem:[#allocation14 + $0xe8] sm:$0xff]
    %v397 = vld [vmem:[#allocation14 + $0xf0] sm:$0xff]
    %v398 = vld [vmem:[#allocation14 + $0xf8] sm:$0xff]
    %v399 = vld [vmem:[#allocation14 + $0x100] sm:$0xff]
    %v400 = vld [vmem:[#allocation14 + $0x108] sm:$0xff]
    %v401 = vld [vmem:[#allocation14 + $0x110] sm:$0xff]
    %v402 = vld [vmem:[#allocation14 + $0x118] sm:$0xff]
    %v403 = vld [vmem:[#allocation14 + $0x120] sm:$0xff]
    %v404 = vld [vmem:[#allocation14 + $0x128] sm:$0xff]
    %v405 = vld [vmem:[#allocation14 + $0x130] sm:$0xff]
    %v406 = vld [vmem:[#allocation14 + $0x138] sm:$0xff]
    %v407 = vld [vmem:[#allocation14 + $0x140] sm:$0xff]
    %v408 = vld [vmem:[#allocation14 + $0x148] sm:$0xff]
    %v409 = vld [vmem:[#allocation14 + $0x150] sm:$0xff]
    %v410 = vld [vmem:[#allocation14 + $0x158] sm:$0xff]
    %v411 = vld [vmem:[#allocation14 + $0x160] sm:$0xff]
    %v412 = vld [vmem:[#allocation14 + $0x168] sm:$0xff]
    %v413 = vld [vmem:[#allocation14 + $0x170] sm:$0xff]
    %v414 = vld [vmem:[#allocation14 + $0x178] sm:$0xff]
    %v415 = vld [vmem:[#allocation14 + $0x180] sm:$0xff]
    %v416 = vld [vmem:[#allocation14 + $0x188] sm:$0xff]
    %v417 = vld [vmem:[#allocation14 + $0x190] sm:$0xff]
    %v418 = vld [vmem:[#allocation14 + $0x198] sm:$0xff]
    %v419 = vld [vmem:[#allocation14 + $0x1a0] sm:$0xff]
    %v420 = vld [vmem:[#allocation14 + $0x1a8] sm:$0xff]
    %v421 = vld [vmem:[#allocation14 + $0x1b0] sm:$0xff]
    %v422 = vld [vmem:[#allocation14 + $0x1b8] sm:$0xff]
    %v423 = vld [vmem:[#allocation14 + $0x1c0] sm:$0xff]
    %v424 = vld [vmem:[#allocation14 + $0x1c8] sm:$0xff]
    %v425 = vld [vmem:[#allocation14 + $0x1d0] sm:$0xff]
    %v426 = vld [vmem:[#allocation14 + $0x1d8] sm:$0xff]
    %v427 = vld [vmem:[#allocation14 + $0x1e0] sm:$0xff]
    %v428 = vld [vmem:[#allocation14 + $0x1e8] sm:$0xff]
    %v429 = vld [vmem:[#allocation14 + $0x1f0] sm:$0xff]
    %v430 = vld [vmem:[#allocation14 + $0x1f8] sm:$0xff]
    %v431 = vld [vmem:[#allocation14 + $0x200] sm:$0xff]
    %v432 = vld [vmem:[#allocation14 + $0x208] sm:$0xff]
    %v433 = vld [vmem:[#allocation14 + $0x210] sm:$0xff]
    %v434 = vld [vmem:[#allocation14 + $0x218] sm:$0xff]
    %v435 = vld [vmem:[#allocation14 + $0x220] sm:$0xff]
    %v436 = vld [vmem:[#allocation14 + $0x228] sm:$0xff]
    %v437 = vld [vmem:[#allocation14 + $0x230] sm:$0xff]
    %v438 = vld [vmem:[#allocation14 + $0x238] sm:$0xff]
    %v439 = vld [vmem:[#allocation14 + $0x240] sm:$0xff]
    %v440 = vld [vmem:[#allocation14 + $0x248] sm:$0xff]
    %v441 = vld [vmem:[#allocation14 + $0x250] sm:$0xff]
    %v442 = vld [vmem:[#allocation14 + $0x258] sm:$0xff]
    %v443 = vld [vmem:[#allocation14 + $0x260] sm:$0xff]
    %v444 = vld [vmem:[#allocation14 + $0x268] sm:$0xff]
    %v445 = vld [vmem:[#allocation14 + $0x270] sm:$0xff]
    %v446 = vld [vmem:[#allocation14 + $0x278] sm:$0xff]
    %v447 = vld [vmem:[#allocation14 + $0x280] sm:$0xff]
    %v448 = vld [vmem:[#allocation14 + $0x288] sm:$0xff]
    %v449 = vld [vmem:[#allocation14 + $0x290] sm:$0xff]
    %v450 = vld [vmem:[#allocation14 + $0x298] sm:$0xff]
    %v451 = vld [vmem:[#allocation14 + $0x2a0] sm:$0xff]
    %v452 = vld [vmem:[#allocation14 + $0x2a8] sm:$0xff]
    %v453 = vld [vmem:[#allocation14 + $0x2b0] sm:$0xff]
    %v454 = vld [vmem:[#allocation14 + $0x2b8] sm:$0xff]
    %v455 = vld [vmem:[#allocation14 + $0x2c0] sm:$0xff]
    %v456 = vld [vmem:[#allocation14 + $0x2c8] sm:$0xff]
    %v457 = vld [vmem:[#allocation14 + $0x2d0] sm:$0xff]
    %v458 = vld [vmem:[#allocation14 + $0x2d8] sm:$0xff]
    %v459 = vld [vmem:[#allocation14 + $0x2e0] sm:$0xff]
    %v460 = vld [vmem:[#allocation14 + $0x2e8] sm:$0xff]
    %v461 = vld [vmem:[#allocation14 + $0x2f0] sm:$0xff]
    %v462 = vld [vmem:[#allocation14 + $0x2f8] sm:$0xff]
    %v463 = vld [vmem:[#allocation14 + $0x300] sm:$0xff]
    %v464 = vld [vmem:[#allocation14 + $0x308] sm:$0xff]
    %v465 = vld [vmem:[#allocation14 + $0x310] sm:$0xff]
    %v466 = vld [vmem:[#allocation14 + $0x318] sm:$0xff]
    %v467 = vld [vmem:[#allocation14 + $0x320] sm:$0xff]
    %v468 = vld [vmem:[#allocation14 + $0x328] sm:$0xff]
    %v469 = vld [vmem:[#allocation14 + $0x330] sm:$0xff]
    %v470 = vld [vmem:[#allocation14 + $0x338] sm:$0xff]
    %v471 = vld [vmem:[#allocation14 + $0x340] sm:$0xff]
    %v472 = vld [vmem:[#allocation14 + $0x348] sm:$0xff]
    %v473 = vld [vmem:[#allocation14 + $0x350] sm:$0xff]
    %v474 = vld [vmem:[#allocation14 + $0x358] sm:$0xff]
    %v475 = vld [vmem:[#allocation14 + $0x360] sm:$0xff]
    %v476 = vld [vmem:[#allocation14 + $0x368] sm:$0xff]
    %v477 = vld [vmem:[#allocation14 + $0x370] sm:$0xff]
    %v478 = vld [vmem:[#allocation14 + $0x378] sm:$0xff]
    %v479 = vld [vmem:[#allocation14 + $0x380] sm:$0xff]
    %v480 = vld [vmem:[#allocation14 + $0x388] sm:$0xff]
    %v481 = vld [vmem:[#allocation14 + $0x390] sm:$0xff]
    %v482 = vld [vmem:[#allocation14 + $0x398] sm:$0xff]
    %v483 = vld [vmem:[#allocation14 + $0x3a0] sm:$0xff]
    %v484 = vld [vmem:[#allocation14 + $0x3a8] sm:$0xff]
    %v485 = vld [vmem:[#allocation14 + $0x3b0] sm:$0xff]
    %v486 = vld [vmem:[#allocation14 + $0x3b8] sm:$0xff]
    %v487 = vld [vmem:[#allocation14 + $0x3c0] sm:$0xff]
    %v488 = vld [vmem:[#allocation14 + $0x3c8] sm:$0xff]
    %v489 = vld [vmem:[#allocation14 + $0x3d0] sm:$0xff]
    %v490 = vld [vmem:[#allocation14 + $0x3d8] sm:$0xff]
    %v491 = vld [vmem:[#allocation14 + $0x3e0] sm:$0xff]
    %v492 = vld [vmem:[#allocation14 + $0x3e8] sm:$0xff]
    %v493 = vld [vmem:[#allocation14 + $0x3f0] sm:$0xff]
    %v494 = vld [vmem:[#allocation14 + $0x3f8] sm:$0xff]
    %v495 = vld [vmem:[#allocation14 + $0x400] sm:$0xff]
    %v496 = vld [vmem:[#allocation14 + $0x408] sm:$0xff]
    %v497 = vld [vmem:[#allocation14 + $0x410] sm:$0xff]
    %v498 = vld [vmem:[#allocation14 + $0x418] sm:$0xff]
    %v499 = vld [vmem:[#allocation14 + $0x420] sm:$0xff]
    %v500 = vld [vmem:[#allocation14 + $0x428] sm:$0xff]
    %v501 = vld [vmem:[#allocation14 + $0x430] sm:$0xff]
    %v502 = vld [vmem:[#allocation14 + $0x438] sm:$0xff]
    %v503 = vld [vmem:[#allocation14 + $0x440] sm:$0xff]
    %v504 = vld [vmem:[#allocation14 + $0x448] sm:$0xff]
    %v505 = vld [vmem:[#allocation14 + $0x450] sm:$0xff]
    %v506 = vld [vmem:[#allocation14 + $0x458] sm:$0xff]
    %v507 = vld [vmem:[#allocation14 + $0x460] sm:$0xff]
    %v508 = vld [vmem:[#allocation14 + $0x468] sm:$0xff]
    %v509 = vld [vmem:[#allocation14 + $0x470] sm:$0xff]
    %v510 = vld [vmem:[#allocation14 + $0x478] sm:$0xff]
    %v511 = vld [vmem:[#allocation14 + $0x480] sm:$0xff]
    %v512 = vld [vmem:[#allocation14 + $0x488] sm:$0xff]
    %v513 = vld [vmem:[#allocation14 + $0x490] sm:$0xff]
    %v514 = vld [vmem:[#allocation14 + $0x498] sm:$0xff]
    %v515 = vld [vmem:[#allocation14 + $0x4a0] sm:$0xff]
    %v516 = vld [vmem:[#allocation14 + $0x4a8] sm:$0xff]
    %v517 = vld [vmem:[#allocation14 + $0x4b0] sm:$0xff]
    %v518 = vld [vmem:[#allocation14 + $0x4b8] sm:$0xff]
    %v519 = vld [vmem:[#allocation14 + $0x4c0] sm:$0xff]
    %v520 = vld [vmem:[#allocation14 + $0x4c8] sm:$0xff]
    %v521 = vld [vmem:[#allocation14 + $0x4d0] sm:$0xff]
    %v522 = vld [vmem:[#allocation14 + $0x4d8] sm:$0xff]
    %v523 = vld [vmem:[#allocation14 + $0x4e0] sm:$0xff]
    %v524 = vld [vmem:[#allocation14 + $0x4e8] sm:$0xff]
    %v525 = vld [vmem:[#allocation14 + $0x4f0] sm:$0xff]
    %v526 = vld [vmem:[#allocation14 + $0x4f8] sm:$0xff]
    %v527 = vld [vmem:[#allocation14 + $0x500] sm:$0xff]
    %v528 = vld [vmem:[#allocation14 + $0x508] sm:$0xff]
    %v529 = vld [vmem:[#allocation14 + $0x510] sm:$0xff]
    %v530 = vld [vmem:[#allocation14 + $0x518] sm:$0xff]
    %v531 = vld [vmem:[#allocation14 + $0x520] sm:$0xff]
    %v532 = vld [vmem:[#allocation14 + $0x528] sm:$0xff]
    %v533 = vld [vmem:[#allocation14 + $0x530] sm:$0xff]
    %v534 = vld [vmem:[#allocation14 + $0x538] sm:$0xff]
    %v535 = vld [vmem:[#allocation14 + $0x540] sm:$0xff]
    %v536 = vld [vmem:[#allocation14 + $0x548] sm:$0xff]
    %v537 = vld [vmem:[#allocation14 + $0x550] sm:$0xff]
    %v538 = vld [vmem:[#allocation14 + $0x558] sm:$0xff]
    %v539 = vld [vmem:[#allocation14 + $0x560] sm:$0xff]
    %v540 = vld [vmem:[#allocation14 + $0x568] sm:$0xff]
    %v541 = vld [vmem:[#allocation14 + $0x570] sm:$0xff]
    %v542 = vld [vmem:[#allocation14 + $0x578] sm:$0xff]
    %v543 = vld [vmem:[#allocation14 + $0x580] sm:$0xff]
    %v544 = vld [vmem:[#allocation14 + $0x588] sm:$0xff]
    %v545 = vld [vmem:[#allocation14 + $0x590] sm:$0xff]
    %v546 = vld [vmem:[#allocation14 + $0x598] sm:$0xff]
    %v547 = vld [vmem:[#allocation14 + $0x5a0] sm:$0xff]
    %v548 = vld [vmem:[#allocation14 + $0x5a8] sm:$0xff]
    %v549 = vld [vmem:[#allocation14 + $0x5b0] sm:$0xff]
    %v550 = vld [vmem:[#allocation14 + $0x5b8] sm:$0xff]
    %v551 = vld [vmem:[#allocation14 + $0x5c0] sm:$0xff]
    %v552 = vld [vmem:[#allocation14 + $0x5c8] sm:$0xff]
    %v553 = vld [vmem:[#allocation14 + $0x5d0] sm:$0xff]
    %v554 = vld [vmem:[#allocation14 + $0x5d8] sm:$0xff]
    %v555 = vld [vmem:[#allocation14 + $0x5e0] sm:$0xff]
    %v556 = vld [vmem:[#allocation14 + $0x5e8] sm:$0xff]
    %v557 = vld [vmem:[#allocation14 + $0x5f0] sm:$0xff]
    %v558 = vld [vmem:[#allocation14 + $0x5f8] sm:$0xff]
    %v559 = vld [vmem:[#allocation14 + $0x600] sm:$0xff]
    %v560 = vld [vmem:[#allocation14 + $0x608] sm:$0xff]
    %v561 = vld [vmem:[#allocation14 + $0x610] sm:$0xff]
    %v562 = vld [vmem:[#allocation14 + $0x618] sm:$0xff]
    %v563 = vld [vmem:[#allocation14 + $0x620] sm:$0xff]
    %v564 = vld [vmem:[#allocation14 + $0x628] sm:$0xff]
    %v565 = vld [vmem:[#allocation14 + $0x630] sm:$0xff]
    %v566 = vld [vmem:[#allocation14 + $0x638] sm:$0xff]
    %v567 = vld [vmem:[#allocation14 + $0x640] sm:$0xff]
    %v568 = vld [vmem:[#allocation14 + $0x648] sm:$0xff]
    %v569 = vld [vmem:[#allocation14 + $0x650] sm:$0xff]
    %v570 = vld [vmem:[#allocation14 + $0x658] sm:$0xff]
    %v571 = vld [vmem:[#allocation14 + $0x660] sm:$0xff]
    %v572 = vld [vmem:[#allocation14 + $0x668] sm:$0xff]
    %v573 = vld [vmem:[#allocation14 + $0x670] sm:$0xff]
    %v574 = vld [vmem:[#allocation14 + $0x678] sm:$0xff]
    %v575 = vld [vmem:[#allocation14 + $0x680] sm:$0xff]
    %v576 = vld [vmem:[#allocation14 + $0x688] sm:$0xff]
    %v577 = vld [vmem:[#allocation14 + $0x690] sm:$0xff]
    %v578 = vld [vmem:[#allocation14 + $0x698] sm:$0xff]
    %v579 = vld [vmem:[#allocation14 + $0x6a0] sm:$0xff]
    %v580 = vld [vmem:[#allocation14 + $0x6a8] sm:$0xff]
    %v581 = vld [vmem:[#allocation14 + $0x6b0] sm:$0xff]
    %v582 = vld [vmem:[#allocation14 + $0x6b8] sm:$0xff]
    %v583 = vld [vmem:[#allocation14 + $0x6c0] sm:$0xff]
    %v584 = vld [vmem:[#allocation14 + $0x6c8] sm:$0xff]
    %v585 = vld [vmem:[#allocation14 + $0x6d0] sm:$0xff]
    %v586 = vld [vmem:[#allocation14 + $0x6d8] sm:$0xff]
    %v587 = vld [vmem:[#allocation14 + $0x6e0] sm:$0xff]
    %v588 = vld [vmem:[#allocation14 + $0x6e8] sm:$0xff]
    %v589 = vld [vmem:[#allocation14 + $0x6f0] sm:$0xff]
    %v590 = vld [vmem:[#allocation14 + $0x6f8] sm:$0xff]
    %v591 = vld [vmem:[#allocation14 + $0x700] sm:$0xff]
    %v592 = vld [vmem:[#allocation14 + $0x708] sm:$0xff]
    %v593 = vld [vmem:[#allocation14 + $0x710] sm:$0xff]
    %v594 = vld [vmem:[#allocation14 + $0x718] sm:$0xff]
    %v595 = vld [vmem:[#allocation14 + $0x720] sm:$0xff]
    %v596 = vld [vmem:[#allocation14 + $0x728] sm:$0xff]
    %v597 = vld [vmem:[#allocation14 + $0x730] sm:$0xff]
    %v598 = vld [vmem:[#allocation14 + $0x738] sm:$0xff]
    %v599 = vld [vmem:[#allocation14 + $0x740] sm:$0xff]
    %v600 = vld [vmem:[#allocation14 + $0x748] sm:$0xff]
    %v601 = vld [vmem:[#allocation14 + $0x750] sm:$0xff]
    %v602 = vld [vmem:[#allocation14 + $0x758] sm:$0xff]
    %v603 = vld [vmem:[#allocation14 + $0x760] sm:$0xff]
    %v604 = vld [vmem:[#allocation14 + $0x768] sm:$0xff]
    %v605 = vld [vmem:[#allocation14 + $0x770] sm:$0xff]
    %v606 = vld [vmem:[#allocation14 + $0x778] sm:$0xff]
    %v607 = vld [vmem:[#allocation14 + $0x780] sm:$0xff]
    %v608 = vld [vmem:[#allocation14 + $0x788] sm:$0xff]
    %v609 = vld [vmem:[#allocation14 + $0x790] sm:$0xff]
    %v610 = vld [vmem:[#allocation14 + $0x798] sm:$0xff]
    %v611 = vld [vmem:[#allocation14 + $0x7a0] sm:$0xff]
    %v612 = vld [vmem:[#allocation14 + $0x7a8] sm:$0xff]
    %v613 = vld [vmem:[#allocation14 + $0x7b0] sm:$0xff]
    %v614 = vld [vmem:[#allocation14 + $0x7b8] sm:$0xff]
    %v615 = vld [vmem:[#allocation14 + $0x7c0] sm:$0xff]
    %v616 = vld [vmem:[#allocation14 + $0x7c8] sm:$0xff]
    %v617 = vld [vmem:[#allocation14 + $0x7d0] sm:$0xff]
    %v618 = vld [vmem:[#allocation14 + $0x7d8] sm:$0xff]
    %v619 = vld [vmem:[#allocation14 + $0x7e0] sm:$0xff]
    %v620 = vld [vmem:[#allocation14 + $0x7e8] sm:$0xff]
    %v621 = vld [vmem:[#allocation14 + $0x7f0] sm:$0xff]
    %v622 = vld [vmem:[#allocation14 + $0x7f8] sm:$0xff]
    %v623 = vld [vmem:[#allocation16] sm:$0xff]
    %v624 = vld [vmem:[#allocation16 + $0x8] sm:$0xff]
    %v625 = vld [vmem:[#allocation16 + $0x10] sm:$0xff]
    %v626 = vld [vmem:[#allocation16 + $0x18] sm:$0xff]
    %v631 = vlaneseq
    %v632 = vshrl.u32 %v631, 7
    %v633 = vsub.s32 0, %v632
    %v634 = vrot.slane %v623, %v633
    %v635 = vlaneseq
    %v636 = vshrl.u32 %v635, 7
    %v637 = vsub.s32 1, %v636
    %v638 = vrot.slane %v623, %v637
    %v639 = vlaneseq
    %v640 = vshrl.u32 %v639, 7
    %v641 = vsub.s32 2, %v640
    %v642 = vrot.slane %v623, %v641
    %v643 = vlaneseq
    %v644 = vshrl.u32 %v643, 7
    %v645 = vsub.s32 3, %v644
    %v646 = vrot.slane %v623, %v645
    %v647 = vlaneseq
    %v648 = vshrl.u32 %v647, 7
    %v649 = vsub.s32 4, %v648
    %v650 = vrot.slane %v623, %v649
    %v651 = vlaneseq
    %v652 = vshrl.u32 %v651, 7
    %v653 = vsub.s32 5, %v652
    %v654 = vrot.slane %v623, %v653
    %v655 = vlaneseq
    %v656 = vshrl.u32 %v655, 7
    %v657 = vsub.s32 6, %v656
    %v658 = vrot.slane %v623, %v657
    %v659 = vlaneseq
    %v660 = vshrl.u32 %v659, 7
    %v661 = vsub.s32 7, %v660
    %v662 = vrot.slane %v623, %v661
    %v663 = vlaneseq
    %v664 = vshrl.u32 %v663, 7
    %v665 = vsub.s32 0, %v664
    %v666 = vrot.slane %v624, %v665
    %v667 = vlaneseq
    %v668 = vshrl.u32 %v667, 7
    %v669 = vsub.s32 1, %v668
    %v670 = vrot.slane %v624, %v669
    %v671 = vlaneseq
    %v672 = vshrl.u32 %v671, 7
    %v673 = vsub.s32 2, %v672
    %v674 = vrot.slane %v624, %v673
    %v675 = vlaneseq
    %v676 = vshrl.u32 %v675, 7
    %v677 = vsub.s32 3, %v676
    %v678 = vrot.slane %v624, %v677
    %v679 = vlaneseq
    %v680 = vshrl.u32 %v679, 7
    %v681 = vsub.s32 4, %v680
    %v682 = vrot.slane %v624, %v681
    %v683 = vlaneseq
    %v684 = vshrl.u32 %v683, 7
    %v685 = vsub.s32 5, %v684
    %v686 = vrot.slane %v624, %v685
    %v687 = vlaneseq
    %v688 = vshrl.u32 %v687, 7
    %v689 = vsub.s32 6, %v688
    %v690 = vrot.slane %v624, %v689
    %v691 = vlaneseq
    %v692 = vshrl.u32 %v691, 7
    %v693 = vsub.s32 7, %v692
    %v694 = vrot.slane %v624, %v693
    %v695 = vlaneseq
    %v696 = vshrl.u32 %v695, 7
    %v697 = vsub.s32 0, %v696
    %v698 = vrot.slane %v625, %v697
    %v699 = vlaneseq
    %v700 = vshrl.u32 %v699, 7
    %v701 = vsub.s32 1, %v700
    %v702 = vrot.slane %v625, %v701
    %v703 = vlaneseq
    %v704 = vshrl.u32 %v703, 7
    %v705 = vsub.s32 2, %v704
    %v706 = vrot.slane %v625, %v705
    %v707 = vlaneseq
    %v708 = vshrl.u32 %v707, 7
    %v709 = vsub.s32 3, %v708
    %v710 = vrot.slane %v625, %v709
    %v711 = vlaneseq
    %v712 = vshrl.u32 %v711, 7
    %v713 = vsub.s32 4, %v712
    %v714 = vrot.slane %v625, %v713
    %v715 = vlaneseq
    %v716 = vshrl.u32 %v715, 7
    %v717 = vsub.s32 5, %v716
    %v718 = vrot.slane %v625, %v717
    %v719 = vlaneseq
    %v720 = vshrl.u32 %v719, 7
    %v721 = vsub.s32 6, %v720
    %v722 = vrot.slane %v625, %v721
    %v723 = vlaneseq
    %v724 = vshrl.u32 %v723, 7
    %v725 = vsub.s32 7, %v724
    %v726 = vrot.slane %v625, %v725
    %v727 = vlaneseq
    %v728 = vshrl.u32 %v727, 7
    %v729 = vsub.s32 0, %v728
    %v730 = vrot.slane %v626, %v729
    %v731 = vlaneseq
    %v732 = vshrl.u32 %v731, 7
    %v733 = vsub.s32 1, %v732
    %v734 = vrot.slane %v626, %v733
    %v735 = vlaneseq
    %v736 = vshrl.u32 %v735, 7
    %v737 = vsub.s32 2, %v736
    %v738 = vrot.slane %v626, %v737
    %v739 = vlaneseq
    %v740 = vshrl.u32 %v739, 7
    %v741 = vsub.s32 3, %v740
    %v742 = vrot.slane %v626, %v741
    %v743 = vlaneseq
    %v744 = vshrl.u32 %v743, 7
    %v745 = vsub.s32 4, %v744
    %v746 = vrot.slane %v626, %v745
    %v747 = vlaneseq
    %v748 = vshrl.u32 %v747, 7
    %v749 = vsub.s32 5, %v748
    %v750 = vrot.slane %v626, %v749
    %v751 = vlaneseq
    %v752 = vshrl.u32 %v751, 7
    %v753 = vsub.s32 6, %v752
    %v754 = vrot.slane %v626, %v753
    %v755 = vlaneseq
    %v756 = vshrl.u32 %v755, 7
    %v757 = vsub.s32 7, %v756
    %v758 = vrot.slane %v626, %v757
    %v1047 = vunpack.c.l.b16 %v367
    %v1048 = vunpack.c.h.b16 %v367
    %v1049 = vunpack.c.l.b16 %v368
    %v1050 = vunpack.c.h.b16 %v368
    %v1051 = vunpack.c.l.b16 %v369
    %v1052 = vunpack.c.h.b16 %v369
    %v1053 = vunpack.c.l.b16 %v370
    %v1054 = vunpack.c.h.b16 %v370
    %v1055 = vunpack.c.l.b16 %v371
    %v1056 = vunpack.c.h.b16 %v371
    %v1057 = vunpack.c.l.b16 %v372
    %v1058 = vunpack.c.h.b16 %v372
    %v1059 = vunpack.c.l.b16 %v373
    %v1060 = vunpack.c.h.b16 %v373
    %v1061 = vunpack.c.l.b16 %v374
    %v1062 = vunpack.c.h.b16 %v374
    %v1063 = vunpack.c.l.b16 %v375
    %v1064 = vunpack.c.h.b16 %v375
    %v1065 = vunpack.c.l.b16 %v376
    %v1066 = vunpack.c.h.b16 %v376
    %v1067 = vunpack.c.l.b16 %v377
    %v1068 = vunpack.c.h.b16 %v377
    %v1069 = vunpack.c.l.b16 %v378
    %v1070 = vunpack.c.h.b16 %v378
    %v1071 = vunpack.c.l.b16 %v379
    %v1072 = vunpack.c.h.b16 %v379
    %v1073 = vunpack.c.l.b16 %v380
    %v1074 = vunpack.c.h.b16 %v380
    %v1075 = vunpack.c.l.b16 %v381
    %v1076 = vunpack.c.h.b16 %v381
    %v1077 = vunpack.c.l.b16 %v382
    %v1078 = vunpack.c.h.b16 %v382
    %v1079 = vunpack.c.l.b16 %v383
    %v1080 = vunpack.c.h.b16 %v383
    %v1081 = vunpack.c.l.b16 %v384
    %v1082 = vunpack.c.h.b16 %v384
    %v1083 = vunpack.c.l.b16 %v385
    %v1084 = vunpack.c.h.b16 %v385
    %v1085 = vunpack.c.l.b16 %v386
    %v1086 = vunpack.c.h.b16 %v386
    %v1087 = vunpack.c.l.b16 %v387
    %v1088 = vunpack.c.h.b16 %v387
    %v1089 = vunpack.c.l.b16 %v388
    %v1090 = vunpack.c.h.b16 %v388
    %v1091 = vunpack.c.l.b16 %v389
    %v1092 = vunpack.c.h.b16 %v389
    %v1093 = vunpack.c.l.b16 %v390
    %v1094 = vunpack.c.h.b16 %v390
    %v1095 = vunpack.c.l.b16 %v391
    %v1096 = vunpack.c.h.b16 %v391
    %v1097 = vunpack.c.l.b16 %v392
    %v1098 = vunpack.c.h.b16 %v392
    %v1099 = vunpack.c.l.b16 %v393
    %v1100 = vunpack.c.h.b16 %v393
    %v1101 = vunpack.c.l.b16 %v394
    %v1102 = vunpack.c.h.b16 %v394
    %v1103 = vunpack.c.l.b16 %v395
    %v1104 = vunpack.c.h.b16 %v395
    %v1105 = vunpack.c.l.b16 %v396
    %v1106 = vunpack.c.h.b16 %v396
    %v1107 = vunpack.c.l.b16 %v397
    %v1108 = vunpack.c.h.b16 %v397
    %v1109 = vunpack.c.l.b16 %v398
    %v1110 = vunpack.c.h.b16 %v398
    %v1111 = vunpack.c.l.b16 %v399
    %v1112 = vunpack.c.h.b16 %v399
    %v1113 = vunpack.c.l.b16 %v400
    %v1114 = vunpack.c.h.b16 %v400
    %v1115 = vunpack.c.l.b16 %v401
    %v1116 = vunpack.c.h.b16 %v401
    %v1117 = vunpack.c.l.b16 %v402
    %v1118 = vunpack.c.h.b16 %v402
    %v1119 = vunpack.c.l.b16 %v403
    %v1120 = vunpack.c.h.b16 %v403
    %v1121 = vunpack.c.l.b16 %v404
    %v1122 = vunpack.c.h.b16 %v404
    %v1123 = vunpack.c.l.b16 %v405
    %v1124 = vunpack.c.h.b16 %v405
    %v1125 = vunpack.c.l.b16 %v406
    %v1126 = vunpack.c.h.b16 %v406
    %v1127 = vunpack.c.l.b16 %v407
    %v1128 = vunpack.c.h.b16 %v407
    %v1129 = vunpack.c.l.b16 %v408
    %v1130 = vunpack.c.h.b16 %v408
    %v1131 = vunpack.c.l.b16 %v409
    %v1132 = vunpack.c.h.b16 %v409
    %v1133 = vunpack.c.l.b16 %v410
    %v1134 = vunpack.c.h.b16 %v410
    %v1135 = vunpack.c.l.b16 %v411
    %v1136 = vunpack.c.h.b16 %v411
    %v1137 = vunpack.c.l.b16 %v412
    %v1138 = vunpack.c.h.b16 %v412
    %v1139 = vunpack.c.l.b16 %v413
    %v1140 = vunpack.c.h.b16 %v413
    %v1141 = vunpack.c.l.b16 %v414
    %v1142 = vunpack.c.h.b16 %v414
    %v1143 = vunpack.c.l.b16 %v415
    %v1144 = vunpack.c.h.b16 %v415
    %v1145 = vunpack.c.l.b16 %v416
    %v1146 = vunpack.c.h.b16 %v416
    %v1147 = vunpack.c.l.b16 %v417
    %v1148 = vunpack.c.h.b16 %v417
    %v1149 = vunpack.c.l.b16 %v418
    %v1150 = vunpack.c.h.b16 %v418
    %v1151 = vunpack.c.l.b16 %v419
    %v1152 = vunpack.c.h.b16 %v419
    %v1153 = vunpack.c.l.b16 %v420
    %v1154 = vunpack.c.h.b16 %v420
    %v1155 = vunpack.c.l.b16 %v421
    %v1156 = vunpack.c.h.b16 %v421
    %v1157 = vunpack.c.l.b16 %v422
    %v1158 = vunpack.c.h.b16 %v422
    %v1159 = vunpack.c.l.b16 %v423
    %v1160 = vunpack.c.h.b16 %v423
    %v1161 = vunpack.c.l.b16 %v424
    %v1162 = vunpack.c.h.b16 %v424
    %v1163 = vunpack.c.l.b16 %v425
    %v1164 = vunpack.c.h.b16 %v425
    %v1165 = vunpack.c.l.b16 %v426
    %v1166 = vunpack.c.h.b16 %v426
    %v1167 = vunpack.c.l.b16 %v427
    %v1168 = vunpack.c.h.b16 %v427
    %v1169 = vunpack.c.l.b16 %v428
    %v1170 = vunpack.c.h.b16 %v428
    %v1171 = vunpack.c.l.b16 %v429
    %v1172 = vunpack.c.h.b16 %v429
    %v1173 = vunpack.c.l.b16 %v430
    %v1174 = vunpack.c.h.b16 %v430
    %v1175 = vunpack.c.l.b16 %v431
    %v1176 = vunpack.c.h.b16 %v431
    %v1177 = vunpack.c.l.b16 %v432
    %v1178 = vunpack.c.h.b16 %v432
    %v1179 = vunpack.c.l.b16 %v433
    %v1180 = vunpack.c.h.b16 %v433
    %v1181 = vunpack.c.l.b16 %v434
    %v1182 = vunpack.c.h.b16 %v434
    %v1183 = vunpack.c.l.b16 %v435
    %v1184 = vunpack.c.h.b16 %v435
    %v1185 = vunpack.c.l.b16 %v436
    %v1186 = vunpack.c.h.b16 %v436
    %v1187 = vunpack.c.l.b16 %v437
    %v1188 = vunpack.c.h.b16 %v437
    %v1189 = vunpack.c.l.b16 %v438
    %v1190 = vunpack.c.h.b16 %v438
    %v1191 = vunpack.c.l.b16 %v439
    %v1192 = vunpack.c.h.b16 %v439
    %v1193 = vunpack.c.l.b16 %v440
    %v1194 = vunpack.c.h.b16 %v440
    %v1195 = vunpack.c.l.b16 %v441
    %v1196 = vunpack.c.h.b16 %v441
    %v1197 = vunpack.c.l.b16 %v442
    %v1198 = vunpack.c.h.b16 %v442
    %v1199 = vunpack.c.l.b16 %v443
    %v1200 = vunpack.c.h.b16 %v443
    %v1201 = vunpack.c.l.b16 %v444
    %v1202 = vunpack.c.h.b16 %v444
    %v1203 = vunpack.c.l.b16 %v445
    %v1204 = vunpack.c.h.b16 %v445
    %v1205 = vunpack.c.l.b16 %v446
    %v1206 = vunpack.c.h.b16 %v446
    %v1207 = vunpack.c.l.b16 %v447
    %v1208 = vunpack.c.h.b16 %v447
    %v1209 = vunpack.c.l.b16 %v448
    %v1210 = vunpack.c.h.b16 %v448
    %v1211 = vunpack.c.l.b16 %v449
    %v1212 = vunpack.c.h.b16 %v449
    %v1213 = vunpack.c.l.b16 %v450
    %v1214 = vunpack.c.h.b16 %v450
    %v1215 = vunpack.c.l.b16 %v451
    %v1216 = vunpack.c.h.b16 %v451
    %v1217 = vunpack.c.l.b16 %v452
    %v1218 = vunpack.c.h.b16 %v452
    %v1219 = vunpack.c.l.b16 %v453
    %v1220 = vunpack.c.h.b16 %v453
    %v1221 = vunpack.c.l.b16 %v454
    %v1222 = vunpack.c.h.b16 %v454
    %v1223 = vunpack.c.l.b16 %v455
    %v1224 = vunpack.c.h.b16 %v455
    %v1225 = vunpack.c.l.b16 %v456
    %v1226 = vunpack.c.h.b16 %v456
    %v1227 = vunpack.c.l.b16 %v457
    %v1228 = vunpack.c.h.b16 %v457
    %v1229 = vunpack.c.l.b16 %v458
    %v1230 = vunpack.c.h.b16 %v458
    %v1231 = vunpack.c.l.b16 %v459
    %v1232 = vunpack.c.h.b16 %v459
    %v1233 = vunpack.c.l.b16 %v460
    %v1234 = vunpack.c.h.b16 %v460
    %v1235 = vunpack.c.l.b16 %v461
    %v1236 = vunpack.c.h.b16 %v461
    %v1237 = vunpack.c.l.b16 %v462
    %v1238 = vunpack.c.h.b16 %v462
    %v1239 = vunpack.c.l.b16 %v463
    %v1240 = vunpack.c.h.b16 %v463
    %v1241 = vunpack.c.l.b16 %v464
    %v1242 = vunpack.c.h.b16 %v464
    %v1243 = vunpack.c.l.b16 %v465
    %v1244 = vunpack.c.h.b16 %v465
    %v1245 = vunpack.c.l.b16 %v466
    %v1246 = vunpack.c.h.b16 %v466
    %v1247 = vunpack.c.l.b16 %v467
    %v1248 = vunpack.c.h.b16 %v467
    %v1249 = vunpack.c.l.b16 %v468
    %v1250 = vunpack.c.h.b16 %v468
    %v1251 = vunpack.c.l.b16 %v469
    %v1252 = vunpack.c.h.b16 %v469
    %v1253 = vunpack.c.l.b16 %v470
    %v1254 = vunpack.c.h.b16 %v470
    %v1255 = vunpack.c.l.b16 %v471
    %v1256 = vunpack.c.h.b16 %v471
    %v1257 = vunpack.c.l.b16 %v472
    %v1258 = vunpack.c.h.b16 %v472
    %v1259 = vunpack.c.l.b16 %v473
    %v1260 = vunpack.c.h.b16 %v473
    %v1261 = vunpack.c.l.b16 %v474
    %v1262 = vunpack.c.h.b16 %v474
    %v1263 = vunpack.c.l.b16 %v475
    %v1264 = vunpack.c.h.b16 %v475
    %v1265 = vunpack.c.l.b16 %v476
    %v1266 = vunpack.c.h.b16 %v476
    %v1267 = vunpack.c.l.b16 %v477
    %v1268 = vunpack.c.h.b16 %v477
    %v1269 = vunpack.c.l.b16 %v478
    %v1270 = vunpack.c.h.b16 %v478
    %v1271 = vunpack.c.l.b16 %v479
    %v1272 = vunpack.c.h.b16 %v479
    %v1273 = vunpack.c.l.b16 %v480
    %v1274 = vunpack.c.h.b16 %v480
    %v1275 = vunpack.c.l.b16 %v481
    %v1276 = vunpack.c.h.b16 %v481
    %v1277 = vunpack.c.l.b16 %v482
    %v1278 = vunpack.c.h.b16 %v482
    %v1279 = vunpack.c.l.b16 %v483
    %v1280 = vunpack.c.h.b16 %v483
    %v1281 = vunpack.c.l.b16 %v484
    %v1282 = vunpack.c.h.b16 %v484
    %v1283 = vunpack.c.l.b16 %v485
    %v1284 = vunpack.c.h.b16 %v485
    %v1285 = vunpack.c.l.b16 %v486
    %v1286 = vunpack.c.h.b16 %v486
    %v1287 = vunpack.c.l.b16 %v487
    %v1288 = vunpack.c.h.b16 %v487
    %v1289 = vunpack.c.l.b16 %v488
    %v1290 = vunpack.c.h.b16 %v488
    %v1291 = vunpack.c.l.b16 %v489
    %v1292 = vunpack.c.h.b16 %v489
    %v1293 = vunpack.c.l.b16 %v490
    %v1294 = vunpack.c.h.b16 %v490
    %v1295 = vunpack.c.l.b16 %v491
    %v1296 = vunpack.c.h.b16 %v491
    %v1297 = vunpack.c.l.b16 %v492
    %v1298 = vunpack.c.h.b16 %v492
    %v1299 = vunpack.c.l.b16 %v493
    %v1300 = vunpack.c.h.b16 %v493
    %v1301 = vunpack.c.l.b16 %v494
    %v1302 = vunpack.c.h.b16 %v494
    %v1303 = vunpack.c.l.b16 %v495
    %v1304 = vunpack.c.h.b16 %v495
    %v1305 = vunpack.c.l.b16 %v496
    %v1306 = vunpack.c.h.b16 %v496
    %v1307 = vunpack.c.l.b16 %v497
    %v1308 = vunpack.c.h.b16 %v497
    %v1309 = vunpack.c.l.b16 %v498
    %v1310 = vunpack.c.h.b16 %v498
    %v1311 = vunpack.c.l.b16 %v499
    %v1312 = vunpack.c.h.b16 %v499
    %v1313 = vunpack.c.l.b16 %v500
    %v1314 = vunpack.c.h.b16 %v500
    %v1315 = vunpack.c.l.b16 %v501
    %v1316 = vunpack.c.h.b16 %v501
    %v1317 = vunpack.c.l.b16 %v502
    %v1318 = vunpack.c.h.b16 %v502
    %v1319 = vunpack.c.l.b16 %v503
    %v1320 = vunpack.c.h.b16 %v503
    %v1321 = vunpack.c.l.b16 %v504
    %v1322 = vunpack.c.h.b16 %v504
    %v1323 = vunpack.c.l.b16 %v505
    %v1324 = vunpack.c.h.b16 %v505
    %v1325 = vunpack.c.l.b16 %v506
    %v1326 = vunpack.c.h.b16 %v506
    %v1327 = vunpack.c.l.b16 %v507
    %v1328 = vunpack.c.h.b16 %v507
    %v1329 = vunpack.c.l.b16 %v508
    %v1330 = vunpack.c.h.b16 %v508
    %v1331 = vunpack.c.l.b16 %v509
    %v1332 = vunpack.c.h.b16 %v509
    %v1333 = vunpack.c.l.b16 %v510
    %v1334 = vunpack.c.h.b16 %v510
    %v1335 = vunpack.c.l.b16 %v511
    %v1336 = vunpack.c.h.b16 %v511
    %v1337 = vunpack.c.l.b16 %v512
    %v1338 = vunpack.c.h.b16 %v512
    %v1339 = vunpack.c.l.b16 %v513
    %v1340 = vunpack.c.h.b16 %v513
    %v1341 = vunpack.c.l.b16 %v514
    %v1342 = vunpack.c.h.b16 %v514
    %v1343 = vunpack.c.l.b16 %v515
    %v1344 = vunpack.c.h.b16 %v515
    %v1345 = vunpack.c.l.b16 %v516
    %v1346 = vunpack.c.h.b16 %v516
    %v1347 = vunpack.c.l.b16 %v517
    %v1348 = vunpack.c.h.b16 %v517
    %v1349 = vunpack.c.l.b16 %v518
    %v1350 = vunpack.c.h.b16 %v518
    %v1351 = vunpack.c.l.b16 %v519
    %v1352 = vunpack.c.h.b16 %v519
    %v1353 = vunpack.c.l.b16 %v520
    %v1354 = vunpack.c.h.b16 %v520
    %v1355 = vunpack.c.l.b16 %v521
    %v1356 = vunpack.c.h.b16 %v521
    %v1357 = vunpack.c.l.b16 %v522
    %v1358 = vunpack.c.h.b16 %v522
    %v1359 = vunpack.c.l.b16 %v523
    %v1360 = vunpack.c.h.b16 %v523
    %v1361 = vunpack.c.l.b16 %v524
    %v1362 = vunpack.c.h.b16 %v524
    %v1363 = vunpack.c.l.b16 %v525
    %v1364 = vunpack.c.h.b16 %v525
    %v1365 = vunpack.c.l.b16 %v526
    %v1366 = vunpack.c.h.b16 %v526
    %v1367 = vunpack.c.l.b16 %v527
    %v1368 = vunpack.c.h.b16 %v527
    %v1369 = vunpack.c.l.b16 %v528
    %v1370 = vunpack.c.h.b16 %v528
    %v1371 = vunpack.c.l.b16 %v529
    %v1372 = vunpack.c.h.b16 %v529
    %v1373 = vunpack.c.l.b16 %v530
    %v1374 = vunpack.c.h.b16 %v530
    %v1375 = vunpack.c.l.b16 %v531
    %v1376 = vunpack.c.h.b16 %v531
    %v1377 = vunpack.c.l.b16 %v532
    %v1378 = vunpack.c.h.b16 %v532
    %v1379 = vunpack.c.l.b16 %v533
    %v1380 = vunpack.c.h.b16 %v533
    %v1381 = vunpack.c.l.b16 %v534
    %v1382 = vunpack.c.h.b16 %v534
    %v1383 = vunpack.c.l.b16 %v535
    %v1384 = vunpack.c.h.b16 %v535
    %v1385 = vunpack.c.l.b16 %v536
    %v1386 = vunpack.c.h.b16 %v536
    %v1387 = vunpack.c.l.b16 %v537
    %v1388 = vunpack.c.h.b16 %v537
    %v1389 = vunpack.c.l.b16 %v538
    %v1390 = vunpack.c.h.b16 %v538
    %v1391 = vunpack.c.l.b16 %v539
    %v1392 = vunpack.c.h.b16 %v539
    %v1393 = vunpack.c.l.b16 %v540
    %v1394 = vunpack.c.h.b16 %v540
    %v1395 = vunpack.c.l.b16 %v541
    %v1396 = vunpack.c.h.b16 %v541
    %v1397 = vunpack.c.l.b16 %v542
    %v1398 = vunpack.c.h.b16 %v542
    %v1399 = vunpack.c.l.b16 %v543
    %v1400 = vunpack.c.h.b16 %v543
    %v1401 = vunpack.c.l.b16 %v544
    %v1402 = vunpack.c.h.b16 %v544
    %v1403 = vunpack.c.l.b16 %v545
    %v1404 = vunpack.c.h.b16 %v545
    %v1405 = vunpack.c.l.b16 %v546
    %v1406 = vunpack.c.h.b16 %v546
    %v1407 = vunpack.c.l.b16 %v547
    %v1408 = vunpack.c.h.b16 %v547
    %v1409 = vunpack.c.l.b16 %v548
    %v1410 = vunpack.c.h.b16 %v548
    %v1411 = vunpack.c.l.b16 %v549
    %v1412 = vunpack.c.h.b16 %v549
    %v1413 = vunpack.c.l.b16 %v550
    %v1414 = vunpack.c.h.b16 %v550
    %v1415 = vunpack.c.l.b16 %v551
    %v1416 = vunpack.c.h.b16 %v551
    %v1417 = vunpack.c.l.b16 %v552
    %v1418 = vunpack.c.h.b16 %v552
    %v1419 = vunpack.c.l.b16 %v553
    %v1420 = vunpack.c.h.b16 %v553
    %v1421 = vunpack.c.l.b16 %v554
    %v1422 = vunpack.c.h.b16 %v554
    %v1423 = vunpack.c.l.b16 %v555
    %v1424 = vunpack.c.h.b16 %v555
    %v1425 = vunpack.c.l.b16 %v556
    %v1426 = vunpack.c.h.b16 %v556
    %v1427 = vunpack.c.l.b16 %v557
    %v1428 = vunpack.c.h.b16 %v557
    %v1429 = vunpack.c.l.b16 %v558
    %v1430 = vunpack.c.h.b16 %v558
    %v1431 = vunpack.c.l.b16 %v559
    %v1432 = vunpack.c.h.b16 %v559
    %v1433 = vunpack.c.l.b16 %v560
    %v1434 = vunpack.c.h.b16 %v560
    %v1435 = vunpack.c.l.b16 %v561
    %v1436 = vunpack.c.h.b16 %v561
    %v1437 = vunpack.c.l.b16 %v562
    %v1438 = vunpack.c.h.b16 %v562
    %v1439 = vunpack.c.l.b16 %v563
    %v1440 = vunpack.c.h.b16 %v563
    %v1441 = vunpack.c.l.b16 %v564
    %v1442 = vunpack.c.h.b16 %v564
    %v1443 = vunpack.c.l.b16 %v565
    %v1444 = vunpack.c.h.b16 %v565
    %v1445 = vunpack.c.l.b16 %v566
    %v1446 = vunpack.c.h.b16 %v566
    %v1447 = vunpack.c.l.b16 %v567
    %v1448 = vunpack.c.h.b16 %v567
    %v1449 = vunpack.c.l.b16 %v568
    %v1450 = vunpack.c.h.b16 %v568
    %v1451 = vunpack.c.l.b16 %v569
    %v1452 = vunpack.c.h.b16 %v569
    %v1453 = vunpack.c.l.b16 %v570
    %v1454 = vunpack.c.h.b16 %v570
    %v1455 = vunpack.c.l.b16 %v571
    %v1456 = vunpack.c.h.b16 %v571
    %v1457 = vunpack.c.l.b16 %v572
    %v1458 = vunpack.c.h.b16 %v572
    %v1459 = vunpack.c.l.b16 %v573
    %v1460 = vunpack.c.h.b16 %v573
    %v1461 = vunpack.c.l.b16 %v574
    %v1462 = vunpack.c.h.b16 %v574
    %v1463 = vunpack.c.l.b16 %v575
    %v1464 = vunpack.c.h.b16 %v575
    %v1465 = vunpack.c.l.b16 %v576
    %v1466 = vunpack.c.h.b16 %v576
    %v1467 = vunpack.c.l.b16 %v577
    %v1468 = vunpack.c.h.b16 %v577
    %v1469 = vunpack.c.l.b16 %v578
    %v1470 = vunpack.c.h.b16 %v578
    %v1471 = vunpack.c.l.b16 %v579
    %v1472 = vunpack.c.h.b16 %v579
    %v1473 = vunpack.c.l.b16 %v580
    %v1474 = vunpack.c.h.b16 %v580
    %v1475 = vunpack.c.l.b16 %v581
    %v1476 = vunpack.c.h.b16 %v581
    %v1477 = vunpack.c.l.b16 %v582
    %v1478 = vunpack.c.h.b16 %v582
    %v1479 = vunpack.c.l.b16 %v583
    %v1480 = vunpack.c.h.b16 %v583
    %v1481 = vunpack.c.l.b16 %v584
    %v1482 = vunpack.c.h.b16 %v584
    %v1483 = vunpack.c.l.b16 %v585
    %v1484 = vunpack.c.h.b16 %v585
    %v1485 = vunpack.c.l.b16 %v586
    %v1486 = vunpack.c.h.b16 %v586
    %v1487 = vunpack.c.l.b16 %v587
    %v1488 = vunpack.c.h.b16 %v587
    %v1489 = vunpack.c.l.b16 %v588
    %v1490 = vunpack.c.h.b16 %v588
    %v1491 = vunpack.c.l.b16 %v589
    %v1492 = vunpack.c.h.b16 %v589
    %v1493 = vunpack.c.l.b16 %v590
    %v1494 = vunpack.c.h.b16 %v590
    %v1495 = vunpack.c.l.b16 %v591
    %v1496 = vunpack.c.h.b16 %v591
    %v1497 = vunpack.c.l.b16 %v592
    %v1498 = vunpack.c.h.b16 %v592
    %v1499 = vunpack.c.l.b16 %v593
    %v1500 = vunpack.c.h.b16 %v593
    %v1501 = vunpack.c.l.b16 %v594
    %v1502 = vunpack.c.h.b16 %v594
    %v1503 = vunpack.c.l.b16 %v595
    %v1504 = vunpack.c.h.b16 %v595
    %v1505 = vunpack.c.l.b16 %v596
    %v1506 = vunpack.c.h.b16 %v596
    %v1507 = vunpack.c.l.b16 %v597
    %v1508 = vunpack.c.h.b16 %v597
    %v1509 = vunpack.c.l.b16 %v598
    %v1510 = vunpack.c.h.b16 %v598
    %v1511 = vunpack.c.l.b16 %v599
    %v1512 = vunpack.c.h.b16 %v599
    %v1513 = vunpack.c.l.b16 %v600
    %v1514 = vunpack.c.h.b16 %v600
    %v1515 = vunpack.c.l.b16 %v601
    %v1516 = vunpack.c.h.b16 %v601
    %v1517 = vunpack.c.l.b16 %v602
    %v1518 = vunpack.c.h.b16 %v602
    %v1519 = vunpack.c.l.b16 %v603
    %v1520 = vunpack.c.h.b16 %v603
    %v1521 = vunpack.c.l.b16 %v604
    %v1522 = vunpack.c.h.b16 %v604
    %v1523 = vunpack.c.l.b16 %v605
    %v1524 = vunpack.c.h.b16 %v605
    %v1525 = vunpack.c.l.b16 %v606
    %v1526 = vunpack.c.h.b16 %v606
    %v1527 = vunpack.c.l.b16 %v607
    %v1528 = vunpack.c.h.b16 %v607
    %v1529 = vunpack.c.l.b16 %v608
    %v1530 = vunpack.c.h.b16 %v608
    %v1531 = vunpack.c.l.b16 %v609
    %v1532 = vunpack.c.h.b16 %v609
    %v1533 = vunpack.c.l.b16 %v610
    %v1534 = vunpack.c.h.b16 %v610
    %v1535 = vunpack.c.l.b16 %v611
    %v1536 = vunpack.c.h.b16 %v611
    %v1537 = vunpack.c.l.b16 %v612
    %v1538 = vunpack.c.h.b16 %v612
    %v1539 = vunpack.c.l.b16 %v613
    %v1540 = vunpack.c.h.b16 %v613
    %v1541 = vunpack.c.l.b16 %v614
    %v1542 = vunpack.c.h.b16 %v614
    %v1543 = vunpack.c.l.b16 %v615
    %v1544 = vunpack.c.h.b16 %v615
    %v1545 = vunpack.c.l.b16 %v616
    %v1546 = vunpack.c.h.b16 %v616
    %v1547 = vunpack.c.l.b16 %v617
    %v1548 = vunpack.c.h.b16 %v617
    %v1549 = vunpack.c.l.b16 %v618
    %v1550 = vunpack.c.h.b16 %v618
    %v1551 = vunpack.c.l.b16 %v619
    %v1552 = vunpack.c.h.b16 %v619
    %v1553 = vunpack.c.l.b16 %v620
    %v1554 = vunpack.c.h.b16 %v620
    %v1555 = vunpack.c.l.b16 %v621
    %v1556 = vunpack.c.h.b16 %v621
    %v1557 = vunpack.c.l.b16 %v622
    %v1558 = vunpack.c.h.b16 %v622
    %v1559 = vpack.c.b16 %v1079, %v1047
    %v1560 = vpack.c.b16 %v1080, %v1048
    %v1561 = vpack.c.b16 %v1081, %v1049
    %v1562 = vpack.c.b16 %v1082, %v1050
    %v1563 = vpack.c.b16 %v1083, %v1051
    %v1564 = vpack.c.b16 %v1084, %v1052
    %v1565 = vpack.c.b16 %v1085, %v1053
    %v1566 = vpack.c.b16 %v1086, %v1054
    %v1567 = vpack.c.b16 %v1087, %v1055
    %v1568 = vpack.c.b16 %v1088, %v1056
    %v1569 = vpack.c.b16 %v1089, %v1057
    %v1570 = vpack.c.b16 %v1090, %v1058
    %v1571 = vpack.c.b16 %v1091, %v1059
    %v1572 = vpack.c.b16 %v1092, %v1060
    %v1573 = vpack.c.b16 %v1093, %v1061
    %v1574 = vpack.c.b16 %v1094, %v1062
    %v1575 = vpack.c.b16 %v1095, %v1063
    %v1576 = vpack.c.b16 %v1096, %v1064
    %v1577 = vpack.c.b16 %v1097, %v1065
    %v1578 = vpack.c.b16 %v1098, %v1066
    %v1579 = vpack.c.b16 %v1099, %v1067
    %v1580 = vpack.c.b16 %v1100, %v1068
    %v1581 = vpack.c.b16 %v1101, %v1069
    %v1582 = vpack.c.b16 %v1102, %v1070
    %v1583 = vpack.c.b16 %v1103, %v1071
    %v1584 = vpack.c.b16 %v1104, %v1072
    %v1585 = vpack.c.b16 %v1105, %v1073
    %v1586 = vpack.c.b16 %v1106, %v1074
    %v1587 = vpack.c.b16 %v1107, %v1075
    %v1588 = vpack.c.b16 %v1108, %v1076
    %v1589 = vpack.c.b16 %v1109, %v1077
    %v1590 = vpack.c.b16 %v1110, %v1078
    %v1591 = vpack.c.b16 %v1143, %v1111
    %v1592 = vpack.c.b16 %v1144, %v1112
    %v1593 = vpack.c.b16 %v1145, %v1113
    %v1594 = vpack.c.b16 %v1146, %v1114
    %v1595 = vpack.c.b16 %v1147, %v1115
    %v1596 = vpack.c.b16 %v1148, %v1116
    %v1597 = vpack.c.b16 %v1149, %v1117
    %v1598 = vpack.c.b16 %v1150, %v1118
    %v1599 = vpack.c.b16 %v1151, %v1119
    %v1600 = vpack.c.b16 %v1152, %v1120
    %v1601 = vpack.c.b16 %v1153, %v1121
    %v1602 = vpack.c.b16 %v1154, %v1122
    %v1603 = vpack.c.b16 %v1155, %v1123
    %v1604 = vpack.c.b16 %v1156, %v1124
    %v1605 = vpack.c.b16 %v1157, %v1125
    %v1606 = vpack.c.b16 %v1158, %v1126
    %v1607 = vpack.c.b16 %v1159, %v1127
    %v1608 = vpack.c.b16 %v1160, %v1128
    %v1609 = vpack.c.b16 %v1161, %v1129
    %v1610 = vpack.c.b16 %v1162, %v1130
    %v1611 = vpack.c.b16 %v1163, %v1131
    %v1612 = vpack.c.b16 %v1164, %v1132
    %v1613 = vpack.c.b16 %v1165, %v1133
    %v1614 = vpack.c.b16 %v1166, %v1134
    %v1615 = vpack.c.b16 %v1167, %v1135
    %v1616 = vpack.c.b16 %v1168, %v1136
    %v1617 = vpack.c.b16 %v1169, %v1137
    %v1618 = vpack.c.b16 %v1170, %v1138
    %v1619 = vpack.c.b16 %v1171, %v1139
    %v1620 = vpack.c.b16 %v1172, %v1140
    %v1621 = vpack.c.b16 %v1173, %v1141
    %v1622 = vpack.c.b16 %v1174, %v1142
    %v1623 = vpack.c.b16 %v1207, %v1175
    %v1624 = vpack.c.b16 %v1208, %v1176
    %v1625 = vpack.c.b16 %v1209, %v1177
    %v1626 = vpack.c.b16 %v1210, %v1178
    %v1627 = vpack.c.b16 %v1211, %v1179
    %v1628 = vpack.c.b16 %v1212, %v1180
    %v1629 = vpack.c.b16 %v1213, %v1181
    %v1630 = vpack.c.b16 %v1214, %v1182
    %v1631 = vpack.c.b16 %v1215, %v1183
    %v1632 = vpack.c.b16 %v1216, %v1184
    %v1633 = vpack.c.b16 %v1217, %v1185
    %v1634 = vpack.c.b16 %v1218, %v1186
    %v1635 = vpack.c.b16 %v1219, %v1187
    %v1636 = vpack.c.b16 %v1220, %v1188
    %v1637 = vpack.c.b16 %v1221, %v1189
    %v1638 = vpack.c.b16 %v1222, %v1190
    %v1639 = vpack.c.b16 %v1223, %v1191
    %v1640 = vpack.c.b16 %v1224, %v1192
    %v1641 = vpack.c.b16 %v1225, %v1193
    %v1642 = vpack.c.b16 %v1226, %v1194
    %v1643 = vpack.c.b16 %v1227, %v1195
    %v1644 = vpack.c.b16 %v1228, %v1196
    %v1645 = vpack.c.b16 %v1229, %v1197
    %v1646 = vpack.c.b16 %v1230, %v1198
    %v1647 = vpack.c.b16 %v1231, %v1199
    %v1648 = vpack.c.b16 %v1232, %v1200
    %v1649 = vpack.c.b16 %v1233, %v1201
    %v1650 = vpack.c.b16 %v1234, %v1202
    %v1651 = vpack.c.b16 %v1235, %v1203
    %v1652 = vpack.c.b16 %v1236, %v1204
    %v1653 = vpack.c.b16 %v1237, %v1205
    %v1654 = vpack.c.b16 %v1238, %v1206
    %v1655 = vpack.c.b16 %v1271, %v1239
    %v1656 = vpack.c.b16 %v1272, %v1240
    %v1657 = vpack.c.b16 %v1273, %v1241
    %v1658 = vpack.c.b16 %v1274, %v1242
    %v1659 = vpack.c.b16 %v1275, %v1243
    %v1660 = vpack.c.b16 %v1276, %v1244
    %v1661 = vpack.c.b16 %v1277, %v1245
    %v1662 = vpack.c.b16 %v1278, %v1246
    %v1663 = vpack.c.b16 %v1279, %v1247
    %v1664 = vpack.c.b16 %v1280, %v1248
    %v1665 = vpack.c.b16 %v1281, %v1249
    %v1666 = vpack.c.b16 %v1282, %v1250
    %v1667 = vpack.c.b16 %v1283, %v1251
    %v1668 = vpack.c.b16 %v1284, %v1252
    %v1669 = vpack.c.b16 %v1285, %v1253
    %v1670 = vpack.c.b16 %v1286, %v1254
    %v1671 = vpack.c.b16 %v1287, %v1255
    %v1672 = vpack.c.b16 %v1288, %v1256
    %v1673 = vpack.c.b16 %v1289, %v1257
    %v1674 = vpack.c.b16 %v1290, %v1258
    %v1675 = vpack.c.b16 %v1291, %v1259
    %v1676 = vpack.c.b16 %v1292, %v1260
    %v1677 = vpack.c.b16 %v1293, %v1261
    %v1678 = vpack.c.b16 %v1294, %v1262
    %v1679 = vpack.c.b16 %v1295, %v1263
    %v1680 = vpack.c.b16 %v1296, %v1264
    %v1681 = vpack.c.b16 %v1297, %v1265
    %v1682 = vpack.c.b16 %v1298, %v1266
    %v1683 = vpack.c.b16 %v1299, %v1267
    %v1684 = vpack.c.b16 %v1300, %v1268
    %v1685 = vpack.c.b16 %v1301, %v1269
    %v1686 = vpack.c.b16 %v1302, %v1270
    %v1687 = vpack.c.b16 %v1335, %v1303
    %v1688 = vpack.c.b16 %v1336, %v1304
    %v1689 = vpack.c.b16 %v1337, %v1305
    %v1690 = vpack.c.b16 %v1338, %v1306
    %v1691 = vpack.c.b16 %v1339, %v1307
    %v1692 = vpack.c.b16 %v1340, %v1308
    %v1693 = vpack.c.b16 %v1341, %v1309
    %v1694 = vpack.c.b16 %v1342, %v1310
    %v1695 = vpack.c.b16 %v1343, %v1311
    %v1696 = vpack.c.b16 %v1344, %v1312
    %v1697 = vpack.c.b16 %v1345, %v1313
    %v1698 = vpack.c.b16 %v1346, %v1314
    %v1699 = vpack.c.b16 %v1347, %v1315
    %v1700 = vpack.c.b16 %v1348, %v1316
    %v1701 = vpack.c.b16 %v1349, %v1317
    %v1702 = vpack.c.b16 %v1350, %v1318
    %v1703 = vpack.c.b16 %v1351, %v1319
    %v1704 = vpack.c.b16 %v1352, %v1320
    %v1705 = vpack.c.b16 %v1353, %v1321
    %v1706 = vpack.c.b16 %v1354, %v1322
    %v1707 = vpack.c.b16 %v1355, %v1323
    %v1708 = vpack.c.b16 %v1356, %v1324
    %v1709 = vpack.c.b16 %v1357, %v1325
    %v1710 = vpack.c.b16 %v1358, %v1326
    %v1711 = vpack.c.b16 %v1359, %v1327
    %v1712 = vpack.c.b16 %v1360, %v1328
    %v1713 = vpack.c.b16 %v1361, %v1329
    %v1714 = vpack.c.b16 %v1362, %v1330
    %v1715 = vpack.c.b16 %v1363, %v1331
    %v1716 = vpack.c.b16 %v1364, %v1332
    %v1717 = vpack.c.b16 %v1365, %v1333
    %v1718 = vpack.c.b16 %v1366, %v1334
    %v1719 = vpack.c.b16 %v1399, %v1367
    %v1720 = vpack.c.b16 %v1400, %v1368
    %v1721 = vpack.c.b16 %v1401, %v1369
    %v1722 = vpack.c.b16 %v1402, %v1370
    %v1723 = vpack.c.b16 %v1403, %v1371
    %v1724 = vpack.c.b16 %v1404, %v1372
    %v1725 = vpack.c.b16 %v1405, %v1373
    %v1726 = vpack.c.b16 %v1406, %v1374
    %v1727 = vpack.c.b16 %v1407, %v1375
    %v1728 = vpack.c.b16 %v1408, %v1376
    %v1729 = vpack.c.b16 %v1409, %v1377
    %v1730 = vpack.c.b16 %v1410, %v1378
    %v1731 = vpack.c.b16 %v1411, %v1379
    %v1732 = vpack.c.b16 %v1412, %v1380
    %v1733 = vpack.c.b16 %v1413, %v1381
    %v1734 = vpack.c.b16 %v1414, %v1382
    %v1735 = vpack.c.b16 %v1415, %v1383
    %v1736 = vpack.c.b16 %v1416, %v1384
    %v1737 = vpack.c.b16 %v1417, %v1385
    %v1738 = vpack.c.b16 %v1418, %v1386
    %v1739 = vpack.c.b16 %v1419, %v1387
    %v1740 = vpack.c.b16 %v1420, %v1388
    %v1741 = vpack.c.b16 %v1421, %v1389
    %v1742 = vpack.c.b16 %v1422, %v1390
    %v1743 = vpack.c.b16 %v1423, %v1391
    %v1744 = vpack.c.b16 %v1424, %v1392
    %v1745 = vpack.c.b16 %v1425, %v1393
    %v1746 = vpack.c.b16 %v1426, %v1394
    %v1747 = vpack.c.b16 %v1427, %v1395
    %v1748 = vpack.c.b16 %v1428, %v1396
    %v1749 = vpack.c.b16 %v1429, %v1397
    %v1750 = vpack.c.b16 %v1430, %v1398
    %v1751 = vpack.c.b16 %v1463, %v1431
    %v1752 = vpack.c.b16 %v1464, %v1432
    %v1753 = vpack.c.b16 %v1465, %v1433
    %v1754 = vpack.c.b16 %v1466, %v1434
    %v1755 = vpack.c.b16 %v1467, %v1435
    %v1756 = vpack.c.b16 %v1468, %v1436
    %v1757 = vpack.c.b16 %v1469, %v1437
    %v1758 = vpack.c.b16 %v1470, %v1438
    %v1759 = vpack.c.b16 %v1471, %v1439
    %v1760 = vpack.c.b16 %v1472, %v1440
    %v1761 = vpack.c.b16 %v1473, %v1441
    %v1762 = vpack.c.b16 %v1474, %v1442
    %v1763 = vpack.c.b16 %v1475, %v1443
    %v1764 = vpack.c.b16 %v1476, %v1444
    %v1765 = vpack.c.b16 %v1477, %v1445
    %v1766 = vpack.c.b16 %v1478, %v1446
    %v1767 = vpack.c.b16 %v1479, %v1447
    %v1768 = vpack.c.b16 %v1480, %v1448
    %v1769 = vpack.c.b16 %v1481, %v1449
    %v1770 = vpack.c.b16 %v1482, %v1450
    %v1771 = vpack.c.b16 %v1483, %v1451
    %v1772 = vpack.c.b16 %v1484, %v1452
    %v1773 = vpack.c.b16 %v1485, %v1453
    %v1774 = vpack.c.b16 %v1486, %v1454
    %v1775 = vpack.c.b16 %v1487, %v1455
    %v1776 = vpack.c.b16 %v1488, %v1456
    %v1777 = vpack.c.b16 %v1489, %v1457
    %v1778 = vpack.c.b16 %v1490, %v1458
    %v1779 = vpack.c.b16 %v1491, %v1459
    %v1780 = vpack.c.b16 %v1492, %v1460
    %v1781 = vpack.c.b16 %v1493, %v1461
    %v1782 = vpack.c.b16 %v1494, %v1462
    %v1783 = vpack.c.b16 %v1527, %v1495
    %v1784 = vpack.c.b16 %v1528, %v1496
    %v1785 = vpack.c.b16 %v1529, %v1497
    %v1786 = vpack.c.b16 %v1530, %v1498
    %v1787 = vpack.c.b16 %v1531, %v1499
    %v1788 = vpack.c.b16 %v1532, %v1500
    %v1789 = vpack.c.b16 %v1533, %v1501
    %v1790 = vpack.c.b16 %v1534, %v1502
    %v1791 = vpack.c.b16 %v1535, %v1503
    %v1792 = vpack.c.b16 %v1536, %v1504
    %v1793 = vpack.c.b16 %v1537, %v1505
    %v1794 = vpack.c.b16 %v1538, %v1506
    %v1795 = vpack.c.b16 %v1539, %v1507
    %v1796 = vpack.c.b16 %v1540, %v1508
    %v1797 = vpack.c.b16 %v1541, %v1509
    %v1798 = vpack.c.b16 %v1542, %v1510
    %v1799 = vpack.c.b16 %v1543, %v1511
    %v1800 = vpack.c.b16 %v1544, %v1512
    %v1801 = vpack.c.b16 %v1545, %v1513
    %v1802 = vpack.c.b16 %v1546, %v1514
    %v1803 = vpack.c.b16 %v1547, %v1515
    %v1804 = vpack.c.b16 %v1548, %v1516
    %v1805 = vpack.c.b16 %v1549, %v1517
    %v1806 = vpack.c.b16 %v1550, %v1518
    %v1807 = vpack.c.b16 %v1551, %v1519
    %v1808 = vpack.c.b16 %v1552, %v1520
    %v1809 = vpack.c.b16 %v1553, %v1521
    %v1810 = vpack.c.b16 %v1554, %v1522
    %v1811 = vpack.c.b16 %v1555, %v1523
    %v1812 = vpack.c.b16 %v1556, %v1524
    %v1813 = vpack.c.b16 %v1557, %v1525
    %v1814 = vpack.c.b16 %v1558, %v1526
    %2071 = vmatprep.subr.bf16.mxu0 %v1560
    %2072 = vmatpush1.bf16.msra.mxu0 %v1559
    %2073 = vmatprep.subr.bf16.mxu0 %v1592
    %2074 = vmatpush1.bf16.msra.mxu0 %v1591
    %2075 = vmatprep.subr.bf16.mxu0 %v1624
    %2076 = vmatpush1.bf16.msra.mxu0 %v1623
    %2077 = vmatprep.subr.bf16.mxu0 %v1656
    %2078 = vmatpush1.bf16.msra.mxu0 %v1655
    %2079 = vmatprep.subr.bf16.mxu0 %v1688
    %2080 = vmatpush1.bf16.msra.mxu0 %v1687
    %2081 = vmatprep.subr.bf16.mxu0 %v1720
    %2082 = vmatpush1.bf16.msra.mxu0 %v1719
    %2083 = vmatprep.subr.bf16.mxu0 %v1752
    %2084 = vmatpush1.bf16.msra.mxu0 %v1751
    %2085 = vmatprep.subr.bf16.mxu0 %v1784
    %2086 = vmatpush1.bf16.msra.mxu0 %v1783
    %2087 = vmatprep.subr.bf16.mxu0 0
    %2088 = vmatpush1.bf16.msra.mxu0 0
    %2089 = vmatprep.subr.bf16.mxu0 0
    %2090 = vmatpush1.bf16.msra.mxu0 0
    %2091 = vmatprep.subr.bf16.mxu0 0
    %2092 = vmatpush1.bf16.msra.mxu0 0
    %2093 = vmatprep.subr.bf16.mxu0 0
    %2094 = vmatpush1.bf16.msra.mxu0 0
    %2095 = vmatprep.subr.bf16.mxu0 0
    %2096 = vmatpush1.bf16.msra.mxu0 0
    %2097 = vmatprep.subr.bf16.mxu0 0
    %2098 = vmatpush1.bf16.msra.mxu0 0
    %2099 = vmatprep.subr.bf16.mxu0 0
    %2100 = vmatpush1.bf16.msra.mxu0 0
    %2101 = vmatprep.subr.bf16.mxu0 0
    %2102 = vmatpush1.bf16.msra.mxu0 0
    %2103 = vmatprep.mubr.bf16.mxu0 0
    %2104 = vmatmul.mubr.bf16.gmra.mrb[0].mxu0 %v366
    %v2105 = vpop.f32.mrb[0].mxu0
    %v2106 = vadd.f32 %v634, %v2105
    %v2107 = vpop.f32.mrb[0].mxu0
    %v2108 = vadd.f32 %v638, %v2107
    %v2109 = vpop.f32.mrb[0].mxu0
    %v2110 = vpop.f32.mrb[0].mxu0
    %2111 = vdwg.mxu0
    %2112 = vmatprep.subr.bf16.mxu0 %v1562
    %2113 = vmatpush1.bf16.msra.mxu0 %v1561
    %2114 = vmatprep.subr.bf16.mxu0 %v1594
    %2115 = vmatpush1.bf16.msra.mxu0 %v1593
    %2116 = vmatprep.subr.bf16.mxu0 %v1626
    %2117 = vmatpush1.bf16.msra.mxu0 %v1625
    %2118 = vmatprep.subr.bf16.mxu0 %v1658
    %2119 = vmatpush1.bf16.msra.mxu0 %v1657
    %2120 = vmatprep.subr.bf16.mxu0 %v1690
    %2121 = vmatpush1.bf16.msra.mxu0 %v1689
    %2122 = vmatprep.subr.bf16.mxu0 %v1722
    %2123 = vmatpush1.bf16.msra.mxu0 %v1721
    %2124 = vmatprep.subr.bf16.mxu0 %v1754
    %2125 = vmatpush1.bf16.msra.mxu0 %v1753
    %2126 = vmatprep.subr.bf16.mxu0 %v1786
    %2127 = vmatpush1.bf16.msra.mxu0 %v1785
    %2128 = vmatprep.subr.bf16.mxu0 0
    %2129 = vmatpush1.bf16.msra.mxu0 0
    %2130 = vmatprep.subr.bf16.mxu0 0
    %2131 = vmatpush1.bf16.msra.mxu0 0
    %2132 = vmatprep.subr.bf16.mxu0 0
    %2133 = vmatpush1.bf16.msra.mxu0 0
    %2134 = vmatprep.subr.bf16.mxu0 0
    %2135 = vmatpush1.bf16.msra.mxu0 0
    %2136 = vmatprep.subr.bf16.mxu0 0
    %2137 = vmatpush1.bf16.msra.mxu0 0
    %2138 = vmatprep.subr.bf16.mxu0 0
    %2139 = vmatpush1.bf16.msra.mxu0 0
    %2140 = vmatprep.subr.bf16.mxu0 0
    %2141 = vmatpush1.bf16.msra.mxu0 0
    %2142 = vmatprep.subr.bf16.mxu0 0
    %2143 = vmatpush1.bf16.msra.mxu0 0
    %2144 = vmatprep.mubr.bf16.mxu0 0
    %2145 = vmatmul.mubr.bf16.gmra.mrb[0].mxu0 %v366
    %v2146 = vpop.f32.mrb[0].mxu0
    %v2147 = vadd.f32 %v642, %v2146
    %v2148 = vpop.f32.mrb[0].mxu0
    %v2149 = vadd.f32 %v646, %v2148
    %v2150 = vpop.f32.mrb[0].mxu0
    %v2151 = vpop.f32.mrb[0].mxu0
    %2152 = vdwg.mxu0
    %2153 = vmatprep.subr.bf16.mxu0 %v1564
    %2154 = vmatpush1.bf16.msra.mxu0 %v1563
    %2155 = vmatprep.subr.bf16.mxu0 %v1596
    %2156 = vmatpush1.bf16.msra.mxu0 %v1595
    %2157 = vmatprep.subr.bf16.mxu0 %v1628
    %2158 = vmatpush1.bf16.msra.mxu0 %v1627
    %2159 = vmatprep.subr.bf16.mxu0 %v1660
    %2160 = vmatpush1.bf16.msra.mxu0 %v1659
    %2161 = vmatprep.subr.bf16.mxu0 %v1692
    %2162 = vmatpush1.bf16.msra.mxu0 %v1691
    %2163 = vmatprep.subr.bf16.mxu0 %v1724
    %2164 = vmatpush1.bf16.msra.mxu0 %v1723
    %2165 = vmatprep.subr.bf16.mxu0 %v1756
    %2166 = vmatpush1.bf16.msra.mxu0 %v1755
    %2167 = vmatprep.subr.bf16.mxu0 %v1788
    %2168 = vmatpush1.bf16.msra.mxu0 %v1787
    %2169 = vmatprep.subr.bf16.mxu0 0
    %2170 = vmatpush1.bf16.msra.mxu0 0
    %2171 = vmatprep.subr.bf16.mxu0 0
    %2172 = vmatpush1.bf16.msra.mxu0 0
    %2173 = vmatprep.subr.bf16.mxu0 0
    %2174 = vmatpush1.bf16.msra.mxu0 0
    %2175 = vmatprep.subr.bf16.mxu0 0
    %2176 = vmatpush1.bf16.msra.mxu0 0
    %2177 = vmatprep.subr.bf16.mxu0 0
    %2178 = vmatpush1.bf16.msra.mxu0 0
    %2179 = vmatprep.subr.bf16.mxu0 0
    %2180 = vmatpush1.bf16.msra.mxu0 0
    %2181 = vmatprep.subr.bf16.mxu0 0
    %2182 = vmatpush1.bf16.msra.mxu0 0
    %2183 = vmatprep.subr.bf16.mxu0 0
    %2184 = vmatpush1.bf16.msra.mxu0 0
    %2185 = vmatprep.mubr.bf16.mxu0 0
    %2186 = vmatmul.mubr.bf16.gmra.mrb[0].mxu0 %v366
    %v2187 = vpop.f32.mrb[0].mxu0
    %v2188 = vadd.f32 %v650, %v2187
    %v2189 = vpop.f32.mrb[0].mxu0
    %v2190 = vadd.f32 %v654, %v2189
    %v2191 = vpop.f32.mrb[0].mxu0
    %v2192 = vpop.f32.mrb[0].mxu0
    %2193 = vdwg.mxu0
    %2194 = vmatprep.subr.bf16.mxu0 %v1566
    %2195 = vmatpush1.bf16.msra.mxu0 %v1565
    %2196 = vmatprep.subr.bf16.mxu0 %v1598
    %2197 = vmatpush1.bf16.msra.mxu0 %v1597
    %2198 = vmatprep.subr.bf16.mxu0 %v1630
    %2199 = vmatpush1.bf16.msra.mxu0 %v1629
    %2200 = vmatprep.subr.bf16.mxu0 %v1662
    %2201 = vmatpush1.bf16.msra.mxu0 %v1661
    %2202 = vmatprep.subr.bf16.mxu0 %v1694
    %2203 = vmatpush1.bf16.msra.mxu0 %v1693
    %2204 = vmatprep.subr.bf16.mxu0 %v1726
    %2205 = vmatpush1.bf16.msra.mxu0 %v1725
    %2206 = vmatprep.subr.bf16.mxu0 %v1758
    %2207 = vmatpush1.bf16.msra.mxu0 %v1757
    %2208 = vmatprep.subr.bf16.mxu0 %v1790
    %2209 = vmatpush1.bf16.msra.mxu0 %v1789
    %2210 = vmatprep.subr.bf16.mxu0 0
    %2211 = vmatpush1.bf16.msra.mxu0 0
    %2212 = vmatprep.subr.bf16.mxu0 0
    %2213 = vmatpush1.bf16.msra.mxu0 0
    %2214 = vmatprep.subr.bf16.mxu0 0
    %2215 = vmatpush1.bf16.msra.mxu0 0
    %2216 = vmatprep.subr.bf16.mxu0 0
    %2217 = vmatpush1.bf16.msra.mxu0 0
    %2218 = vmatprep.subr.bf16.mxu0 0
    %2219 = vmatpush1.bf16.msra.mxu0 0
    %2220 = vmatprep.subr.bf16.mxu0 0
    %2221 = vmatpush1.bf16.msra.mxu0 0
    %2222 = vmatprep.subr.bf16.mxu0 0
    %2223 = vmatpush1.bf16.msra.mxu0 0
    %2224 = vmatprep.subr.bf16.mxu0 0
    %2225 = vmatpush1.bf16.msra.mxu0 0
    %2226 = vmatprep.mubr.bf16.mxu0 0
    %2227 = vmatmul.mubr.bf16.gmra.mrb[0].mxu0 %v366
    %v2228 = vpop.f32.mrb[0].mxu0
    %v2229 = vadd.f32 %v658, %v2228
    %v2230 = vpop.f32.mrb[0].mxu0
    %v2231 = vadd.f32 %v662, %v2230
    %v2232 = vpop.f32.mrb[0].mxu0
    %v2233 = vpop.f32.mrb[0].mxu0
    %2234 = vdwg.mxu0
    %2235 = vmatprep.subr.bf16.mxu0 %v1568
    %2236 = vmatpush1.bf16.msra.mxu0 %v1567
    %2237 = vmatprep.subr.bf16.mxu0 %v1600
    %2238 = vmatpush1.bf16.msra.mxu0 %v1599
    %2239 = vmatprep.subr.bf16.mxu0 %v1632
    %2240 = vmatpush1.bf16.msra.mxu0 %v1631
    %2241 = vmatprep.subr.bf16.mxu0 %v1664
    %2242 = vmatpush1.bf16.msra.mxu0 %v1663
    %2243 = vmatprep.subr.bf16.mxu0 %v1696
    %2244 = vmatpush1.bf16.msra.mxu0 %v1695
    %2245 = vmatprep.subr.bf16.mxu0 %v1728
    %2246 = vmatpush1.bf16.msra.mxu0 %v1727
    %2247 = vmatprep.subr.bf16.mxu0 %v1760
    %2248 = vmatpush1.bf16.msra.mxu0 %v1759
    %2249 = vmatprep.subr.bf16.mxu0 %v1792
    %2250 = vmatpush1.bf16.msra.mxu0 %v1791
    %2251 = vmatprep.subr.bf16.mxu0 0
    %2252 = vmatpush1.bf16.msra.mxu0 0
    %2253 = vmatprep.subr.bf16.mxu0 0
    %2254 = vmatpush1.bf16.msra.mxu0 0
    %2255 = vmatprep.subr.bf16.mxu0 0
    %2256 = vmatpush1.bf16.msra.mxu0 0
    %2257 = vmatprep.subr.bf16.mxu0 0
    %2258 = vmatpush1.bf16.msra.mxu0 0
    %2259 = vmatprep.subr.bf16.mxu0 0
    %2260 = vmatpush1.bf16.msra.mxu0 0
    %2261 = vmatprep.subr.bf16.mxu0 0
    %2262 = vmatpush1.bf16.msra.mxu0 0
    %2263 = vmatprep.subr.bf16.mxu0 0
    %2264 = vmatpush1.bf16.msra.mxu0 0
    %2265 = vmatprep.subr.bf16.mxu0 0
    %2266 = vmatpush1.bf16.msra.mxu0 0
    %2267 = vmatprep.mubr.bf16.mxu0 0
    %2268 = vmatmul.mubr.bf16.gmra.mrb[0].mxu0 %v366
    %v2269 = vpop.f32.mrb[0].mxu0
    %v2270 = vadd.f32 %v666, %v2269
    %v2271 = vpop.f32.mrb[0].mxu0
    %v2272 = vadd.f32 %v670, %v2271
    %v2273 = vpop.f32.mrb[0].mxu0
    %v2274 = vpop.f32.mrb[0].mxu0
    %2275 = vdwg.mxu0
    %2276 = vmatprep.subr.bf16.mxu0 %v1570
    %2277 = vmatpush1.bf16.msra.mxu0 %v1569
    %2278 = vmatprep.subr.bf16.mxu0 %v1602
    %2279 = vmatpush1.bf16.msra.mxu0 %v1601
    %2280 = vmatprep.subr.bf16.mxu0 %v1634
    %2281 = vmatpush1.bf16.msra.mxu0 %v1633
    %2282 = vmatprep.subr.bf16.mxu0 %v1666
    %2283 = vmatpush1.bf16.msra.mxu0 %v1665
    %2284 = vmatprep.subr.bf16.mxu0 %v1698
    %2285 = vmatpush1.bf16.msra.mxu0 %v1697
    %2286 = vmatprep.subr.bf16.mxu0 %v1730
    %2287 = vmatpush1.bf16.msra.mxu0 %v1729
    %2288 = vmatprep.subr.bf16.mxu0 %v1762
    %2289 = vmatpush1.bf16.msra.mxu0 %v1761
    %2290 = vmatprep.subr.bf16.mxu0 %v1794
    %2291 = vmatpush1.bf16.msra.mxu0 %v1793
    %2292 = vmatprep.subr.bf16.mxu0 0
    %2293 = vmatpush1.bf16.msra.mxu0 0
    %2294 = vmatprep.subr.bf16.mxu0 0
    %2295 = vmatpush1.bf16.msra.mxu0 0
    %2296 = vmatprep.subr.bf16.mxu0 0
    %2297 = vmatpush1.bf16.msra.mxu0 0
    %2298 = vmatprep.subr.bf16.mxu0 0
    %2299 = vmatpush1.bf16.msra.mxu0 0
    %2300 = vmatprep.subr.bf16.mxu0 0
    %2301 = vmatpush1.bf16.msra.mxu0 0
    %2302 = vmatprep.subr.bf16.mxu0 0
    %2303 = vmatpush1.bf16.msra.mxu0 0
    %2304 = vmatprep.subr.bf16.mxu0 0
    %2305 = vmatpush1.bf16.msra.mxu0 0
    %2306 = vmatprep.subr.bf16.mxu0 0
    %2307 = vmatpush1.bf16.msra.mxu0 0
    %2308 = vmatprep.mubr.bf16.mxu0 0
    %2309 = vmatmul.mubr.bf16.gmra.mrb[0].mxu0 %v366
    %v2310 = vpop.f32.mrb[0].mxu0
    %v2311 = vadd.f32 %v674, %v2310
    %v2312 = vpop.f32.mrb[0].mxu0
    %v2313 = vadd.f32 %v678, %v2312
    %v2314 = vpop.f32.mrb[0].mxu0
    %v2315 = vpop.f32.mrb[0].mxu0
    %2316 = vdwg.mxu0
    %2317 = vmatprep.subr.bf16.mxu0 %v1572
    %2318 = vmatpush1.bf16.msra.mxu0 %v1571
    %2319 = vmatprep.subr.bf16.mxu0 %v1604
    %2320 = vmatpush1.bf16.msra.mxu0 %v1603
    %2321 = vmatprep.subr.bf16.mxu0 %v1636
    %2322 = vmatpush1.bf16.msra.mxu0 %v1635
    %2323 = vmatprep.subr.bf16.mxu0 %v1668
    %2324 = vmatpush1.bf16.msra.mxu0 %v1667
    %2325 = vmatprep.subr.bf16.mxu0 %v1700
    %2326 = vmatpush1.bf16.msra.mxu0 %v1699
    %2327 = vmatprep.subr.bf16.mxu0 %v1732
    %2328 = vmatpush1.bf16.msra.mxu0 %v1731
    %2329 = vmatprep.subr.bf16.mxu0 %v1764
    %2330 = vmatpush1.bf16.msra.mxu0 %v1763
    %2331 = vmatprep.subr.bf16.mxu0 %v1796
    %2332 = vmatpush1.bf16.msra.mxu0 %v1795
    %2333 = vmatprep.subr.bf16.mxu0 0
    %2334 = vmatpush1.bf16.msra.mxu0 0
    %2335 = vmatprep.subr.bf16.mxu0 0
    %2336 = vmatpush1.bf16.msra.mxu0 0
    %2337 = vmatprep.subr.bf16.mxu0 0
    %2338 = vmatpush1.bf16.msra.mxu0 0
    %2339 = vmatprep.subr.bf16.mxu0 0
    %2340 = vmatpush1.bf16.msra.mxu0 0
    %2341 = vmatprep.subr.bf16.mxu0 0
    %2342 = vmatpush1.bf16.msra.mxu0 0
    %2343 = vmatprep.subr.bf16.mxu0 0
    %2344 = vmatpush1.bf16.msra.mxu0 0
    %2345 = vmatprep.subr.bf16.mxu0 0
    %2346 = vmatpush1.bf16.msra.mxu0 0
    %2347 = vmatprep.subr.bf16.mxu0 0
    %2348 = vmatpush1.bf16.msra.mxu0 0
    %2349 = vmatprep.mubr.bf16.mxu0 0
    %2350 = vmatmul.mubr.bf16.gmra.mrb[0].mxu0 %v366
    %v2351 = vpop.f32.mrb[0].mxu0
    %v2352 = vadd.f32 %v682, %v2351
    %v2353 = vpop.f32.mrb[0].mxu0
    %v2354 = vadd.f32 %v686, %v2353
    %v2355 = vpop.f32.mrb[0].mxu0
    %v2356 = vpop.f32.mrb[0].mxu0
    %2357 = vdwg.mxu0
    %2358 = vmatprep.subr.bf16.mxu0 %v1574
    %2359 = vmatpush1.bf16.msra.mxu0 %v1573
    %2360 = vmatprep.subr.bf16.mxu0 %v1606
    %2361 = vmatpush1.bf16.msra.mxu0 %v1605
    %2362 = vmatprep.subr.bf16.mxu0 %v1638
    %2363 = vmatpush1.bf16.msra.mxu0 %v1637
    %2364 = vmatprep.subr.bf16.mxu0 %v1670
    %2365 = vmatpush1.bf16.msra.mxu0 %v1669
    %2366 = vmatprep.subr.bf16.mxu0 %v1702
    %2367 = vmatpush1.bf16.msra.mxu0 %v1701
    %2368 = vmatprep.subr.bf16.mxu0 %v1734
    %2369 = vmatpush1.bf16.msra.mxu0 %v1733
    %2370 = vmatprep.subr.bf16.mxu0 %v1766
    %2371 = vmatpush1.bf16.msra.mxu0 %v1765
    %2372 = vmatprep.subr.bf16.mxu0 %v1798
    %2373 = vmatpush1.bf16.msra.mxu0 %v1797
    %2374 = vmatprep.subr.bf16.mxu0 0
    %2375 = vmatpush1.bf16.msra.mxu0 0
    %2376 = vmatprep.subr.bf16.mxu0 0
    %2377 = vmatpush1.bf16.msra.mxu0 0
    %2378 = vmatprep.subr.bf16.mxu0 0
    %2379 = vmatpush1.bf16.msra.mxu0 0
    %2380 = vmatprep.subr.bf16.mxu0 0
    %2381 = vmatpush1.bf16.msra.mxu0 0
    %2382 = vmatprep.subr.bf16.mxu0 0
    %2383 = vmatpush1.bf16.msra.mxu0 0
    %2384 = vmatprep.subr.bf16.mxu0 0
    %2385 = vmatpush1.bf16.msra.mxu0 0
    %2386 = vmatprep.subr.bf16.mxu0 0
    %2387 = vmatpush1.bf16.msra.mxu0 0
    %2388 = vmatprep.subr.bf16.mxu0 0
    %2389 = vmatpush1.bf16.msra.mxu0 0
    %2390 = vmatprep.mubr.bf16.mxu0 0
    %2391 = vmatmul.mubr.bf16.gmra.mrb[0].mxu0 %v366
    %v2392 = vpop.f32.mrb[0].mxu0
    %v2393 = vadd.f32 %v690, %v2392
    %v2394 = vpop.f32.mrb[0].mxu0
    %v2395 = vadd.f32 %v694, %v2394
    %v2396 = vpop.f32.mrb[0].mxu0
    %v2397 = vpop.f32.mrb[0].mxu0
    %2398 = vdwg.mxu0
    %2399 = vmatprep.subr.bf16.mxu0 %v1576
    %2400 = vmatpush1.bf16.msra.mxu0 %v1575
    %2401 = vmatprep.subr.bf16.mxu0 %v1608
    %2402 = vmatpush1.bf16.msra.mxu0 %v1607
    %2403 = vmatprep.subr.bf16.mxu0 %v1640
    %2404 = vmatpush1.bf16.msra.mxu0 %v1639
    %2405 = vmatprep.subr.bf16.mxu0 %v1672
    %2406 = vmatpush1.bf16.msra.mxu0 %v1671
    %2407 = vmatprep.subr.bf16.mxu0 %v1704
    %2408 = vmatpush1.bf16.msra.mxu0 %v1703
    %2409 = vmatprep.subr.bf16.mxu0 %v1736
    %2410 = vmatpush1.bf16.msra.mxu0 %v1735
    %2411 = vmatprep.subr.bf16.mxu0 %v1768
    %2412 = vmatpush1.bf16.msra.mxu0 %v1767
    %2413 = vmatprep.subr.bf16.mxu0 %v1800
    %2414 = vmatpush1.bf16.msra.mxu0 %v1799
    %2415 = vmatprep.subr.bf16.mxu0 0
    %2416 = vmatpush1.bf16.msra.mxu0 0
    %2417 = vmatprep.subr.bf16.mxu0 0
    %2418 = vmatpush1.bf16.msra.mxu0 0
    %2419 = vmatprep.subr.bf16.mxu0 0
    %2420 = vmatpush1.bf16.msra.mxu0 0
    %2421 = vmatprep.subr.bf16.mxu0 0
    %2422 = vmatpush1.bf16.msra.mxu0 0
    %2423 = vmatprep.subr.bf16.mxu0 0
    %2424 = vmatpush1.bf16.msra.mxu0 0
    %2425 = vmatprep.subr.bf16.mxu0 0
    %2426 = vmatpush1.bf16.msra.mxu0 0
    %2427 = vmatprep.subr.bf16.mxu0 0
    %2428 = vmatpush1.bf16.msra.mxu0 0
    %2429 = vmatprep.subr.bf16.mxu0 0
    %2430 = vmatpush1.bf16.msra.mxu0 0
    %2431 = vmatprep.mubr.bf16.mxu0 0
    %2432 = vmatmul.mubr.bf16.gmra.mrb[0].mxu0 %v366
    %v2433 = vpop.f32.mrb[0].mxu0
    %v2434 = vadd.f32 %v698, %v2433
    %v2435 = vpop.f32.mrb[0].mxu0
    %v2436 = vadd.f32 %v702, %v2435
    %v2437 = vpop.f32.mrb[0].mxu0
    %v2438 = vpop.f32.mrb[0].mxu0
    %2439 = vdwg.mxu0
    %2440 = vmatprep.subr.bf16.mxu0 %v1578
    %2441 = vmatpush1.bf16.msra.mxu0 %v1577
    %2442 = vmatprep.subr.bf16.mxu0 %v1610
    %2443 = vmatpush1.bf16.msra.mxu0 %v1609
    %2444 = vmatprep.subr.bf16.mxu0 %v1642
    %2445 = vmatpush1.bf16.msra.mxu0 %v1641
    %2446 = vmatprep.subr.bf16.mxu0 %v1674
    %2447 = vmatpush1.bf16.msra.mxu0 %v1673
    %2448 = vmatprep.subr.bf16.mxu0 %v1706
    %2449 = vmatpush1.bf16.msra.mxu0 %v1705
    %2450 = vmatprep.subr.bf16.mxu0 %v1738
    %2451 = vmatpush1.bf16.msra.mxu0 %v1737
    %2452 = vmatprep.subr.bf16.mxu0 %v1770
    %2453 = vmatpush1.bf16.msra.mxu0 %v1769
    %2454 = vmatprep.subr.bf16.mxu0 %v1802
    %2455 = vmatpush1.bf16.msra.mxu0 %v1801
    %2456 = vmatprep.subr.bf16.mxu0 0
    %2457 = vmatpush1.bf16.msra.mxu0 0
    %2458 = vmatprep.subr.bf16.mxu0 0
    %2459 = vmatpush1.bf16.msra.mxu0 0
    %2460 = vmatprep.subr.bf16.mxu0 0
    %2461 = vmatpush1.bf16.msra.mxu0 0
    %2462 = vmatprep.subr.bf16.mxu0 0
    %2463 = vmatpush1.bf16.msra.mxu0 0
    %2464 = vmatprep.subr.bf16.mxu0 0
    %2465 = vmatpush1.bf16.msra.mxu0 0
    %2466 = vmatprep.subr.bf16.mxu0 0
    %2467 = vmatpush1.bf16.msra.mxu0 0
    %2468 = vmatprep.subr.bf16.mxu0 0
    %2469 = vmatpush1.bf16.msra.mxu0 0
    %2470 = vmatprep.subr.bf16.mxu0 0
    %2471 = vmatpush1.bf16.msra.mxu0 0
    %2472 = vmatprep.mubr.bf16.mxu0 0
    %2473 = vmatmul.mubr.bf16.gmra.mrb[0].mxu0 %v366
    %v2474 = vpop.f32.mrb[0].mxu0
    %v2475 = vadd.f32 %v706, %v2474
    %v2476 = vpop.f32.mrb[0].mxu0
    %v2477 = vadd.f32 %v710, %v2476
    %v2478 = vpop.f32.mrb[0].mxu0
    %v2479 = vpop.f32.mrb[0].mxu0
    %2480 = vdwg.mxu0
    %2481 = vmatprep.subr.bf16.mxu0 %v1580
    %2482 = vmatpush1.bf16.msra.mxu0 %v1579
    %2483 = vmatprep.subr.bf16.mxu0 %v1612
    %2484 = vmatpush1.bf16.msra.mxu0 %v1611
    %2485 = vmatprep.subr.bf16.mxu0 %v1644
    %2486 = vmatpush1.bf16.msra.mxu0 %v1643
    %2487 = vmatprep.subr.bf16.mxu0 %v1676
    %2488 = vmatpush1.bf16.msra.mxu0 %v1675
    %2489 = vmatprep.subr.bf16.mxu0 %v1708
    %2490 = vmatpush1.bf16.msra.mxu0 %v1707
    %2491 = vmatprep.subr.bf16.mxu0 %v1740
    %2492 = vmatpush1.bf16.msra.mxu0 %v1739
    %2493 = vmatprep.subr.bf16.mxu0 %v1772
    %2494 = vmatpush1.bf16.msra.mxu0 %v1771
    %2495 = vmatprep.subr.bf16.mxu0 %v1804
    %2496 = vmatpush1.bf16.msra.mxu0 %v1803
    %2497 = vmatprep.subr.bf16.mxu0 0
    %2498 = vmatpush1.bf16.msra.mxu0 0
    %2499 = vmatprep.subr.bf16.mxu0 0
    %2500 = vmatpush1.bf16.msra.mxu0 0
    %2501 = vmatprep.subr.bf16.mxu0 0
    %2502 = vmatpush1.bf16.msra.mxu0 0
    %2503 = vmatprep.subr.bf16.mxu0 0
    %2504 = vmatpush1.bf16.msra.mxu0 0
    %2505 = vmatprep.subr.bf16.mxu0 0
    %2506 = vmatpush1.bf16.msra.mxu0 0
    %2507 = vmatprep.subr.bf16.mxu0 0
    %2508 = vmatpush1.bf16.msra.mxu0 0
    %2509 = vmatprep.subr.bf16.mxu0 0
    %2510 = vmatpush1.bf16.msra.mxu0 0
    %2511 = vmatprep.subr.bf16.mxu0 0
    %2512 = vmatpush1.bf16.msra.mxu0 0
    %2513 = vmatprep.mubr.bf16.mxu0 0
    %2514 = vmatmul.mubr.bf16.gmra.mrb[0].mxu0 %v366
    %v2515 = vpop.f32.mrb[0].mxu0
    %v2516 = vadd.f32 %v714, %v2515
    %v2517 = vpop.f32.mrb[0].mxu0
    %v2518 = vadd.f32 %v718, %v2517
    %v2519 = vpop.f32.mrb[0].mxu0
    %v2520 = vpop.f32.mrb[0].mxu0
    %2521 = vdwg.mxu0
    %2522 = vmatprep.subr.bf16.mxu0 %v1582
    %2523 = vmatpush1.bf16.msra.mxu0 %v1581
    %2524 = vmatprep.subr.bf16.mxu0 %v1614
    %2525 = vmatpush1.bf16.msra.mxu0 %v1613
    %2526 = vmatprep.subr.bf16.mxu0 %v1646
    %2527 = vmatpush1.bf16.msra.mxu0 %v1645
    %2528 = vmatprep.subr.bf16.mxu0 %v1678
    %2529 = vmatpush1.bf16.msra.mxu0 %v1677
    %2530 = vmatprep.subr.bf16.mxu0 %v1710
    %2531 = vmatpush1.bf16.msra.mxu0 %v1709
    %2532 = vmatprep.subr.bf16.mxu0 %v1742
    %2533 = vmatpush1.bf16.msra.mxu0 %v1741
    %2534 = vmatprep.subr.bf16.mxu0 %v1774
    %2535 = vmatpush1.bf16.msra.mxu0 %v1773
    %2536 = vmatprep.subr.bf16.mxu0 %v1806
    %2537 = vmatpush1.bf16.msra.mxu0 %v1805
    %2538 = vmatprep.subr.bf16.mxu0 0
    %2539 = vmatpush1.bf16.msra.mxu0 0
    %2540 = vmatprep.subr.bf16.mxu0 0
    %2541 = vmatpush1.bf16.msra.mxu0 0
    %2542 = vmatprep.subr.bf16.mxu0 0
    %2543 = vmatpush1.bf16.msra.mxu0 0
    %2544 = vmatprep.subr.bf16.mxu0 0
    %2545 = vmatpush1.bf16.msra.mxu0 0
    %2546 = vmatprep.subr.bf16.mxu0 0
    %2547 = vmatpush1.bf16.msra.mxu0 0
    %2548 = vmatprep.subr.bf16.mxu0 0
    %2549 = vmatpush1.bf16.msra.mxu0 0
    %2550 = vmatprep.subr.bf16.mxu0 0
    %2551 = vmatpush1.bf16.msra.mxu0 0
    %2552 = vmatprep.subr.bf16.mxu0 0
    %2553 = vmatpush1.bf16.msra.mxu0 0
    %2554 = vmatprep.mubr.bf16.mxu0 0
    %2555 = vmatmul.mubr.bf16.gmra.mrb[0].mxu0 %v366
    %v2556 = vpop.f32.mrb[0].mxu0
    %v2557 = vadd.f32 %v722, %v2556
    %v2558 = vpop.f32.mrb[0].mxu0
    %v2559 = vadd.f32 %v726, %v2558
    %v2560 = vpop.f32.mrb[0].mxu0
    %v2561 = vpop.f32.mrb[0].mxu0
    %2562 = vdwg.mxu0
    %2563 = vmatprep.subr.bf16.mxu0 %v1584
    %2564 = vmatpush1.bf16.msra.mxu0 %v1583
    %2565 = vmatprep.subr.bf16.mxu0 %v1616
    %2566 = vmatpush1.bf16.msra.mxu0 %v1615
    %2567 = vmatprep.subr.bf16.mxu0 %v1648
    %2568 = vmatpush1.bf16.msra.mxu0 %v1647
    %2569 = vmatprep.subr.bf16.mxu0 %v1680
    %2570 = vmatpush1.bf16.msra.mxu0 %v1679
    %2571 = vmatprep.subr.bf16.mxu0 %v1712
    %2572 = vmatpush1.bf16.msra.mxu0 %v1711
    %2573 = vmatprep.subr.bf16.mxu0 %v1744
    %2574 = vmatpush1.bf16.msra.mxu0 %v1743
    %2575 = vmatprep.subr.bf16.mxu0 %v1776
    %2576 = vmatpush1.bf16.msra.mxu0 %v1775
    %2577 = vmatprep.subr.bf16.mxu0 %v1808
    %2578 = vmatpush1.bf16.msra.mxu0 %v1807
    %2579 = vmatprep.subr.bf16.mxu0 0
    %2580 = vmatpush1.bf16.msra.mxu0 0
    %2581 = vmatprep.subr.bf16.mxu0 0
    %2582 = vmatpush1.bf16.msra.mxu0 0
    %2583 = vmatprep.subr.bf16.mxu0 0
    %2584 = vmatpush1.bf16.msra.mxu0 0
    %2585 = vmatprep.subr.bf16.mxu0 0
    %2586 = vmatpush1.bf16.msra.mxu0 0
    %2587 = vmatprep.subr.bf16.mxu0 0
    %2588 = vmatpush1.bf16.msra.mxu0 0
    %2589 = vmatprep.subr.bf16.mxu0 0
    %2590 = vmatpush1.bf16.msra.mxu0 0
    %2591 = vmatprep.subr.bf16.mxu0 0
    %2592 = vmatpush1.bf16.msra.mxu0 0
    %2593 = vmatprep.subr.bf16.mxu0 0
    %2594 = vmatpush1.bf16.msra.mxu0 0
    %2595 = vmatprep.mubr.bf16.mxu0 0
    %2596 = vmatmul.mubr.bf16.gmra.mrb[0].mxu0 %v366
    %v2597 = vpop.f32.mrb[0].mxu0
    %v2598 = vadd.f32 %v730, %v2597
    %v2599 = vpop.f32.mrb[0].mxu0
    %v2600 = vadd.f32 %v734, %v2599
    %v2601 = vpop.f32.mrb[0].mxu0
    %v2602 = vpop.f32.mrb[0].mxu0
    %2603 = vdwg.mxu0
    %2604 = vmatprep.subr.bf16.mxu0 %v1586
    %2605 = vmatpush1.bf16.msra.mxu0 %v1585
    %2606 = vmatprep.subr.bf16.mxu0 %v1618
    %2607 = vmatpush1.bf16.msra.mxu0 %v1617
    %2608 = vmatprep.subr.bf16.mxu0 %v1650
    %2609 = vmatpush1.bf16.msra.mxu0 %v1649
    %2610 = vmatprep.subr.bf16.mxu0 %v1682
    %2611 = vmatpush1.bf16.msra.mxu0 %v1681
    %2612 = vmatprep.subr.bf16.mxu0 %v1714
    %2613 = vmatpush1.bf16.msra.mxu0 %v1713
    %2614 = vmatprep.subr.bf16.mxu0 %v1746
    %2615 = vmatpush1.bf16.msra.mxu0 %v1745
    %2616 = vmatprep.subr.bf16.mxu0 %v1778
    %2617 = vmatpush1.bf16.msra.mxu0 %v1777
    %2618 = vmatprep.subr.bf16.mxu0 %v1810
    %2619 = vmatpush1.bf16.msra.mxu0 %v1809
    %2620 = vmatprep.subr.bf16.mxu0 0
    %2621 = vmatpush1.bf16.msra.mxu0 0
    %2622 = vmatprep.subr.bf16.mxu0 0
    %2623 = vmatpush1.bf16.msra.mxu0 0
    %2624 = vmatprep.subr.bf16.mxu0 0
    %2625 = vmatpush1.bf16.msra.mxu0 0
    %2626 = vmatprep.subr.bf16.mxu0 0
    %2627 = vmatpush1.bf16.msra.mxu0 0
    %2628 = vmatprep.subr.bf16.mxu0 0
    %2629 = vmatpush1.bf16.msra.mxu0 0
    %2630 = vmatprep.subr.bf16.mxu0 0
    %2631 = vmatpush1.bf16.msra.mxu0 0
    %2632 = vmatprep.subr.bf16.mxu0 0
    %2633 = vmatpush1.bf16.msra.mxu0 0
    %2634 = vmatprep.subr.bf16.mxu0 0
    %2635 = vmatpush1.bf16.msra.mxu0 0
    %2636 = vmatprep.mubr.bf16.mxu0 0
    %2637 = vmatmul.mubr.bf16.gmra.mrb[0].mxu0 %v366
    %v2638 = vpop.f32.mrb[0].mxu0
    %v2639 = vadd.f32 %v738, %v2638
    %v2640 = vpop.f32.mrb[0].mxu0
    %v2641 = vadd.f32 %v742, %v2640
    %v2642 = vpop.f32.mrb[0].mxu0
    %v2643 = vpop.f32.mrb[0].mxu0
    %2644 = vdwg.mxu0
    %2645 = vmatprep.subr.bf16.mxu0 %v1588
    %2646 = vmatpush1.bf16.msra.mxu0 %v1587
    %2647 = vmatprep.subr.bf16.mxu0 %v1620
    %2648 = vmatpush1.bf16.msra.mxu0 %v1619
    %2649 = vmatprep.subr.bf16.mxu0 %v1652
    %2650 = vmatpush1.bf16.msra.mxu0 %v1651
    %2651 = vmatprep.subr.bf16.mxu0 %v1684
    %2652 = vmatpush1.bf16.msra.mxu0 %v1683
    %2653 = vmatprep.subr.bf16.mxu0 %v1716
    %2654 = vmatpush1.bf16.msra.mxu0 %v1715
    %2655 = vmatprep.subr.bf16.mxu0 %v1748
    %2656 = vmatpush1.bf16.msra.mxu0 %v1747
    %2657 = vmatprep.subr.bf16.mxu0 %v1780
    %2658 = vmatpush1.bf16.msra.mxu0 %v1779
    %2659 = vmatprep.subr.bf16.mxu0 %v1812
    %2660 = vmatpush1.bf16.msra.mxu0 %v1811
    %2661 = vmatprep.subr.bf16.mxu0 0
    %2662 = vmatpush1.bf16.msra.mxu0 0
    %2663 = vmatprep.subr.bf16.mxu0 0
    %2664 = vmatpush1.bf16.msra.mxu0 0
    %2665 = vmatprep.subr.bf16.mxu0 0
    %2666 = vmatpush1.bf16.msra.mxu0 0
    %2667 = vmatprep.subr.bf16.mxu0 0
    %2668 = vmatpush1.bf16.msra.mxu0 0
    %2669 = vmatprep.subr.bf16.mxu0 0
    %2670 = vmatpush1.bf16.msra.mxu0 0
    %2671 = vmatprep.subr.bf16.mxu0 0
    %2672 = vmatpush1.bf16.msra.mxu0 0
    %2673 = vmatprep.subr.bf16.mxu0 0
    %2674 = vmatpush1.bf16.msra.mxu0 0
    %2675 = vmatprep.subr.bf16.mxu0 0
    %2676 = vmatpush1.bf16.msra.mxu0 0
    %2677 = vmatprep.mubr.bf16.mxu0 0
    %2678 = vmatmul.mubr.bf16.gmra.mrb[0].mxu0 %v366
    %v2679 = vpop.f32.mrb[0].mxu0
    %v2680 = vadd.f32 %v746, %v2679
    %v2681 = vpop.f32.mrb[0].mxu0
    %v2682 = vadd.f32 %v750, %v2681
    %v2683 = vpop.f32.mrb[0].mxu0
    %v2684 = vpop.f32.mrb[0].mxu0
    %2685 = vdwg.mxu0
    %2686 = vmatprep.subr.bf16.mxu0 %v1590
    %2687 = vmatpush1.bf16.msra.mxu0 %v1589
    %2688 = vmatprep.subr.bf16.mxu0 %v1622
    %2689 = vmatpush1.bf16.msra.mxu0 %v1621
    %2690 = vmatprep.subr.bf16.mxu0 %v1654
    %2691 = vmatpush1.bf16.msra.mxu0 %v1653
    %2692 = vmatprep.subr.bf16.mxu0 %v1686
    %2693 = vmatpush1.bf16.msra.mxu0 %v1685
    %2694 = vmatprep.subr.bf16.mxu0 %v1718
    %2695 = vmatpush1.bf16.msra.mxu0 %v1717
    %2696 = vmatprep.subr.bf16.mxu0 %v1750
    %2697 = vmatpush1.bf16.msra.mxu0 %v1749
    %2698 = vmatprep.subr.bf16.mxu0 %v1782
    %2699 = vmatpush1.bf16.msra.mxu0 %v1781
    %2700 = vmatprep.subr.bf16.mxu0 %v1814
    %2701 = vmatpush1.bf16.msra.mxu0 %v1813
    %2702 = vmatprep.subr.bf16.mxu0 0
    %2703 = vmatpush1.bf16.msra.mxu0 0
    %2704 = vmatprep.subr.bf16.mxu0 0
    %2705 = vmatpush1.bf16.msra.mxu0 0
    %2706 = vmatprep.subr.bf16.mxu0 0
    %2707 = vmatpush1.bf16.msra.mxu0 0
    %2708 = vmatprep.subr.bf16.mxu0 0
    %2709 = vmatpush1.bf16.msra.mxu0 0
    %2710 = vmatprep.subr.bf16.mxu0 0
    %2711 = vmatpush1.bf16.msra.mxu0 0
    %2712 = vmatprep.subr.bf16.mxu0 0
    %2713 = vmatpush1.bf16.msra.mxu0 0
    %2714 = vmatprep.subr.bf16.mxu0 0
    %2715 = vmatpush1.bf16.msra.mxu0 0
    %2716 = vmatprep.subr.bf16.mxu0 0
    %2717 = vmatpush1.bf16.msra.mxu0 0
    %2718 = vmatprep.mubr.bf16.mxu0 0
    %2719 = vmatmul.mubr.bf16.gmra.mrb[0].mxu0 %v366
    %v2720 = vpop.f32.mrb[0].mxu0
    %v2721 = vadd.f32 %v754, %v2720
    %v2722 = vpop.f32.mrb[0].mxu0
    %v2723 = vadd.f32 %v758, %v2722
    %v2724 = vpop.f32.mrb[0].mxu0
    %v2725 = vpop.f32.mrb[0].mxu0
    %2726 = vdwg.mxu0
    %v2727 = vpack.c.bf16 %v2106, %v2106
    %v2728 = vpack.c.bf16 %v2108, %v2108
    %v2729 = vpack.c.bf16 %v2147, %v2147
    %v2730 = vpack.c.bf16 %v2149, %v2149
    %v2731 = vpack.c.bf16 %v2188, %v2188
    %v2732 = vpack.c.bf16 %v2190, %v2190
    %v2733 = vpack.c.bf16 %v2229, %v2229
    %v2734 = vpack.c.bf16 %v2231, %v2231
    %v2735 = vpack.c.bf16 %v2270, %v2270
    %v2736 = vpack.c.bf16 %v2272, %v2272
    %v2737 = vpack.c.bf16 %v2311, %v2311
    %v2738 = vpack.c.bf16 %v2313, %v2313
    %v2739 = vpack.c.bf16 %v2352, %v2352
    %v2740 = vpack.c.bf16 %v2354, %v2354
    %v2741 = vpack.c.bf16 %v2393, %v2393
    %v2742 = vpack.c.bf16 %v2395, %v2395
    %v2743 = vpack.c.bf16 %v2434, %v2434
    %v2744 = vpack.c.bf16 %v2436, %v2436
    %v2745 = vpack.c.bf16 %v2475, %v2475
    %v2746 = vpack.c.bf16 %v2477, %v2477
    %v2747 = vpack.c.bf16 %v2516, %v2516
    %v2748 = vpack.c.bf16 %v2518, %v2518
    %v2749 = vpack.c.bf16 %v2557, %v2557
    %v2750 = vpack.c.bf16 %v2559, %v2559
    %v2751 = vpack.c.bf16 %v2598, %v2598
    %v2752 = vpack.c.bf16 %v2600, %v2600
    %v2753 = vpack.c.bf16 %v2639, %v2639
    %v2754 = vpack.c.bf16 %v2641, %v2641
    %v2755 = vpack.c.bf16 %v2680, %v2680
    %v2756 = vpack.c.bf16 %v2682, %v2682
    %v2757 = vpack.c.bf16 %v2721, %v2721
    %v2758 = vpack.c.bf16 %v2723, %v2723
    %v2759 = vld [vmem:[#allocation19] sm:$0x1]
    %v2760 = vsub.f32 1.0, %v2759
    loop: start=0, step=1, limit=3
    $region90: #{tpu_custom_call.1} parent=1 // loop_pre_header
      _
    $region91: #{tpu_custom_call.1} parent=1 // loop_header
      %s2762 = sphi 0, %s2766
      %p2763 = scmp.ge.s32.totalorder %s2762, 3
      %v2767 = vphi %v363, %v5604
    $region92: #{tpu_custom_call.1} parent=1 // loop_header_branch
      %2765 = sbr.rel (%p2763) target = $region96
    $region93: #{tpu_custom_call.1} parent=1 // loop_body
      %s2768 = smul.u32 %s2762, 128
      %s2769 = scalar_lea.vmem [#allocation8], %s2768
      %v2770 = vld [vmem:[%s2769] sm:$0xff]
      %v2771 = vld [vmem:[%s2769 + $0x8] sm:$0xff]
      %v2772 = vld [vmem:[%s2769 + $0x10] sm:$0xff]
      %v2773 = vld [vmem:[%s2769 + $0x18] sm:$0xff]
      %v2774 = vld [vmem:[%s2769 + $0x20] sm:$0xff]
      %v2775 = vld [vmem:[%s2769 + $0x28] sm:$0xff]
      %v2776 = vld [vmem:[%s2769 + $0x30] sm:$0xff]
      %v2777 = vld [vmem:[%s2769 + $0x38] sm:$0xff]
      %v2778 = vld [vmem:[%s2769 + $0x40] sm:$0xff]
      %v2779 = vld [vmem:[%s2769 + $0x48] sm:$0xff]
      %v2780 = vld [vmem:[%s2769 + $0x50] sm:$0xff]
      %v2781 = vld [vmem:[%s2769 + $0x58] sm:$0xff]
      %v2782 = vld [vmem:[%s2769 + $0x60] sm:$0xff]
      %v2783 = vld [vmem:[%s2769 + $0x68] sm:$0xff]
      %v2784 = vld [vmem:[%s2769 + $0x70] sm:$0xff]
      %v2785 = vld [vmem:[%s2769 + $0x78] sm:$0xff]
      %s2786 = scalar_lea.vmem [#allocation10], %s2762
      %v2787 = vld [vmem:[%s2786] sm:$0x1]
      %v2789 = vlaneseq
      %v2790 = vshrl.u32 %v2789, 7
      %v2791 = vsub.s32 0, %v2790
      %v2792 = vrot.slane %v2787, %v2791
      %2794 = vmatprep.subr.mxu0 0.0
      %2795 = vmatpush1.msra.mxu0 %v2770
      %2796 = vmatprep.subr.mxu0 0.0
      %2797 = vmatpush1.msra.mxu0 %v2771
      %2798 = vmatprep.subr.mxu0 0.0
      %2799 = vmatpush1.msra.mxu0 %v2772
      %2800 = vmatprep.subr.mxu0 0.0
      %2801 = vmatpush1.msra.mxu0 %v2773
      %2802 = vmatprep.subr.mxu0 0.0
      %2803 = vmatpush1.msra.mxu0 %v2774
      %2804 = vmatprep.subr.mxu0 0.0
      %2805 = vmatpush1.msra.mxu0 %v2775
      %2806 = vmatprep.subr.mxu0 0.0
      %2807 = vmatpush1.msra.mxu0 %v2776
      %2808 = vmatprep.subr.mxu0 0.0
      %2809 = vmatpush1.msra.mxu0 %v2777
      %2810 = vmatprep.subr.mxu0 0.0
      %2811 = vmatpush1.msra.mxu0 %v2778
      %2812 = vmatprep.subr.mxu0 0.0
      %2813 = vmatpush1.msra.mxu0 %v2779
      %2814 = vmatprep.subr.mxu0 0.0
      %2815 = vmatpush1.msra.mxu0 %v2780
      %2816 = vmatprep.subr.mxu0 0.0
      %2817 = vmatpush1.msra.mxu0 %v2781
      %2818 = vmatprep.subr.mxu0 0.0
      %2819 = vmatpush1.msra.mxu0 %v2782
      %2820 = vmatprep.subr.mxu0 0.0
      %2821 = vmatpush1.msra.mxu0 %v2783
      %2822 = vmatprep.subr.mxu0 0.0
      %2823 = vmatpush1.msra.mxu0 %v2784
      %2824 = vmatprep.subr.mxu0 0.0
      %2825 = vmatpush1.msra.mxu0 %v2785
      %2826 = vmatprep.subr.mxu0 0.0
      %2827 = vmatpush1.msra.mxu0 0.0
      %2828 = vmatprep.subr.mxu0 0.0
      %2829 = vmatpush1.msra.mxu0 0.0
      %2830 = vmatprep.subr.mxu0 0.0
      %2831 = vmatpush1.msra.mxu0 0.0
      %2832 = vmatprep.subr.mxu0 0.0
      %2833 = vmatpush1.msra.mxu0 0.0
      %2834 = vmatprep.subr.mxu0 0.0
      %2835 = vmatpush1.msra.mxu0 0.0
      %2836 = vmatprep.subr.mxu0 0.0
      %2837 = vmatpush1.msra.mxu0 0.0
      %2838 = vmatprep.subr.mxu0 0.0
      %2839 = vmatpush1.msra.mxu0 0.0
      %2840 = vmatprep.subr.mxu0 0.0
      %2841 = vmatpush1.msra.mxu0 0.0
      %2842 = vmatprep.subr.mxu0 0.0
      %2843 = vmatpush1.msra.mxu0 0.0
      %2844 = vmatprep.subr.mxu0 0.0
      %2845 = vmatpush1.msra.mxu0 0.0
      %2846 = vmatprep.subr.mxu0 0.0
      %2847 = vmatpush1.msra.mxu0 0.0
      %2848 = vmatprep.subr.mxu0 0.0
      %2849 = vmatpush1.msra.mxu0 0.0
      %2850 = vmatprep.subr.mxu0 0.0
      %2851 = vmatpush1.msra.mxu0 0.0
      %2852 = vmatprep.subr.mxu0 0.0
      %2853 = vmatpush1.msra.mxu0 0.0
      %2854 = vmatprep.subr.mxu0 0.0
      %2855 = vmatpush1.msra.mxu0 0.0
      %2856 = vmatprep.subr.mxu0 0.0
      %2857 = vmatpush1.msra.mxu0 0.0
      %2858 = vmatprep.mubr.f32.mxu0 0.0
      %2859 = vmatmul.mubr.f32.gmra.mrb[0].mxu0 %v271
      %v2860 = vpop.f32.mrb[0].mxu0
      %v2861 = vadd.f32 %v2792, %v2860
      %v2862 = vpop.f32.mrb[0].mxu0
      %2863 = vdwg.mxu0
      %v2865 = vlaneseq
      %v2866 = vshrl.u32 %v2865, 7
      %v2867 = vsub.s32 0, %v2866
      %v2868 = vrot.slane %v2760, %v2867
      %v2870 = vmul.f32 %v2861, %v2868
      %v2871 = vmul.f32 %v2861, %v2861
      %v2873 = vlaneseq
      %v2874 = vshrl.u32 %v2873, 7
      %v2875 = vsub.s32 0, %v2874
      %v2876 = vrot.slane %v2759, %v2875
      %v2878 = vmul.f32 %v2871, %v2876
      %v2879 = vadd.f32 %v2870, %v2878
      %v2880 = vpack.c.bf16 %v2879, %v2879
      %v2881 = vmul.bf16 %v2727, %v2880
      %v2882 = vmul.bf16 %v2728, %v2880
      %v2883 = vmul.bf16 %v2729, %v2880
      %v2884 = vmul.bf16 %v2730, %v2880
      %v2885 = vmul.bf16 %v2731, %v2880
      %v2886 = vmul.bf16 %v2732, %v2880
      %v2887 = vmul.bf16 %v2733, %v2880
      %v2888 = vmul.bf16 %v2734, %v2880
      %v2889 = vmul.bf16 %v2735, %v2880
      %v2890 = vmul.bf16 %v2736, %v2880
      %v2891 = vmul.bf16 %v2737, %v2880
      %v2892 = vmul.bf16 %v2738, %v2880
      %v2893 = vmul.bf16 %v2739, %v2880
      %v2894 = vmul.bf16 %v2740, %v2880
      %v2895 = vmul.bf16 %v2741, %v2880
      %v2896 = vmul.bf16 %v2742, %v2880
      %v2897 = vmul.bf16 %v2743, %v2880
      %v2898 = vmul.bf16 %v2744, %v2880
      %v2899 = vmul.bf16 %v2745, %v2880
      %v2900 = vmul.bf16 %v2746, %v2880
      %v2901 = vmul.bf16 %v2747, %v2880
      %v2902 = vmul.bf16 %v2748, %v2880
      %v2903 = vmul.bf16 %v2749, %v2880
      %v2904 = vmul.bf16 %v2750, %v2880
      %v2905 = vmul.bf16 %v2751, %v2880
      %v2906 = vmul.bf16 %v2752, %v2880
      %v2907 = vmul.bf16 %v2753, %v2880
      %v2908 = vmul.bf16 %v2754, %v2880
      %v2909 = vmul.bf16 %v2755, %v2880
      %v2910 = vmul.bf16 %v2756, %v2880
      %v2911 = vmul.bf16 %v2757, %v2880
      %v2912 = vmul.bf16 %v2758, %v2880
      %s2913 = smul.u32 %s2762, 512
      %s2914 = smul.addr %s2913, 4
      %s2915 = scalar_lea.vmem [#allocation17], %s2914
      %v2916 = vld [vmem:[%s2915] sm:$0xf]
      %v2917 = vld [vmem:[%s2915 + $0x4] sm:$0xf]
      %v2918 = vld [vmem:[%s2915 + $0x8] sm:$0xf]
      %v2919 = vld [vmem:[%s2915 + $0xc] sm:$0xf]
      %v2920 = vld [vmem:[%s2915 + $0x10] sm:$0xf]
      %v2921 = vld [vmem:[%s2915 + $0x14] sm:$0xf]
      %v2922 = vld [vmem:[%s2915 + $0x18] sm:$0xf]
      %v2923 = vld [vmem:[%s2915 + $0x1c] sm:$0xf]
      %v2924 = vld [vmem:[%s2915 + $0x20] sm:$0xf]
      %v2925 = vld [vmem:[%s2915 + $0x24] sm:$0xf]
      %v2926 = vld [vmem:[%s2915 + $0x28] sm:$0xf]
      %v2927 = vld [vmem:[%s2915 + $0x2c] sm:$0xf]
      %v2928 = vld [vmem:[%s2915 + $0x30] sm:$0xf]
      %v2929 = vld [vmem:[%s2915 + $0x34] sm:$0xf]
      %v2930 = vld [vmem:[%s2915 + $0x38] sm:$0xf]
      %v2931 = vld [vmem:[%s2915 + $0x3c] sm:$0xf]
      %v2932 = vld [vmem:[%s2915 + $0x40] sm:$0xf]
      %v2933 = vld [vmem:[%s2915 + $0x44] sm:$0xf]
      %v2934 = vld [vmem:[%s2915 + $0x48] sm:$0xf]
      %v2935 = vld [vmem:[%s2915 + $0x4c] sm:$0xf]
      %v2936 = vld [vmem:[%s2915 + $0x50] sm:$0xf]
      %v2937 = vld [vmem:[%s2915 + $0x54] sm:$0xf]
      %v2938 = vld [vmem:[%s2915 + $0x58] sm:$0xf]
      %v2939 = vld [vmem:[%s2915 + $0x5c] sm:$0xf]
      %v2940 = vld [vmem:[%s2915 + $0x60] sm:$0xf]
      %v2941 = vld [vmem:[%s2915 + $0x64] sm:$0xf]
      %v2942 = vld [vmem:[%s2915 + $0x68] sm:$0xf]
      %v2943 = vld [vmem:[%s2915 + $0x6c] sm:$0xf]
      %v2944 = vld [vmem:[%s2915 + $0x70] sm:$0xf]
      %v2945 = vld [vmem:[%s2915 + $0x74] sm:$0xf]
      %v2946 = vld [vmem:[%s2915 + $0x78] sm:$0xf]
      %v2947 = vld [vmem:[%s2915 + $0x7c] sm:$0xf]
      %v2948 = vld [vmem:[%s2915 + $0x80] sm:$0xf]
      %v2949 = vld [vmem:[%s2915 + $0x84] sm:$0xf]
      %v2950 = vld [vmem:[%s2915 + $0x88] sm:$0xf]
      %v2951 = vld [vmem:[%s2915 + $0x8c] sm:$0xf]
      %v2952 = vld [vmem:[%s2915 + $0x90] sm:$0xf]
      %v2953 = vld [vmem:[%s2915 + $0x94] sm:$0xf]
      %v2954 = vld [vmem:[%s2915 + $0x98] sm:$0xf]
      %v2955 = vld [vmem:[%s2915 + $0x9c] sm:$0xf]
      %v2956 = vld [vmem:[%s2915 + $0xa0] sm:$0xf]
      %v2957 = vld [vmem:[%s2915 + $0xa4] sm:$0xf]
      %v2958 = vld [vmem:[%s2915 + $0xa8] sm:$0xf]
      %v2959 = vld [vmem:[%s2915 + $0xac] sm:$0xf]
      %v2960 = vld [vmem:[%s2915 + $0xb0] sm:$0xf]
      %v2961 = vld [vmem:[%s2915 + $0xb4] sm:$0xf]
      %v2962 = vld [vmem:[%s2915 + $0xb8] sm:$0xf]
      %v2963 = vld [vmem:[%s2915 + $0xbc] sm:$0xf]
      %v2964 = vld [vmem:[%s2915 + $0xc0] sm:$0xf]
      %v2965 = vld [vmem:[%s2915 + $0xc4] sm:$0xf]
      %v2966 = vld [vmem:[%s2915 + $0xc8] sm:$0xf]
      %v2967 = vld [vmem:[%s2915 + $0xcc] sm:$0xf]
      %v2968 = vld [vmem:[%s2915 + $0xd0] sm:$0xf]
      %v2969 = vld [vmem:[%s2915 + $0xd4] sm:$0xf]
      %v2970 = vld [vmem:[%s2915 + $0xd8] sm:$0xf]
      %v2971 = vld [vmem:[%s2915 + $0xdc] sm:$0xf]
      %v2972 = vld [vmem:[%s2915 + $0xe0] sm:$0xf]
      %v2973 = vld [vmem:[%s2915 + $0xe4] sm:$0xf]
      %v2974 = vld [vmem:[%s2915 + $0xe8] sm:$0xf]
      %v2975 = vld [vmem:[%s2915 + $0xec] sm:$0xf]
      %v2976 = vld [vmem:[%s2915 + $0xf0] sm:$0xf]
      %v2977 = vld [vmem:[%s2915 + $0xf4] sm:$0xf]
      %v2978 = vld [vmem:[%s2915 + $0xf8] sm:$0xf]
      %v2979 = vld [vmem:[%s2915 + $0xfc] sm:$0xf]
      %v2980 = vld [vmem:[%s2915 + $0x100] sm:$0xf]
      %v2981 = vld [vmem:[%s2915 + $0x104] sm:$0xf]
      %v2982 = vld [vmem:[%s2915 + $0x108] sm:$0xf]
      %v2983 = vld [vmem:[%s2915 + $0x10c] sm:$0xf]
      %v2984 = vld [vmem:[%s2915 + $0x110] sm:$0xf]
      %v2985 = vld [vmem:[%s2915 + $0x114] sm:$0xf]
      %v2986 = vld [vmem:[%s2915 + $0x118] sm:$0xf]
      %v2987 = vld [vmem:[%s2915 + $0x11c] sm:$0xf]
      %v2988 = vld [vmem:[%s2915 + $0x120] sm:$0xf]
      %v2989 = vld [vmem:[%s2915 + $0x124] sm:$0xf]
      %v2990 = vld [vmem:[%s2915 + $0x128] sm:$0xf]
      %v2991 = vld [vmem:[%s2915 + $0x12c] sm:$0xf]
      %v2992 = vld [vmem:[%s2915 + $0x130] sm:$0xf]
      %v2993 = vld [vmem:[%s2915 + $0x134] sm:$0xf]
      %v2994 = vld [vmem:[%s2915 + $0x138] sm:$0xf]
      %v2995 = vld [vmem:[%s2915 + $0x13c] sm:$0xf]
      %v2996 = vld [vmem:[%s2915 + $0x140] sm:$0xf]
      %v2997 = vld [vmem:[%s2915 + $0x144] sm:$0xf]
      %v2998 = vld [vmem:[%s2915 + $0x148] sm:$0xf]
      %v2999 = vld [vmem:[%s2915 + $0x14c] sm:$0xf]
      %v3000 = vld [vmem:[%s2915 + $0x150] sm:$0xf]
      %v3001 = vld [vmem:[%s2915 + $0x154] sm:$0xf]
      %v3002 = vld [vmem:[%s2915 + $0x158] sm:$0xf]
      %v3003 = vld [vmem:[%s2915 + $0x15c] sm:$0xf]
      %v3004 = vld [vmem:[%s2915 + $0x160] sm:$0xf]
      %v3005 = vld [vmem:[%s2915 + $0x164] sm:$0xf]
      %v3006 = vld [vmem:[%s2915 + $0x168] sm:$0xf]
      %v3007 = vld [vmem:[%s2915 + $0x16c] sm:$0xf]
      %v3008 = vld [vmem:[%s2915 + $0x170] sm:$0xf]
      %v3009 = vld [vmem:[%s2915 + $0x174] sm:$0xf]
      %v3010 = vld [vmem:[%s2915 + $0x178] sm:$0xf]
      %v3011 = vld [vmem:[%s2915 + $0x17c] sm:$0xf]
      %v3012 = vld [vmem:[%s2915 + $0x180] sm:$0xf]
      %v3013 = vld [vmem:[%s2915 + $0x184] sm:$0xf]
      %v3014 = vld [vmem:[%s2915 + $0x188] sm:$0xf]
      %v3015 = vld [vmem:[%s2915 + $0x18c] sm:$0xf]
      %v3016 = vld [vmem:[%s2915 + $0x190] sm:$0xf]
      %v3017 = vld [vmem:[%s2915 + $0x194] sm:$0xf]
      %v3018 = vld [vmem:[%s2915 + $0x198] sm:$0xf]
      %v3019 = vld [vmem:[%s2915 + $0x19c] sm:$0xf]
      %v3020 = vld [vmem:[%s2915 + $0x1a0] sm:$0xf]
      %v3021 = vld [vmem:[%s2915 + $0x1a4] sm:$0xf]
      %v3022 = vld [vmem:[%s2915 + $0x1a8] sm:$0xf]
      %v3023 = vld [vmem:[%s2915 + $0x1ac] sm:$0xf]
      %v3024 = vld [vmem:[%s2915 + $0x1b0] sm:$0xf]
      %v3025 = vld [vmem:[%s2915 + $0x1b4] sm:$0xf]
      %v3026 = vld [vmem:[%s2915 + $0x1b8] sm:$0xf]
      %v3027 = vld [vmem:[%s2915 + $0x1bc] sm:$0xf]
      %v3028 = vld [vmem:[%s2915 + $0x1c0] sm:$0xf]
      %v3029 = vld [vmem:[%s2915 + $0x1c4] sm:$0xf]
      %v3030 = vld [vmem:[%s2915 + $0x1c8] sm:$0xf]
      %v3031 = vld [vmem:[%s2915 + $0x1cc] sm:$0xf]
      %v3032 = vld [vmem:[%s2915 + $0x1d0] sm:$0xf]
      %v3033 = vld [vmem:[%s2915 + $0x1d4] sm:$0xf]
      %v3034 = vld [vmem:[%s2915 + $0x1d8] sm:$0xf]
      %v3035 = vld [vmem:[%s2915 + $0x1dc] sm:$0xf]
      %v3036 = vld [vmem:[%s2915 + $0x1e0] sm:$0xf]
      %v3037 = vld [vmem:[%s2915 + $0x1e4] sm:$0xf]
      %v3038 = vld [vmem:[%s2915 + $0x1e8] sm:$0xf]
      %v3039 = vld [vmem:[%s2915 + $0x1ec] sm:$0xf]
      %v3040 = vld [vmem:[%s2915 + $0x1f0] sm:$0xf]
      %v3041 = vld [vmem:[%s2915 + $0x1f4] sm:$0xf]
      %v3042 = vld [vmem:[%s2915 + $0x1f8] sm:$0xf]
      %v3043 = vld [vmem:[%s2915 + $0x1fc] sm:$0xf]
      %v3044 = vld [vmem:[%s2915 + $0x200] sm:$0xf]
      %v3045 = vld [vmem:[%s2915 + $0x204] sm:$0xf]
      %v3046 = vld [vmem:[%s2915 + $0x208] sm:$0xf]
      %v3047 = vld [vmem:[%s2915 + $0x20c] sm:$0xf]
      %v3048 = vld [vmem:[%s2915 + $0x210] sm:$0xf]
      %v3049 = vld [vmem:[%s2915 + $0x214] sm:$0xf]
      %v3050 = vld [vmem:[%s2915 + $0x218] sm:$0xf]
      %v3051 = vld [vmem:[%s2915 + $0x21c] sm:$0xf]
      %v3052 = vld [vmem:[%s2915 + $0x220] sm:$0xf]
      %v3053 = vld [vmem:[%s2915 + $0x224] sm:$0xf]
      %v3054 = vld [vmem:[%s2915 + $0x228] sm:$0xf]
      %v3055 = vld [vmem:[%s2915 + $0x22c] sm:$0xf]
      %v3056 = vld [vmem:[%s2915 + $0x230] sm:$0xf]
      %v3057 = vld [vmem:[%s2915 + $0x234] sm:$0xf]
      %v3058 = vld [vmem:[%s2915 + $0x238] sm:$0xf]
      %v3059 = vld [vmem:[%s2915 + $0x23c] sm:$0xf]
      %v3060 = vld [vmem:[%s2915 + $0x240] sm:$0xf]
      %v3061 = vld [vmem:[%s2915 + $0x244] sm:$0xf]
      %v3062 = vld [vmem:[%s2915 + $0x248] sm:$0xf]
      %v3063 = vld [vmem:[%s2915 + $0x24c] sm:$0xf]
      %v3064 = vld [vmem:[%s2915 + $0x250] sm:$0xf]
      %v3065 = vld [vmem:[%s2915 + $0x254] sm:$0xf]
      %v3066 = vld [vmem:[%s2915 + $0x258] sm:$0xf]
      %v3067 = vld [vmem:[%s2915 + $0x25c] sm:$0xf]
      %v3068 = vld [vmem:[%s2915 + $0x260] sm:$0xf]
      %v3069 = vld [vmem:[%s2915 + $0x264] sm:$0xf]
      %v3070 = vld [vmem:[%s2915 + $0x268] sm:$0xf]
      %v3071 = vld [vmem:[%s2915 + $0x26c] sm:$0xf]
      %v3072 = vld [vmem:[%s2915 + $0x270] sm:$0xf]
      %v3073 = vld [vmem:[%s2915 + $0x274] sm:$0xf]
      %v3074 = vld [vmem:[%s2915 + $0x278] sm:$0xf]
      %v3075 = vld [vmem:[%s2915 + $0x27c] sm:$0xf]
      %v3076 = vld [vmem:[%s2915 + $0x280] sm:$0xf]
      %v3077 = vld [vmem:[%s2915 + $0x284] sm:$0xf]
      %v3078 = vld [vmem:[%s2915 + $0x288] sm:$0xf]
      %v3079 = vld [vmem:[%s2915 + $0x28c] sm:$0xf]
      %v3080 = vld [vmem:[%s2915 + $0x290] sm:$0xf]
      %v3081 = vld [vmem:[%s2915 + $0x294] sm:$0xf]
      %v3082 = vld [vmem:[%s2915 + $0x298] sm:$0xf]
      %v3083 = vld [vmem:[%s2915 + $0x29c] sm:$0xf]
      %v3084 = vld [vmem:[%s2915 + $0x2a0] sm:$0xf]
      %v3085 = vld [vmem:[%s2915 + $0x2a4] sm:$0xf]
      %v3086 = vld [vmem:[%s2915 + $0x2a8] sm:$0xf]
      %v3087 = vld [vmem:[%s2915 + $0x2ac] sm:$0xf]
      %v3088 = vld [vmem:[%s2915 + $0x2b0] sm:$0xf]
      %v3089 = vld [vmem:[%s2915 + $0x2b4] sm:$0xf]
      %v3090 = vld [vmem:[%s2915 + $0x2b8] sm:$0xf]
      %v3091 = vld [vmem:[%s2915 + $0x2bc] sm:$0xf]
      %v3092 = vld [vmem:[%s2915 + $0x2c0] sm:$0xf]
      %v3093 = vld [vmem:[%s2915 + $0x2c4] sm:$0xf]
      %v3094 = vld [vmem:[%s2915 + $0x2c8] sm:$0xf]
      %v3095 = vld [vmem:[%s2915 + $0x2cc] sm:$0xf]
      %v3096 = vld [vmem:[%s2915 + $0x2d0] sm:$0xf]
      %v3097 = vld [vmem:[%s2915 + $0x2d4] sm:$0xf]
      %v3098 = vld [vmem:[%s2915 + $0x2d8] sm:$0xf]
      %v3099 = vld [vmem:[%s2915 + $0x2dc] sm:$0xf]
      %v3100 = vld [vmem:[%s2915 + $0x2e0] sm:$0xf]
      %v3101 = vld [vmem:[%s2915 + $0x2e4] sm:$0xf]
      %v3102 = vld [vmem:[%s2915 + $0x2e8] sm:$0xf]
      %v3103 = vld [vmem:[%s2915 + $0x2ec] sm:$0xf]
      %v3104 = vld [vmem:[%s2915 + $0x2f0] sm:$0xf]
      %v3105 = vld [vmem:[%s2915 + $0x2f4] sm:$0xf]
      %v3106 = vld [vmem:[%s2915 + $0x2f8] sm:$0xf]
      %v3107 = vld [vmem:[%s2915 + $0x2fc] sm:$0xf]
      %v3108 = vld [vmem:[%s2915 + $0x300] sm:$0xf]
      %v3109 = vld [vmem:[%s2915 + $0x304] sm:$0xf]
      %v3110 = vld [vmem:[%s2915 + $0x308] sm:$0xf]
      %v3111 = vld [vmem:[%s2915 + $0x30c] sm:$0xf]
      %v3112 = vld [vmem:[%s2915 + $0x310] sm:$0xf]
      %v3113 = vld [vmem:[%s2915 + $0x314] sm:$0xf]
      %v3114 = vld [vmem:[%s2915 + $0x318] sm:$0xf]
      %v3115 = vld [vmem:[%s2915 + $0x31c] sm:$0xf]
      %v3116 = vld [vmem:[%s2915 + $0x320] sm:$0xf]
      %v3117 = vld [vmem:[%s2915 + $0x324] sm:$0xf]
      %v3118 = vld [vmem:[%s2915 + $0x328] sm:$0xf]
      %v3119 = vld [vmem:[%s2915 + $0x32c] sm:$0xf]
      %v3120 = vld [vmem:[%s2915 + $0x330] sm:$0xf]
      %v3121 = vld [vmem:[%s2915 + $0x334] sm:$0xf]
      %v3122 = vld [vmem:[%s2915 + $0x338] sm:$0xf]
      %v3123 = vld [vmem:[%s2915 + $0x33c] sm:$0xf]
      %v3124 = vld [vmem:[%s2915 + $0x340] sm:$0xf]
      %v3125 = vld [vmem:[%s2915 + $0x344] sm:$0xf]
      %v3126 = vld [vmem:[%s2915 + $0x348] sm:$0xf]
      %v3127 = vld [vmem:[%s2915 + $0x34c] sm:$0xf]
      %v3128 = vld [vmem:[%s2915 + $0x350] sm:$0xf]
      %v3129 = vld [vmem:[%s2915 + $0x354] sm:$0xf]
      %v3130 = vld [vmem:[%s2915 + $0x358] sm:$0xf]
      %v3131 = vld [vmem:[%s2915 + $0x35c] sm:$0xf]
      %v3132 = vld [vmem:[%s2915 + $0x360] sm:$0xf]
      %v3133 = vld [vmem:[%s2915 + $0x364] sm:$0xf]
      %v3134 = vld [vmem:[%s2915 + $0x368] sm:$0xf]
      %v3135 = vld [vmem:[%s2915 + $0x36c] sm:$0xf]
      %v3136 = vld [vmem:[%s2915 + $0x370] sm:$0xf]
      %v3137 = vld [vmem:[%s2915 + $0x374] sm:$0xf]
      %v3138 = vld [vmem:[%s2915 + $0x378] sm:$0xf]
      %v3139 = vld [vmem:[%s2915 + $0x37c] sm:$0xf]
      %v3140 = vld [vmem:[%s2915 + $0x380] sm:$0xf]
      %v3141 = vld [vmem:[%s2915 + $0x384] sm:$0xf]
      %v3142 = vld [vmem:[%s2915 + $0x388] sm:$0xf]
      %v3143 = vld [vmem:[%s2915 + $0x38c] sm:$0xf]
      %v3144 = vld [vmem:[%s2915 + $0x390] sm:$0xf]
      %v3145 = vld [vmem:[%s2915 + $0x394] sm:$0xf]
      %v3146 = vld [vmem:[%s2915 + $0x398] sm:$0xf]
      %v3147 = vld [vmem:[%s2915 + $0x39c] sm:$0xf]
      %v3148 = vld [vmem:[%s2915 + $0x3a0] sm:$0xf]
      %v3149 = vld [vmem:[%s2915 + $0x3a4] sm:$0xf]
      %v3150 = vld [vmem:[%s2915 + $0x3a8] sm:$0xf]
      %v3151 = vld [vmem:[%s2915 + $0x3ac] sm:$0xf]
      %v3152 = vld [vmem:[%s2915 + $0x3b0] sm:$0xf]
      %v3153 = vld [vmem:[%s2915 + $0x3b4] sm:$0xf]
      %v3154 = vld [vmem:[%s2915 + $0x3b8] sm:$0xf]
      %v3155 = vld [vmem:[%s2915 + $0x3bc] sm:$0xf]
      %v3156 = vld [vmem:[%s2915 + $0x3c0] sm:$0xf]
      %v3157 = vld [vmem:[%s2915 + $0x3c4] sm:$0xf]
      %v3158 = vld [vmem:[%s2915 + $0x3c8] sm:$0xf]
      %v3159 = vld [vmem:[%s2915 + $0x3cc] sm:$0xf]
      %v3160 = vld [vmem:[%s2915 + $0x3d0] sm:$0xf]
      %v3161 = vld [vmem:[%s2915 + $0x3d4] sm:$0xf]
      %v3162 = vld [vmem:[%s2915 + $0x3d8] sm:$0xf]
      %v3163 = vld [vmem:[%s2915 + $0x3dc] sm:$0xf]
      %v3164 = vld [vmem:[%s2915 + $0x3e0] sm:$0xf]
      %v3165 = vld [vmem:[%s2915 + $0x3e4] sm:$0xf]
      %v3166 = vld [vmem:[%s2915 + $0x3e8] sm:$0xf]
      %v3167 = vld [vmem:[%s2915 + $0x3ec] sm:$0xf]
      %v3168 = vld [vmem:[%s2915 + $0x3f0] sm:$0xf]
      %v3169 = vld [vmem:[%s2915 + $0x3f4] sm:$0xf]
      %v3170 = vld [vmem:[%s2915 + $0x3f8] sm:$0xf]
      %v3171 = vld [vmem:[%s2915 + $0x3fc] sm:$0xf]
      %v3172 = vld [vmem:[%s2915 + $0x400] sm:$0xf]
      %v3173 = vld [vmem:[%s2915 + $0x404] sm:$0xf]
      %v3174 = vld [vmem:[%s2915 + $0x408] sm:$0xf]
      %v3175 = vld [vmem:[%s2915 + $0x40c] sm:$0xf]
      %v3176 = vld [vmem:[%s2915 + $0x410] sm:$0xf]
      %v3177 = vld [vmem:[%s2915 + $0x414] sm:$0xf]
      %v3178 = vld [vmem:[%s2915 + $0x418] sm:$0xf]
      %v3179 = vld [vmem:[%s2915 + $0x41c] sm:$0xf]
      %v3180 = vld [vmem:[%s2915 + $0x420] sm:$0xf]
      %v3181 = vld [vmem:[%s2915 + $0x424] sm:$0xf]
      %v3182 = vld [vmem:[%s2915 + $0x428] sm:$0xf]
      %v3183 = vld [vmem:[%s2915 + $0x42c] sm:$0xf]
      %v3184 = vld [vmem:[%s2915 + $0x430] sm:$0xf]
      %v3185 = vld [vmem:[%s2915 + $0x434] sm:$0xf]
      %v3186 = vld [vmem:[%s2915 + $0x438] sm:$0xf]
      %v3187 = vld [vmem:[%s2915 + $0x43c] sm:$0xf]
      %v3188 = vld [vmem:[%s2915 + $0x440] sm:$0xf]
      %v3189 = vld [vmem:[%s2915 + $0x444] sm:$0xf]
      %v3190 = vld [vmem:[%s2915 + $0x448] sm:$0xf]
      %v3191 = vld [vmem:[%s2915 + $0x44c] sm:$0xf]
      %v3192 = vld [vmem:[%s2915 + $0x450] sm:$0xf]
      %v3193 = vld [vmem:[%s2915 + $0x454] sm:$0xf]
      %v3194 = vld [vmem:[%s2915 + $0x458] sm:$0xf]
      %v3195 = vld [vmem:[%s2915 + $0x45c] sm:$0xf]
      %v3196 = vld [vmem:[%s2915 + $0x460] sm:$0xf]
      %v3197 = vld [vmem:[%s2915 + $0x464] sm:$0xf]
      %v3198 = vld [vmem:[%s2915 + $0x468] sm:$0xf]
      %v3199 = vld [vmem:[%s2915 + $0x46c] sm:$0xf]
      %v3200 = vld [vmem:[%s2915 + $0x470] sm:$0xf]
      %v3201 = vld [vmem:[%s2915 + $0x474] sm:$0xf]
      %v3202 = vld [vmem:[%s2915 + $0x478] sm:$0xf]
      %v3203 = vld [vmem:[%s2915 + $0x47c] sm:$0xf]
      %v3204 = vld [vmem:[%s2915 + $0x480] sm:$0xf]
      %v3205 = vld [vmem:[%s2915 + $0x484] sm:$0xf]
      %v3206 = vld [vmem:[%s2915 + $0x488] sm:$0xf]
      %v3207 = vld [vmem:[%s2915 + $0x48c] sm:$0xf]
      %v3208 = vld [vmem:[%s2915 + $0x490] sm:$0xf]
      %v3209 = vld [vmem:[%s2915 + $0x494] sm:$0xf]
      %v3210 = vld [vmem:[%s2915 + $0x498] sm:$0xf]
      %v3211 = vld [vmem:[%s2915 + $0x49c] sm:$0xf]
      %v3212 = vld [vmem:[%s2915 + $0x4a0] sm:$0xf]
      %v3213 = vld [vmem:[%s2915 + $0x4a4] sm:$0xf]
      %v3214 = vld [vmem:[%s2915 + $0x4a8] sm:$0xf]
      %v3215 = vld [vmem:[%s2915 + $0x4ac] sm:$0xf]
      %v3216 = vld [vmem:[%s2915 + $0x4b0] sm:$0xf]
      %v3217 = vld [vmem:[%s2915 + $0x4b4] sm:$0xf]
      %v3218 = vld [vmem:[%s2915 + $0x4b8] sm:$0xf]
      %v3219 = vld [vmem:[%s2915 + $0x4bc] sm:$0xf]
      %v3220 = vld [vmem:[%s2915 + $0x4c0] sm:$0xf]
      %v3221 = vld [vmem:[%s2915 + $0x4c4] sm:$0xf]
      %v3222 = vld [vmem:[%s2915 + $0x4c8] sm:$0xf]
      %v3223 = vld [vmem:[%s2915 + $0x4cc] sm:$0xf]
      %v3224 = vld [vmem:[%s2915 + $0x4d0] sm:$0xf]
      %v3225 = vld [vmem:[%s2915 + $0x4d4] sm:$0xf]
      %v3226 = vld [vmem:[%s2915 + $0x4d8] sm:$0xf]
      %v3227 = vld [vmem:[%s2915 + $0x4dc] sm:$0xf]
      %v3228 = vld [vmem:[%s2915 + $0x4e0] sm:$0xf]
      %v3229 = vld [vmem:[%s2915 + $0x4e4] sm:$0xf]
      %v3230 = vld [vmem:[%s2915 + $0x4e8] sm:$0xf]
      %v3231 = vld [vmem:[%s2915 + $0x4ec] sm:$0xf]
      %v3232 = vld [vmem:[%s2915 + $0x4f0] sm:$0xf]
      %v3233 = vld [vmem:[%s2915 + $0x4f4] sm:$0xf]
      %v3234 = vld [vmem:[%s2915 + $0x4f8] sm:$0xf]
      %v3235 = vld [vmem:[%s2915 + $0x4fc] sm:$0xf]
      %v3236 = vld [vmem:[%s2915 + $0x500] sm:$0xf]
      %v3237 = vld [vmem:[%s2915 + $0x504] sm:$0xf]
      %v3238 = vld [vmem:[%s2915 + $0x508] sm:$0xf]
      %v3239 = vld [vmem:[%s2915 + $0x50c] sm:$0xf]
      %v3240 = vld [vmem:[%s2915 + $0x510] sm:$0xf]
      %v3241 = vld [vmem:[%s2915 + $0x514] sm:$0xf]
      %v3242 = vld [vmem:[%s2915 + $0x518] sm:$0xf]
      %v3243 = vld [vmem:[%s2915 + $0x51c] sm:$0xf]
      %v3244 = vld [vmem:[%s2915 + $0x520] sm:$0xf]
      %v3245 = vld [vmem:[%s2915 + $0x524] sm:$0xf]
      %v3246 = vld [vmem:[%s2915 + $0x528] sm:$0xf]
      %v3247 = vld [vmem:[%s2915 + $0x52c] sm:$0xf]
      %v3248 = vld [vmem:[%s2915 + $0x530] sm:$0xf]
      %v3249 = vld [vmem:[%s2915 + $0x534] sm:$0xf]
      %v3250 = vld [vmem:[%s2915 + $0x538] sm:$0xf]
      %v3251 = vld [vmem:[%s2915 + $0x53c] sm:$0xf]
      %v3252 = vld [vmem:[%s2915 + $0x540] sm:$0xf]
      %v3253 = vld [vmem:[%s2915 + $0x544] sm:$0xf]
      %v3254 = vld [vmem:[%s2915 + $0x548] sm:$0xf]
      %v3255 = vld [vmem:[%s2915 + $0x54c] sm:$0xf]
      %v3256 = vld [vmem:[%s2915 + $0x550] sm:$0xf]
      %v3257 = vld [vmem:[%s2915 + $0x554] sm:$0xf]
      %v3258 = vld [vmem:[%s2915 + $0x558] sm:$0xf]
      %v3259 = vld [vmem:[%s2915 + $0x55c] sm:$0xf]
      %v3260 = vld [vmem:[%s2915 + $0x560] sm:$0xf]
      %v3261 = vld [vmem:[%s2915 + $0x564] sm:$0xf]
      %v3262 = vld [vmem:[%s2915 + $0x568] sm:$0xf]
      %v3263 = vld [vmem:[%s2915 + $0x56c] sm:$0xf]
      %v3264 = vld [vmem:[%s2915 + $0x570] sm:$0xf]
      %v3265 = vld [vmem:[%s2915 + $0x574] sm:$0xf]
      %v3266 = vld [vmem:[%s2915 + $0x578] sm:$0xf]
      %v3267 = vld [vmem:[%s2915 + $0x57c] sm:$0xf]
      %v3268 = vld [vmem:[%s2915 + $0x580] sm:$0xf]
      %v3269 = vld [vmem:[%s2915 + $0x584] sm:$0xf]
      %v3270 = vld [vmem:[%s2915 + $0x588] sm:$0xf]
      %v3271 = vld [vmem:[%s2915 + $0x58c] sm:$0xf]
      %v3272 = vld [vmem:[%s2915 + $0x590] sm:$0xf]
      %v3273 = vld [vmem:[%s2915 + $0x594] sm:$0xf]
      %v3274 = vld [vmem:[%s2915 + $0x598] sm:$0xf]
      %v3275 = vld [vmem:[%s2915 + $0x59c] sm:$0xf]
      %v3276 = vld [vmem:[%s2915 + $0x5a0] sm:$0xf]
      %v3277 = vld [vmem:[%s2915 + $0x5a4] sm:$0xf]
      %v3278 = vld [vmem:[%s2915 + $0x5a8] sm:$0xf]
      %v3279 = vld [vmem:[%s2915 + $0x5ac] sm:$0xf]
      %v3280 = vld [vmem:[%s2915 + $0x5b0] sm:$0xf]
      %v3281 = vld [vmem:[%s2915 + $0x5b4] sm:$0xf]
      %v3282 = vld [vmem:[%s2915 + $0x5b8] sm:$0xf]
      %v3283 = vld [vmem:[%s2915 + $0x5bc] sm:$0xf]
      %v3284 = vld [vmem:[%s2915 + $0x5c0] sm:$0xf]
      %v3285 = vld [vmem:[%s2915 + $0x5c4] sm:$0xf]
      %v3286 = vld [vmem:[%s2915 + $0x5c8] sm:$0xf]
      %v3287 = vld [vmem:[%s2915 + $0x5cc] sm:$0xf]
      %v3288 = vld [vmem:[%s2915 + $0x5d0] sm:$0xf]
      %v3289 = vld [vmem:[%s2915 + $0x5d4] sm:$0xf]
      %v3290 = vld [vmem:[%s2915 + $0x5d8] sm:$0xf]
      %v3291 = vld [vmem:[%s2915 + $0x5dc] sm:$0xf]
      %v3292 = vld [vmem:[%s2915 + $0x5e0] sm:$0xf]
      %v3293 = vld [vmem:[%s2915 + $0x5e4] sm:$0xf]
      %v3294 = vld [vmem:[%s2915 + $0x5e8] sm:$0xf]
      %v3295 = vld [vmem:[%s2915 + $0x5ec] sm:$0xf]
      %v3296 = vld [vmem:[%s2915 + $0x5f0] sm:$0xf]
      %v3297 = vld [vmem:[%s2915 + $0x5f4] sm:$0xf]
      %v3298 = vld [vmem:[%s2915 + $0x5f8] sm:$0xf]
      %v3299 = vld [vmem:[%s2915 + $0x5fc] sm:$0xf]
      %v3300 = vld [vmem:[%s2915 + $0x600] sm:$0xf]
      %v3301 = vld [vmem:[%s2915 + $0x604] sm:$0xf]
      %v3302 = vld [vmem:[%s2915 + $0x608] sm:$0xf]
      %v3303 = vld [vmem:[%s2915 + $0x60c] sm:$0xf]
      %v3304 = vld [vmem:[%s2915 + $0x610] sm:$0xf]
      %v3305 = vld [vmem:[%s2915 + $0x614] sm:$0xf]
      %v3306 = vld [vmem:[%s2915 + $0x618] sm:$0xf]
      %v3307 = vld [vmem:[%s2915 + $0x61c] sm:$0xf]
      %v3308 = vld [vmem:[%s2915 + $0x620] sm:$0xf]
      %v3309 = vld [vmem:[%s2915 + $0x624] sm:$0xf]
      %v3310 = vld [vmem:[%s2915 + $0x628] sm:$0xf]
      %v3311 = vld [vmem:[%s2915 + $0x62c] sm:$0xf]
      %v3312 = vld [vmem:[%s2915 + $0x630] sm:$0xf]
      %v3313 = vld [vmem:[%s2915 + $0x634] sm:$0xf]
      %v3314 = vld [vmem:[%s2915 + $0x638] sm:$0xf]
      %v3315 = vld [vmem:[%s2915 + $0x63c] sm:$0xf]
      %v3316 = vld [vmem:[%s2915 + $0x640] sm:$0xf]
      %v3317 = vld [vmem:[%s2915 + $0x644] sm:$0xf]
      %v3318 = vld [vmem:[%s2915 + $0x648] sm:$0xf]
      %v3319 = vld [vmem:[%s2915 + $0x64c] sm:$0xf]
      %v3320 = vld [vmem:[%s2915 + $0x650] sm:$0xf]
      %v3321 = vld [vmem:[%s2915 + $0x654] sm:$0xf]
      %v3322 = vld [vmem:[%s2915 + $0x658] sm:$0xf]
      %v3323 = vld [vmem:[%s2915 + $0x65c] sm:$0xf]
      %v3324 = vld [vmem:[%s2915 + $0x660] sm:$0xf]
      %v3325 = vld [vmem:[%s2915 + $0x664] sm:$0xf]
      %v3326 = vld [vmem:[%s2915 + $0x668] sm:$0xf]
      %v3327 = vld [vmem:[%s2915 + $0x66c] sm:$0xf]
      %v3328 = vld [vmem:[%s2915 + $0x670] sm:$0xf]
      %v3329 = vld [vmem:[%s2915 + $0x674] sm:$0xf]
      %v3330 = vld [vmem:[%s2915 + $0x678] sm:$0xf]
      %v3331 = vld [vmem:[%s2915 + $0x67c] sm:$0xf]
      %v3332 = vld [vmem:[%s2915 + $0x680] sm:$0xf]
      %v3333 = vld [vmem:[%s2915 + $0x684] sm:$0xf]
      %v3334 = vld [vmem:[%s2915 + $0x688] sm:$0xf]
      %v3335 = vld [vmem:[%s2915 + $0x68c] sm:$0xf]
      %v3336 = vld [vmem:[%s2915 + $0x690] sm:$0xf]
      %v3337 = vld [vmem:[%s2915 + $0x694] sm:$0xf]
      %v3338 = vld [vmem:[%s2915 + $0x698] sm:$0xf]
      %v3339 = vld [vmem:[%s2915 + $0x69c] sm:$0xf]
      %v3340 = vld [vmem:[%s2915 + $0x6a0] sm:$0xf]
      %v3341 = vld [vmem:[%s2915 + $0x6a4] sm:$0xf]
      %v3342 = vld [vmem:[%s2915 + $0x6a8] sm:$0xf]
      %v3343 = vld [vmem:[%s2915 + $0x6ac] sm:$0xf]
      %v3344 = vld [vmem:[%s2915 + $0x6b0] sm:$0xf]
      %v3345 = vld [vmem:[%s2915 + $0x6b4] sm:$0xf]
      %v3346 = vld [vmem:[%s2915 + $0x6b8] sm:$0xf]
      %v3347 = vld [vmem:[%s2915 + $0x6bc] sm:$0xf]
      %v3348 = vld [vmem:[%s2915 + $0x6c0] sm:$0xf]
      %v3349 = vld [vmem:[%s2915 + $0x6c4] sm:$0xf]
      %v3350 = vld [vmem:[%s2915 + $0x6c8] sm:$0xf]
      %v3351 = vld [vmem:[%s2915 + $0x6cc] sm:$0xf]
      %v3352 = vld [vmem:[%s2915 + $0x6d0] sm:$0xf]
      %v3353 = vld [vmem:[%s2915 + $0x6d4] sm:$0xf]
      %v3354 = vld [vmem:[%s2915 + $0x6d8] sm:$0xf]
      %v3355 = vld [vmem:[%s2915 + $0x6dc] sm:$0xf]
      %v3356 = vld [vmem:[%s2915 + $0x6e0] sm:$0xf]
      %v3357 = vld [vmem:[%s2915 + $0x6e4] sm:$0xf]
      %v3358 = vld [vmem:[%s2915 + $0x6e8] sm:$0xf]
      %v3359 = vld [vmem:[%s2915 + $0x6ec] sm:$0xf]
      %v3360 = vld [vmem:[%s2915 + $0x6f0] sm:$0xf]
      %v3361 = vld [vmem:[%s2915 + $0x6f4] sm:$0xf]
      %v3362 = vld [vmem:[%s2915 + $0x6f8] sm:$0xf]
      %v3363 = vld [vmem:[%s2915 + $0x6fc] sm:$0xf]
      %v3364 = vld [vmem:[%s2915 + $0x700] sm:$0xf]
      %v3365 = vld [vmem:[%s2915 + $0x704] sm:$0xf]
      %v3366 = vld [vmem:[%s2915 + $0x708] sm:$0xf]
      %v3367 = vld [vmem:[%s2915 + $0x70c] sm:$0xf]
      %v3368 = vld [vmem:[%s2915 + $0x710] sm:$0xf]
      %v3369 = vld [vmem:[%s2915 + $0x714] sm:$0xf]
      %v3370 = vld [vmem:[%s2915 + $0x718] sm:$0xf]
      %v3371 = vld [vmem:[%s2915 + $0x71c] sm:$0xf]
      %v3372 = vld [vmem:[%s2915 + $0x720] sm:$0xf]
      %v3373 = vld [vmem:[%s2915 + $0x724] sm:$0xf]
      %v3374 = vld [vmem:[%s2915 + $0x728] sm:$0xf]
      %v3375 = vld [vmem:[%s2915 + $0x72c] sm:$0xf]
      %v3376 = vld [vmem:[%s2915 + $0x730] sm:$0xf]
      %v3377 = vld [vmem:[%s2915 + $0x734] sm:$0xf]
      %v3378 = vld [vmem:[%s2915 + $0x738] sm:$0xf]
      %v3379 = vld [vmem:[%s2915 + $0x73c] sm:$0xf]
      %v3380 = vld [vmem:[%s2915 + $0x740] sm:$0xf]
      %v3381 = vld [vmem:[%s2915 + $0x744] sm:$0xf]
      %v3382 = vld [vmem:[%s2915 + $0x748] sm:$0xf]
      %v3383 = vld [vmem:[%s2915 + $0x74c] sm:$0xf]
      %v3384 = vld [vmem:[%s2915 + $0x750] sm:$0xf]
      %v3385 = vld [vmem:[%s2915 + $0x754] sm:$0xf]
      %v3386 = vld [vmem:[%s2915 + $0x758] sm:$0xf]
      %v3387 = vld [vmem:[%s2915 + $0x75c] sm:$0xf]
      %v3388 = vld [vmem:[%s2915 + $0x760] sm:$0xf]
      %v3389 = vld [vmem:[%s2915 + $0x764] sm:$0xf]
      %v3390 = vld [vmem:[%s2915 + $0x768] sm:$0xf]
      %v3391 = vld [vmem:[%s2915 + $0x76c] sm:$0xf]
      %v3392 = vld [vmem:[%s2915 + $0x770] sm:$0xf]
      %v3393 = vld [vmem:[%s2915 + $0x774] sm:$0xf]
      %v3394 = vld [vmem:[%s2915 + $0x778] sm:$0xf]
      %v3395 = vld [vmem:[%s2915 + $0x77c] sm:$0xf]
      %v3396 = vld [vmem:[%s2915 + $0x780] sm:$0xf]
      %v3397 = vld [vmem:[%s2915 + $0x784] sm:$0xf]
      %v3398 = vld [vmem:[%s2915 + $0x788] sm:$0xf]
      %v3399 = vld [vmem:[%s2915 + $0x78c] sm:$0xf]
      %v3400 = vld [vmem:[%s2915 + $0x790] sm:$0xf]
      %v3401 = vld [vmem:[%s2915 + $0x794] sm:$0xf]
      %v3402 = vld [vmem:[%s2915 + $0x798] sm:$0xf]
      %v3403 = vld [vmem:[%s2915 + $0x79c] sm:$0xf]
      %v3404 = vld [vmem:[%s2915 + $0x7a0] sm:$0xf]
      %v3405 = vld [vmem:[%s2915 + $0x7a4] sm:$0xf]
      %v3406 = vld [vmem:[%s2915 + $0x7a8] sm:$0xf]
      %v3407 = vld [vmem:[%s2915 + $0x7ac] sm:$0xf]
      %v3408 = vld [vmem:[%s2915 + $0x7b0] sm:$0xf]
      %v3409 = vld [vmem:[%s2915 + $0x7b4] sm:$0xf]
      %v3410 = vld [vmem:[%s2915 + $0x7b8] sm:$0xf]
      %v3411 = vld [vmem:[%s2915 + $0x7bc] sm:$0xf]
      %v3412 = vld [vmem:[%s2915 + $0x7c0] sm:$0xf]
      %v3413 = vld [vmem:[%s2915 + $0x7c4] sm:$0xf]
      %v3414 = vld [vmem:[%s2915 + $0x7c8] sm:$0xf]
      %v3415 = vld [vmem:[%s2915 + $0x7cc] sm:$0xf]
      %v3416 = vld [vmem:[%s2915 + $0x7d0] sm:$0xf]
      %v3417 = vld [vmem:[%s2915 + $0x7d4] sm:$0xf]
      %v3418 = vld [vmem:[%s2915 + $0x7d8] sm:$0xf]
      %v3419 = vld [vmem:[%s2915 + $0x7dc] sm:$0xf]
      %v3420 = vld [vmem:[%s2915 + $0x7e0] sm:$0xf]
      %v3421 = vld [vmem:[%s2915 + $0x7e4] sm:$0xf]
      %v3422 = vld [vmem:[%s2915 + $0x7e8] sm:$0xf]
      %v3423 = vld [vmem:[%s2915 + $0x7ec] sm:$0xf]
      %v3424 = vld [vmem:[%s2915 + $0x7f0] sm:$0xf]
      %v3425 = vld [vmem:[%s2915 + $0x7f4] sm:$0xf]
      %v3426 = vld [vmem:[%s2915 + $0x7f8] sm:$0xf]
      %v3427 = vld [vmem:[%s2915 + $0x7fc] sm:$0xf]
      %v3940 = vunpack.c.l.b16 %v2916
      %v3941 = vunpack.c.l.b16 %v2917
      %v3942 = vunpack.c.l.b16 %v2918
      %v3943 = vunpack.c.l.b16 %v2919
      %v3944 = vunpack.c.l.b16 %v2920
      %v3945 = vunpack.c.l.b16 %v2921
      %v3946 = vunpack.c.l.b16 %v2922
      %v3947 = vunpack.c.l.b16 %v2923
      %v3948 = vunpack.c.l.b16 %v2924
      %v3949 = vunpack.c.l.b16 %v2925
      %v3950 = vunpack.c.l.b16 %v2926
      %v3951 = vunpack.c.l.b16 %v2927
      %v3952 = vunpack.c.l.b16 %v2928
      %v3953 = vunpack.c.l.b16 %v2929
      %v3954 = vunpack.c.l.b16 %v2930
      %v3955 = vunpack.c.l.b16 %v2931
      %v3956 = vunpack.c.l.b16 %v2932
      %v3957 = vunpack.c.l.b16 %v2933
      %v3958 = vunpack.c.l.b16 %v2934
      %v3959 = vunpack.c.l.b16 %v2935
      %v3960 = vunpack.c.l.b16 %v2936
      %v3961 = vunpack.c.l.b16 %v2937
      %v3962 = vunpack.c.l.b16 %v2938
      %v3963 = vunpack.c.l.b16 %v2939
      %v3964 = vunpack.c.l.b16 %v2940
      %v3965 = vunpack.c.l.b16 %v2941
      %v3966 = vunpack.c.l.b16 %v2942
      %v3967 = vunpack.c.l.b16 %v2943
      %v3968 = vunpack.c.l.b16 %v2944
      %v3969 = vunpack.c.l.b16 %v2945
      %v3970 = vunpack.c.l.b16 %v2946
      %v3971 = vunpack.c.l.b16 %v2947
      %v3972 = vunpack.c.l.b16 %v2948
      %v3973 = vunpack.c.l.b16 %v2949
      %v3974 = vunpack.c.l.b16 %v2950
      %v3975 = vunpack.c.l.b16 %v2951
      %v3976 = vunpack.c.l.b16 %v2952
      %v3977 = vunpack.c.l.b16 %v2953
      %v3978 = vunpack.c.l.b16 %v2954
      %v3979 = vunpack.c.l.b16 %v2955
      %v3980 = vunpack.c.l.b16 %v2956
      %v3981 = vunpack.c.l.b16 %v2957
      %v3982 = vunpack.c.l.b16 %v2958
      %v3983 = vunpack.c.l.b16 %v2959
      %v3984 = vunpack.c.l.b16 %v2960
      %v3985 = vunpack.c.l.b16 %v2961
      %v3986 = vunpack.c.l.b16 %v2962
      %v3987 = vunpack.c.l.b16 %v2963
      %v3988 = vunpack.c.l.b16 %v2964
      %v3989 = vunpack.c.l.b16 %v2965
      %v3990 = vunpack.c.l.b16 %v2966
      %v3991 = vunpack.c.l.b16 %v2967
      %v3992 = vunpack.c.l.b16 %v2968
      %v3993 = vunpack.c.l.b16 %v2969
      %v3994 = vunpack.c.l.b16 %v2970
      %v3995 = vunpack.c.l.b16 %v2971
      %v3996 = vunpack.c.l.b16 %v2972
      %v3997 = vunpack.c.l.b16 %v2973
      %v3998 = vunpack.c.l.b16 %v2974
      %v3999 = vunpack.c.l.b16 %v2975
      %v4000 = vunpack.c.l.b16 %v2976
      %v4001 = vunpack.c.l.b16 %v2977
      %v4002 = vunpack.c.l.b16 %v2978
      %v4003 = vunpack.c.l.b16 %v2979
      %v4004 = vunpack.c.l.b16 %v2980
      %v4005 = vunpack.c.l.b16 %v2981
      %v4006 = vunpack.c.l.b16 %v2982
      %v4007 = vunpack.c.l.b16 %v2983
      %v4008 = vunpack.c.l.b16 %v2984
      %v4009 = vunpack.c.l.b16 %v2985
      %v4010 = vunpack.c.l.b16 %v2986
      %v4011 = vunpack.c.l.b16 %v2987
      %v4012 = vunpack.c.l.b16 %v2988
      %v4013 = vunpack.c.l.b16 %v2989
      %v4014 = vunpack.c.l.b16 %v2990
      %v4015 = vunpack.c.l.b16 %v2991
      %v4016 = vunpack.c.l.b16 %v2992
      %v4017 = vunpack.c.l.b16 %v2993
      %v4018 = vunpack.c.l.b16 %v2994
      %v4019 = vunpack.c.l.b16 %v2995
      %v4020 = vunpack.c.l.b16 %v2996
      %v4021 = vunpack.c.l.b16 %v2997
      %v4022 = vunpack.c.l.b16 %v2998
      %v4023 = vunpack.c.l.b16 %v2999
      %v4024 = vunpack.c.l.b16 %v3000
      %v4025 = vunpack.c.l.b16 %v3001
      %v4026 = vunpack.c.l.b16 %v3002
      %v4027 = vunpack.c.l.b16 %v3003
      %v4028 = vunpack.c.l.b16 %v3004
      %v4029 = vunpack.c.l.b16 %v3005
      %v4030 = vunpack.c.l.b16 %v3006
      %v4031 = vunpack.c.l.b16 %v3007
      %v4032 = vunpack.c.l.b16 %v3008
      %v4033 = vunpack.c.l.b16 %v3009
      %v4034 = vunpack.c.l.b16 %v3010
      %v4035 = vunpack.c.l.b16 %v3011
      %v4036 = vunpack.c.l.b16 %v3012
      %v4037 = vunpack.c.l.b16 %v3013
      %v4038 = vunpack.c.l.b16 %v3014
      %v4039 = vunpack.c.l.b16 %v3015
      %v4040 = vunpack.c.l.b16 %v3016
      %v4041 = vunpack.c.l.b16 %v3017
      %v4042 = vunpack.c.l.b16 %v3018
      %v4043 = vunpack.c.l.b16 %v3019
      %v4044 = vunpack.c.l.b16 %v3020
      %v4045 = vunpack.c.l.b16 %v3021
      %v4046 = vunpack.c.l.b16 %v3022
      %v4047 = vunpack.c.l.b16 %v3023
      %v4048 = vunpack.c.l.b16 %v3024
      %v4049 = vunpack.c.l.b16 %v3025
      %v4050 = vunpack.c.l.b16 %v3026
      %v4051 = vunpack.c.l.b16 %v3027
      %v4052 = vunpack.c.l.b16 %v3028
      %v4053 = vunpack.c.l.b16 %v3029
      %v4054 = vunpack.c.l.b16 %v3030
      %v4055 = vunpack.c.l.b16 %v3031
      %v4056 = vunpack.c.l.b16 %v3032
      %v4057 = vunpack.c.l.b16 %v3033
      %v4058 = vunpack.c.l.b16 %v3034
      %v4059 = vunpack.c.l.b16 %v3035
      %v4060 = vunpack.c.l.b16 %v3036
      %v4061 = vunpack.c.l.b16 %v3037
      %v4062 = vunpack.c.l.b16 %v3038
      %v4063 = vunpack.c.l.b16 %v3039
      %v4064 = vunpack.c.l.b16 %v3040
      %v4065 = vunpack.c.l.b16 %v3041
      %v4066 = vunpack.c.l.b16 %v3042
      %v4067 = vunpack.c.l.b16 %v3043
      %v4068 = vunpack.c.l.b16 %v3044
      %v4069 = vunpack.c.l.b16 %v3045
      %v4070 = vunpack.c.l.b16 %v3046
      %v4071 = vunpack.c.l.b16 %v3047
      %v4072 = vunpack.c.l.b16 %v3048
      %v4073 = vunpack.c.l.b16 %v3049
      %v4074 = vunpack.c.l.b16 %v3050
      %v4075 = vunpack.c.l.b16 %v3051
      %v4076 = vunpack.c.l.b16 %v3052
      %v4077 = vunpack.c.l.b16 %v3053
      %v4078 = vunpack.c.l.b16 %v3054
      %v4079 = vunpack.c.l.b16 %v3055
      %v4080 = vunpack.c.l.b16 %v3056
      %v4081 = vunpack.c.l.b16 %v3057
      %v4082 = vunpack.c.l.b16 %v3058
      %v4083 = vunpack.c.l.b16 %v3059
      %v4084 = vunpack.c.l.b16 %v3060
      %v4085 = vunpack.c.l.b16 %v3061
      %v4086 = vunpack.c.l.b16 %v3062
      %v4087 = vunpack.c.l.b16 %v3063
      %v4088 = vunpack.c.l.b16 %v3064
      %v4089 = vunpack.c.l.b16 %v3065
      %v4090 = vunpack.c.l.b16 %v3066
      %v4091 = vunpack.c.l.b16 %v3067
      %v4092 = vunpack.c.l.b16 %v3068
      %v4093 = vunpack.c.l.b16 %v3069
      %v4094 = vunpack.c.l.b16 %v3070
      %v4095 = vunpack.c.l.b16 %v3071
      %v4096 = vunpack.c.l.b16 %v3072
      %v4097 = vunpack.c.l.b16 %v3073
      %v4098 = vunpack.c.l.b16 %v3074
      %v4099 = vunpack.c.l.b16 %v3075
      %v4100 = vunpack.c.l.b16 %v3076
      %v4101 = vunpack.c.l.b16 %v3077
      %v4102 = vunpack.c.l.b16 %v3078
      %v4103 = vunpack.c.l.b16 %v3079
      %v4104 = vunpack.c.l.b16 %v3080
      %v4105 = vunpack.c.l.b16 %v3081
      %v4106 = vunpack.c.l.b16 %v3082
      %v4107 = vunpack.c.l.b16 %v3083
      %v4108 = vunpack.c.l.b16 %v3084
      %v4109 = vunpack.c.l.b16 %v3085
      %v4110 = vunpack.c.l.b16 %v3086
      %v4111 = vunpack.c.l.b16 %v3087
      %v4112 = vunpack.c.l.b16 %v3088
      %v4113 = vunpack.c.l.b16 %v3089
      %v4114 = vunpack.c.l.b16 %v3090
      %v4115 = vunpack.c.l.b16 %v3091
      %v4116 = vunpack.c.l.b16 %v3092
      %v4117 = vunpack.c.l.b16 %v3093
      %v4118 = vunpack.c.l.b16 %v3094
      %v4119 = vunpack.c.l.b16 %v3095
      %v4120 = vunpack.c.l.b16 %v3096
      %v4121 = vunpack.c.l.b16 %v3097
      %v4122 = vunpack.c.l.b16 %v3098
      %v4123 = vunpack.c.l.b16 %v3099
      %v4124 = vunpack.c.l.b16 %v3100
      %v4125 = vunpack.c.l.b16 %v3101
      %v4126 = vunpack.c.l.b16 %v3102
      %v4127 = vunpack.c.l.b16 %v3103
      %v4128 = vunpack.c.l.b16 %v3104
      %v4129 = vunpack.c.l.b16 %v3105
      %v4130 = vunpack.c.l.b16 %v3106
      %v4131 = vunpack.c.l.b16 %v3107
      %v4132 = vunpack.c.l.b16 %v3108
      %v4133 = vunpack.c.l.b16 %v3109
      %v4134 = vunpack.c.l.b16 %v3110
      %v4135 = vunpack.c.l.b16 %v3111
      %v4136 = vunpack.c.l.b16 %v3112
      %v4137 = vunpack.c.l.b16 %v3113
      %v4138 = vunpack.c.l.b16 %v3114
      %v4139 = vunpack.c.l.b16 %v3115
      %v4140 = vunpack.c.l.b16 %v3116
      %v4141 = vunpack.c.l.b16 %v3117
      %v4142 = vunpack.c.l.b16 %v3118
      %v4143 = vunpack.c.l.b16 %v3119
      %v4144 = vunpack.c.l.b16 %v3120
      %v4145 = vunpack.c.l.b16 %v3121
      %v4146 = vunpack.c.l.b16 %v3122
      %v4147 = vunpack.c.l.b16 %v3123
      %v4148 = vunpack.c.l.b16 %v3124
      %v4149 = vunpack.c.l.b16 %v3125
      %v4150 = vunpack.c.l.b16 %v3126
      %v4151 = vunpack.c.l.b16 %v3127
      %v4152 = vunpack.c.l.b16 %v3128
      %v4153 = vunpack.c.l.b16 %v3129
      %v4154 = vunpack.c.l.b16 %v3130
      %v4155 = vunpack.c.l.b16 %v3131
      %v4156 = vunpack.c.l.b16 %v3132
      %v4157 = vunpack.c.l.b16 %v3133
      %v4158 = vunpack.c.l.b16 %v3134
      %v4159 = vunpack.c.l.b16 %v3135
      %v4160 = vunpack.c.l.b16 %v3136
      %v4161 = vunpack.c.l.b16 %v3137
      %v4162 = vunpack.c.l.b16 %v3138
      %v4163 = vunpack.c.l.b16 %v3139
      %v4164 = vunpack.c.l.b16 %v3140
      %v4165 = vunpack.c.l.b16 %v3141
      %v4166 = vunpack.c.l.b16 %v3142
      %v4167 = vunpack.c.l.b16 %v3143
      %v4168 = vunpack.c.l.b16 %v3144
      %v4169 = vunpack.c.l.b16 %v3145
      %v4170 = vunpack.c.l.b16 %v3146
      %v4171 = vunpack.c.l.b16 %v3147
      %v4172 = vunpack.c.l.b16 %v3148
      %v4173 = vunpack.c.l.b16 %v3149
      %v4174 = vunpack.c.l.b16 %v3150
      %v4175 = vunpack.c.l.b16 %v3151
      %v4176 = vunpack.c.l.b16 %v3152
      %v4177 = vunpack.c.l.b16 %v3153
      %v4178 = vunpack.c.l.b16 %v3154
      %v4179 = vunpack.c.l.b16 %v3155
      %v4180 = vunpack.c.l.b16 %v3156
      %v4181 = vunpack.c.l.b16 %v3157
      %v4182 = vunpack.c.l.b16 %v3158
      %v4183 = vunpack.c.l.b16 %v3159
      %v4184 = vunpack.c.l.b16 %v3160
      %v4185 = vunpack.c.l.b16 %v3161
      %v4186 = vunpack.c.l.b16 %v3162
      %v4187 = vunpack.c.l.b16 %v3163
      %v4188 = vunpack.c.l.b16 %v3164
      %v4189 = vunpack.c.l.b16 %v3165
      %v4190 = vunpack.c.l.b16 %v3166
      %v4191 = vunpack.c.l.b16 %v3167
      %v4192 = vunpack.c.l.b16 %v3168
      %v4193 = vunpack.c.l.b16 %v3169
      %v4194 = vunpack.c.l.b16 %v3170
      %v4195 = vunpack.c.l.b16 %v3171
      %v4196 = vunpack.c.l.b16 %v3172
      %v4197 = vunpack.c.l.b16 %v3173
      %v4198 = vunpack.c.l.b16 %v3174
      %v4199 = vunpack.c.l.b16 %v3175
      %v4200 = vunpack.c.l.b16 %v3176
      %v4201 = vunpack.c.l.b16 %v3177
      %v4202 = vunpack.c.l.b16 %v3178
      %v4203 = vunpack.c.l.b16 %v3179
      %v4204 = vunpack.c.l.b16 %v3180
      %v4205 = vunpack.c.l.b16 %v3181
      %v4206 = vunpack.c.l.b16 %v3182
      %v4207 = vunpack.c.l.b16 %v3183
      %v4208 = vunpack.c.l.b16 %v3184
      %v4209 = vunpack.c.l.b16 %v3185
      %v4210 = vunpack.c.l.b16 %v3186
      %v4211 = vunpack.c.l.b16 %v3187
      %v4212 = vunpack.c.l.b16 %v3188
      %v4213 = vunpack.c.l.b16 %v3189
      %v4214 = vunpack.c.l.b16 %v3190
      %v4215 = vunpack.c.l.b16 %v3191
      %v4216 = vunpack.c.l.b16 %v3192
      %v4217 = vunpack.c.l.b16 %v3193
      %v4218 = vunpack.c.l.b16 %v3194
      %v4219 = vunpack.c.l.b16 %v3195
      %v4220 = vunpack.c.l.b16 %v3196
      %v4221 = vunpack.c.l.b16 %v3197
      %v4222 = vunpack.c.l.b16 %v3198
      %v4223 = vunpack.c.l.b16 %v3199
      %v4224 = vunpack.c.l.b16 %v3200
      %v4225 = vunpack.c.l.b16 %v3201
      %v4226 = vunpack.c.l.b16 %v3202
      %v4227 = vunpack.c.l.b16 %v3203
      %v4228 = vunpack.c.l.b16 %v3204
      %v4229 = vunpack.c.l.b16 %v3205
      %v4230 = vunpack.c.l.b16 %v3206
      %v4231 = vunpack.c.l.b16 %v3207
      %v4232 = vunpack.c.l.b16 %v3208
      %v4233 = vunpack.c.l.b16 %v3209
      %v4234 = vunpack.c.l.b16 %v3210
      %v4235 = vunpack.c.l.b16 %v3211
      %v4236 = vunpack.c.l.b16 %v3212
      %v4237 = vunpack.c.l.b16 %v3213
      %v4238 = vunpack.c.l.b16 %v3214
      %v4239 = vunpack.c.l.b16 %v3215
      %v4240 = vunpack.c.l.b16 %v3216
      %v4241 = vunpack.c.l.b16 %v3217
      %v4242 = vunpack.c.l.b16 %v3218
      %v4243 = vunpack.c.l.b16 %v3219
      %v4244 = vunpack.c.l.b16 %v3220
      %v4245 = vunpack.c.l.b16 %v3221
      %v4246 = vunpack.c.l.b16 %v3222
      %v4247 = vunpack.c.l.b16 %v3223
      %v4248 = vunpack.c.l.b16 %v3224
      %v4249 = vunpack.c.l.b16 %v3225
      %v4250 = vunpack.c.l.b16 %v3226
      %v4251 = vunpack.c.l.b16 %v3227
      %v4252 = vunpack.c.l.b16 %v3228
      %v4253 = vunpack.c.l.b16 %v3229
      %v4254 = vunpack.c.l.b16 %v3230
      %v4255 = vunpack.c.l.b16 %v3231
      %v4256 = vunpack.c.l.b16 %v3232
      %v4257 = vunpack.c.l.b16 %v3233
      %v4258 = vunpack.c.l.b16 %v3234
      %v4259 = vunpack.c.l.b16 %v3235
      %v4260 = vunpack.c.l.b16 %v3236
      %v4261 = vunpack.c.l.b16 %v3237
      %v4262 = vunpack.c.l.b16 %v3238
      %v4263 = vunpack.c.l.b16 %v3239
      %v4264 = vunpack.c.l.b16 %v3240
      %v4265 = vunpack.c.l.b16 %v3241
      %v4266 = vunpack.c.l.b16 %v3242
      %v4267 = vunpack.c.l.b16 %v3243
      %v4268 = vunpack.c.l.b16 %v3244
      %v4269 = vunpack.c.l.b16 %v3245
      %v4270 = vunpack.c.l.b16 %v3246
      %v4271 = vunpack.c.l.b16 %v3247
      %v4272 = vunpack.c.l.b16 %v3248
      %v4273 = vunpack.c.l.b16 %v3249
      %v4274 = vunpack.c.l.b16 %v3250
      %v4275 = vunpack.c.l.b16 %v3251
      %v4276 = vunpack.c.l.b16 %v3252
      %v4277 = vunpack.c.l.b16 %v3253
      %v4278 = vunpack.c.l.b16 %v3254
      %v4279 = vunpack.c.l.b16 %v3255
      %v4280 = vunpack.c.l.b16 %v3256
      %v4281 = vunpack.c.l.b16 %v3257
      %v4282 = vunpack.c.l.b16 %v3258
      %v4283 = vunpack.c.l.b16 %v3259
      %v4284 = vunpack.c.l.b16 %v3260
      %v4285 = vunpack.c.l.b16 %v3261
      %v4286 = vunpack.c.l.b16 %v3262
      %v4287 = vunpack.c.l.b16 %v3263
      %v4288 = vunpack.c.l.b16 %v3264
      %v4289 = vunpack.c.l.b16 %v3265
      %v4290 = vunpack.c.l.b16 %v3266
      %v4291 = vunpack.c.l.b16 %v3267
      %v4292 = vunpack.c.l.b16 %v3268
      %v4293 = vunpack.c.l.b16 %v3269
      %v4294 = vunpack.c.l.b16 %v3270
      %v4295 = vunpack.c.l.b16 %v3271
      %v4296 = vunpack.c.l.b16 %v3272
      %v4297 = vunpack.c.l.b16 %v3273
      %v4298 = vunpack.c.l.b16 %v3274
      %v4299 = vunpack.c.l.b16 %v3275
      %v4300 = vunpack.c.l.b16 %v3276
      %v4301 = vunpack.c.l.b16 %v3277
      %v4302 = vunpack.c.l.b16 %v3278
      %v4303 = vunpack.c.l.b16 %v3279
      %v4304 = vunpack.c.l.b16 %v3280
      %v4305 = vunpack.c.l.b16 %v3281
      %v4306 = vunpack.c.l.b16 %v3282
      %v4307 = vunpack.c.l.b16 %v3283
      %v4308 = vunpack.c.l.b16 %v3284
      %v4309 = vunpack.c.l.b16 %v3285
      %v4310 = vunpack.c.l.b16 %v3286
      %v4311 = vunpack.c.l.b16 %v3287
      %v4312 = vunpack.c.l.b16 %v3288
      %v4313 = vunpack.c.l.b16 %v3289
      %v4314 = vunpack.c.l.b16 %v3290
      %v4315 = vunpack.c.l.b16 %v3291
      %v4316 = vunpack.c.l.b16 %v3292
      %v4317 = vunpack.c.l.b16 %v3293
      %v4318 = vunpack.c.l.b16 %v3294
      %v4319 = vunpack.c.l.b16 %v3295
      %v4320 = vunpack.c.l.b16 %v3296
      %v4321 = vunpack.c.l.b16 %v3297
      %v4322 = vunpack.c.l.b16 %v3298
      %v4323 = vunpack.c.l.b16 %v3299
      %v4324 = vunpack.c.l.b16 %v3300
      %v4325 = vunpack.c.l.b16 %v3301
      %v4326 = vunpack.c.l.b16 %v3302
      %v4327 = vunpack.c.l.b16 %v3303
      %v4328 = vunpack.c.l.b16 %v3304
      %v4329 = vunpack.c.l.b16 %v3305
      %v4330 = vunpack.c.l.b16 %v3306
      %v4331 = vunpack.c.l.b16 %v3307
      %v4332 = vunpack.c.l.b16 %v3308
      %v4333 = vunpack.c.l.b16 %v3309
      %v4334 = vunpack.c.l.b16 %v3310
      %v4335 = vunpack.c.l.b16 %v3311
      %v4336 = vunpack.c.l.b16 %v3312
      %v4337 = vunpack.c.l.b16 %v3313
      %v4338 = vunpack.c.l.b16 %v3314
      %v4339 = vunpack.c.l.b16 %v3315
      %v4340 = vunpack.c.l.b16 %v3316
      %v4341 = vunpack.c.l.b16 %v3317
      %v4342 = vunpack.c.l.b16 %v3318
      %v4343 = vunpack.c.l.b16 %v3319
      %v4344 = vunpack.c.l.b16 %v3320
      %v4345 = vunpack.c.l.b16 %v3321
      %v4346 = vunpack.c.l.b16 %v3322
      %v4347 = vunpack.c.l.b16 %v3323
      %v4348 = vunpack.c.l.b16 %v3324
      %v4349 = vunpack.c.l.b16 %v3325
      %v4350 = vunpack.c.l.b16 %v3326
      %v4351 = vunpack.c.l.b16 %v3327
      %v4352 = vunpack.c.l.b16 %v3328
      %v4353 = vunpack.c.l.b16 %v3329
      %v4354 = vunpack.c.l.b16 %v3330
      %v4355 = vunpack.c.l.b16 %v3331
      %v4356 = vunpack.c.l.b16 %v3332
      %v4357 = vunpack.c.l.b16 %v3333
      %v4358 = vunpack.c.l.b16 %v3334
      %v4359 = vunpack.c.l.b16 %v3335
      %v4360 = vunpack.c.l.b16 %v3336
      %v4361 = vunpack.c.l.b16 %v3337
      %v4362 = vunpack.c.l.b16 %v3338
      %v4363 = vunpack.c.l.b16 %v3339
      %v4364 = vunpack.c.l.b16 %v3340
      %v4365 = vunpack.c.l.b16 %v3341
      %v4366 = vunpack.c.l.b16 %v3342
      %v4367 = vunpack.c.l.b16 %v3343
      %v4368 = vunpack.c.l.b16 %v3344
      %v4369 = vunpack.c.l.b16 %v3345
      %v4370 = vunpack.c.l.b16 %v3346
      %v4371 = vunpack.c.l.b16 %v3347
      %v4372 = vunpack.c.l.b16 %v3348
      %v4373 = vunpack.c.l.b16 %v3349
      %v4374 = vunpack.c.l.b16 %v3350
      %v4375 = vunpack.c.l.b16 %v3351
      %v4376 = vunpack.c.l.b16 %v3352
      %v4377 = vunpack.c.l.b16 %v3353
      %v4378 = vunpack.c.l.b16 %v3354
      %v4379 = vunpack.c.l.b16 %v3355
      %v4380 = vunpack.c.l.b16 %v3356
      %v4381 = vunpack.c.l.b16 %v3357
      %v4382 = vunpack.c.l.b16 %v3358
      %v4383 = vunpack.c.l.b16 %v3359
      %v4384 = vunpack.c.l.b16 %v3360
      %v4385 = vunpack.c.l.b16 %v3361
      %v4386 = vunpack.c.l.b16 %v3362
      %v4387 = vunpack.c.l.b16 %v3363
      %v4388 = vunpack.c.l.b16 %v3364
      %v4389 = vunpack.c.l.b16 %v3365
      %v4390 = vunpack.c.l.b16 %v3366
      %v4391 = vunpack.c.l.b16 %v3367
      %v4392 = vunpack.c.l.b16 %v3368
      %v4393 = vunpack.c.l.b16 %v3369
      %v4394 = vunpack.c.l.b16 %v3370
      %v4395 = vunpack.c.l.b16 %v3371
      %v4396 = vunpack.c.l.b16 %v3372
      %v4397 = vunpack.c.l.b16 %v3373
      %v4398 = vunpack.c.l.b16 %v3374
      %v4399 = vunpack.c.l.b16 %v3375
      %v4400 = vunpack.c.l.b16 %v3376
      %v4401 = vunpack.c.l.b16 %v3377
      %v4402 = vunpack.c.l.b16 %v3378
      %v4403 = vunpack.c.l.b16 %v3379
      %v4404 = vunpack.c.l.b16 %v3380
      %v4405 = vunpack.c.l.b16 %v3381
      %v4406 = vunpack.c.l.b16 %v3382
      %v4407 = vunpack.c.l.b16 %v3383
      %v4408 = vunpack.c.l.b16 %v3384
      %v4409 = vunpack.c.l.b16 %v3385
      %v4410 = vunpack.c.l.b16 %v3386
      %v4411 = vunpack.c.l.b16 %v3387
      %v4412 = vunpack.c.l.b16 %v3388
      %v4413 = vunpack.c.l.b16 %v3389
      %v4414 = vunpack.c.l.b16 %v3390
      %v4415 = vunpack.c.l.b16 %v3391
      %v4416 = vunpack.c.l.b16 %v3392
      %v4417 = vunpack.c.l.b16 %v3393
      %v4418 = vunpack.c.l.b16 %v3394
      %v4419 = vunpack.c.l.b16 %v3395
      %v4420 = vunpack.c.l.b16 %v3396
      %v4421 = vunpack.c.l.b16 %v3397
      %v4422 = vunpack.c.l.b16 %v3398
      %v4423 = vunpack.c.l.b16 %v3399
      %v4424 = vunpack.c.l.b16 %v3400
      %v4425 = vunpack.c.l.b16 %v3401
      %v4426 = vunpack.c.l.b16 %v3402
      %v4427 = vunpack.c.l.b16 %v3403
      %v4428 = vunpack.c.l.b16 %v3404
      %v4429 = vunpack.c.l.b16 %v3405
      %v4430 = vunpack.c.l.b16 %v3406
      %v4431 = vunpack.c.l.b16 %v3407
      %v4432 = vunpack.c.l.b16 %v3408
      %v4433 = vunpack.c.l.b16 %v3409
      %v4434 = vunpack.c.l.b16 %v3410
      %v4435 = vunpack.c.l.b16 %v3411
      %v4436 = vunpack.c.l.b16 %v3412
      %v4437 = vunpack.c.l.b16 %v3413
      %v4438 = vunpack.c.l.b16 %v3414
      %v4439 = vunpack.c.l.b16 %v3415
      %v4440 = vunpack.c.l.b16 %v3416
      %v4441 = vunpack.c.l.b16 %v3417
      %v4442 = vunpack.c.l.b16 %v3418
      %v4443 = vunpack.c.l.b16 %v3419
      %v4444 = vunpack.c.l.b16 %v3420
      %v4445 = vunpack.c.l.b16 %v3421
      %v4446 = vunpack.c.l.b16 %v3422
      %v4447 = vunpack.c.l.b16 %v3423
      %v4448 = vunpack.c.l.b16 %v3424
      %v4449 = vunpack.c.l.b16 %v3425
      %v4450 = vunpack.c.l.b16 %v3426
      %v4451 = vunpack.c.l.b16 %v3427
      %v4452 = vpack.c.b16 %v3941, %v3940
      %v4453 = vpack.c.b16 %v3943, %v3942
      %v4454 = vpack.c.b16 %v3945, %v3944
      %v4455 = vpack.c.b16 %v3947, %v3946
      %v4456 = vpack.c.b16 %v3949, %v3948
      %v4457 = vpack.c.b16 %v3951, %v3950
      %v4458 = vpack.c.b16 %v3953, %v3952
      %v4459 = vpack.c.b16 %v3955, %v3954
      %v4460 = vpack.c.b16 %v3957, %v3956
      %v4461 = vpack.c.b16 %v3959, %v3958
      %v4462 = vpack.c.b16 %v3961, %v3960
      %v4463 = vpack.c.b16 %v3963, %v3962
      %v4464 = vpack.c.b16 %v3965, %v3964
      %v4465 = vpack.c.b16 %v3967, %v3966
      %v4466 = vpack.c.b16 %v3969, %v3968
      %v4467 = vpack.c.b16 %v3971, %v3970
      %v4468 = vpack.c.b16 %v3973, %v3972
      %v4469 = vpack.c.b16 %v3975, %v3974
      %v4470 = vpack.c.b16 %v3977, %v3976
      %v4471 = vpack.c.b16 %v3979, %v3978
      %v4472 = vpack.c.b16 %v3981, %v3980
      %v4473 = vpack.c.b16 %v3983, %v3982
      %v4474 = vpack.c.b16 %v3985, %v3984
      %v4475 = vpack.c.b16 %v3987, %v3986
      %v4476 = vpack.c.b16 %v3989, %v3988
      %v4477 = vpack.c.b16 %v3991, %v3990
      %v4478 = vpack.c.b16 %v3993, %v3992
      %v4479 = vpack.c.b16 %v3995, %v3994
      %v4480 = vpack.c.b16 %v3997, %v3996
      %v4481 = vpack.c.b16 %v3999, %v3998
      %v4482 = vpack.c.b16 %v4001, %v4000
      %v4483 = vpack.c.b16 %v4003, %v4002
      %v4484 = vpack.c.b16 %v4005, %v4004
      %v4485 = vpack.c.b16 %v4007, %v4006
      %v4486 = vpack.c.b16 %v4009, %v4008
      %v4487 = vpack.c.b16 %v4011, %v4010
      %v4488 = vpack.c.b16 %v4013, %v4012
      %v4489 = vpack.c.b16 %v4015, %v4014
      %v4490 = vpack.c.b16 %v4017, %v4016
      %v4491 = vpack.c.b16 %v4019, %v4018
      %v4492 = vpack.c.b16 %v4021, %v4020
      %v4493 = vpack.c.b16 %v4023, %v4022
      %v4494 = vpack.c.b16 %v4025, %v4024
      %v4495 = vpack.c.b16 %v4027, %v4026
      %v4496 = vpack.c.b16 %v4029, %v4028
      %v4497 = vpack.c.b16 %v4031, %v4030
      %v4498 = vpack.c.b16 %v4033, %v4032
      %v4499 = vpack.c.b16 %v4035, %v4034
      %v4500 = vpack.c.b16 %v4037, %v4036
      %v4501 = vpack.c.b16 %v4039, %v4038
      %v4502 = vpack.c.b16 %v4041, %v4040
      %v4503 = vpack.c.b16 %v4043, %v4042
      %v4504 = vpack.c.b16 %v4045, %v4044
      %v4505 = vpack.c.b16 %v4047, %v4046
      %v4506 = vpack.c.b16 %v4049, %v4048
      %v4507 = vpack.c.b16 %v4051, %v4050
      %v4508 = vpack.c.b16 %v4053, %v4052
      %v4509 = vpack.c.b16 %v4055, %v4054
      %v4510 = vpack.c.b16 %v4057, %v4056
      %v4511 = vpack.c.b16 %v4059, %v4058
      %v4512 = vpack.c.b16 %v4061, %v4060
      %v4513 = vpack.c.b16 %v4063, %v4062
      %v4514 = vpack.c.b16 %v4065, %v4064
      %v4515 = vpack.c.b16 %v4067, %v4066
      %v4516 = vpack.c.b16 %v4069, %v4068
      %v4517 = vpack.c.b16 %v4071, %v4070
      %v4518 = vpack.c.b16 %v4073, %v4072
      %v4519 = vpack.c.b16 %v4075, %v4074
      %v4520 = vpack.c.b16 %v4077, %v4076
      %v4521 = vpack.c.b16 %v4079, %v4078
      %v4522 = vpack.c.b16 %v4081, %v4080
      %v4523 = vpack.c.b16 %v4083, %v4082
      %v4524 = vpack.c.b16 %v4085, %v4084
      %v4525 = vpack.c.b16 %v4087, %v4086
      %v4526 = vpack.c.b16 %v4089, %v4088
      %v4527 = vpack.c.b16 %v4091, %v4090
      %v4528 = vpack.c.b16 %v4093, %v4092
      %v4529 = vpack.c.b16 %v4095, %v4094
      %v4530 = vpack.c.b16 %v4097, %v4096
      %v4531 = vpack.c.b16 %v4099, %v4098
      %v4532 = vpack.c.b16 %v4101, %v4100
      %v4533 = vpack.c.b16 %v4103, %v4102
      %v4534 = vpack.c.b16 %v4105, %v4104
      %v4535 = vpack.c.b16 %v4107, %v4106
      %v4536 = vpack.c.b16 %v4109, %v4108
      %v4537 = vpack.c.b16 %v4111, %v4110
      %v4538 = vpack.c.b16 %v4113, %v4112
      %v4539 = vpack.c.b16 %v4115, %v4114
      %v4540 = vpack.c.b16 %v4117, %v4116
      %v4541 = vpack.c.b16 %v4119, %v4118
      %v4542 = vpack.c.b16 %v4121, %v4120
      %v4543 = vpack.c.b16 %v4123, %v4122
      %v4544 = vpack.c.b16 %v4125, %v4124
      %v4545 = vpack.c.b16 %v4127, %v4126
      %v4546 = vpack.c.b16 %v4129, %v4128
      %v4547 = vpack.c.b16 %v4131, %v4130
      %v4548 = vpack.c.b16 %v4133, %v4132
      %v4549 = vpack.c.b16 %v4135, %v4134
      %v4550 = vpack.c.b16 %v4137, %v4136
      %v4551 = vpack.c.b16 %v4139, %v4138
      %v4552 = vpack.c.b16 %v4141, %v4140
      %v4553 = vpack.c.b16 %v4143, %v4142
      %v4554 = vpack.c.b16 %v4145, %v4144
      %v4555 = vpack.c.b16 %v4147, %v4146
      %v4556 = vpack.c.b16 %v4149, %v4148
      %v4557 = vpack.c.b16 %v4151, %v4150
      %v4558 = vpack.c.b16 %v4153, %v4152
      %v4559 = vpack.c.b16 %v4155, %v4154
      %v4560 = vpack.c.b16 %v4157, %v4156
      %v4561 = vpack.c.b16 %v4159, %v4158
      %v4562 = vpack.c.b16 %v4161, %v4160
      %v4563 = vpack.c.b16 %v4163, %v4162
      %v4564 = vpack.c.b16 %v4165, %v4164
      %v4565 = vpack.c.b16 %v4167, %v4166
      %v4566 = vpack.c.b16 %v4169, %v4168
      %v4567 = vpack.c.b16 %v4171, %v4170
      %v4568 = vpack.c.b16 %v4173, %v4172
      %v4569 = vpack.c.b16 %v4175, %v4174
      %v4570 = vpack.c.b16 %v4177, %v4176
      %v4571 = vpack.c.b16 %v4179, %v4178
      %v4572 = vpack.c.b16 %v4181, %v4180
      %v4573 = vpack.c.b16 %v4183, %v4182
      %v4574 = vpack.c.b16 %v4185, %v4184
      %v4575 = vpack.c.b16 %v4187, %v4186
      %v4576 = vpack.c.b16 %v4189, %v4188
      %v4577 = vpack.c.b16 %v4191, %v4190
      %v4578 = vpack.c.b16 %v4193, %v4192
      %v4579 = vpack.c.b16 %v4195, %v4194
      %v4580 = vpack.c.b16 %v4197, %v4196
      %v4581 = vpack.c.b16 %v4199, %v4198
      %v4582 = vpack.c.b16 %v4201, %v4200
      %v4583 = vpack.c.b16 %v4203, %v4202
      %v4584 = vpack.c.b16 %v4205, %v4204
      %v4585 = vpack.c.b16 %v4207, %v4206
      %v4586 = vpack.c.b16 %v4209, %v4208
      %v4587 = vpack.c.b16 %v4211, %v4210
      %v4588 = vpack.c.b16 %v4213, %v4212
      %v4589 = vpack.c.b16 %v4215, %v4214
      %v4590 = vpack.c.b16 %v4217, %v4216
      %v4591 = vpack.c.b16 %v4219, %v4218
      %v4592 = vpack.c.b16 %v4221, %v4220
      %v4593 = vpack.c.b16 %v4223, %v4222
      %v4594 = vpack.c.b16 %v4225, %v4224
      %v4595 = vpack.c.b16 %v4227, %v4226
      %v4596 = vpack.c.b16 %v4229, %v4228
      %v4597 = vpack.c.b16 %v4231, %v4230
      %v4598 = vpack.c.b16 %v4233, %v4232
      %v4599 = vpack.c.b16 %v4235, %v4234
      %v4600 = vpack.c.b16 %v4237, %v4236
      %v4601 = vpack.c.b16 %v4239, %v4238
      %v4602 = vpack.c.b16 %v4241, %v4240
      %v4603 = vpack.c.b16 %v4243, %v4242
      %v4604 = vpack.c.b16 %v4245, %v4244
      %v4605 = vpack.c.b16 %v4247, %v4246
      %v4606 = vpack.c.b16 %v4249, %v4248
      %v4607 = vpack.c.b16 %v4251, %v4250
      %v4608 = vpack.c.b16 %v4253, %v4252
      %v4609 = vpack.c.b16 %v4255, %v4254
      %v4610 = vpack.c.b16 %v4257, %v4256
      %v4611 = vpack.c.b16 %v4259, %v4258
      %v4612 = vpack.c.b16 %v4261, %v4260
      %v4613 = vpack.c.b16 %v4263, %v4262
      %v4614 = vpack.c.b16 %v4265, %v4264
      %v4615 = vpack.c.b16 %v4267, %v4266
      %v4616 = vpack.c.b16 %v4269, %v4268
      %v4617 = vpack.c.b16 %v4271, %v4270
      %v4618 = vpack.c.b16 %v4273, %v4272
      %v4619 = vpack.c.b16 %v4275, %v4274
      %v4620 = vpack.c.b16 %v4277, %v4276
      %v4621 = vpack.c.b16 %v4279, %v4278
      %v4622 = vpack.c.b16 %v4281, %v4280
      %v4623 = vpack.c.b16 %v4283, %v4282
      %v4624 = vpack.c.b16 %v4285, %v4284
      %v4625 = vpack.c.b16 %v4287, %v4286
      %v4626 = vpack.c.b16 %v4289, %v4288
      %v4627 = vpack.c.b16 %v4291, %v4290
      %v4628 = vpack.c.b16 %v4293, %v4292
      %v4629 = vpack.c.b16 %v4295, %v4294
      %v4630 = vpack.c.b16 %v4297, %v4296
      %v4631 = vpack.c.b16 %v4299, %v4298
      %v4632 = vpack.c.b16 %v4301, %v4300
      %v4633 = vpack.c.b16 %v4303, %v4302
      %v4634 = vpack.c.b16 %v4305, %v4304
      %v4635 = vpack.c.b16 %v4307, %v4306
      %v4636 = vpack.c.b16 %v4309, %v4308
      %v4637 = vpack.c.b16 %v4311, %v4310
      %v4638 = vpack.c.b16 %v4313, %v4312
      %v4639 = vpack.c.b16 %v4315, %v4314
      %v4640 = vpack.c.b16 %v4317, %v4316
      %v4641 = vpack.c.b16 %v4319, %v4318
      %v4642 = vpack.c.b16 %v4321, %v4320
      %v4643 = vpack.c.b16 %v4323, %v4322
      %v4644 = vpack.c.b16 %v4325, %v4324
      %v4645 = vpack.c.b16 %v4327, %v4326
      %v4646 = vpack.c.b16 %v4329, %v4328
      %v4647 = vpack.c.b16 %v4331, %v4330
      %v4648 = vpack.c.b16 %v4333, %v4332
      %v4649 = vpack.c.b16 %v4335, %v4334
      %v4650 = vpack.c.b16 %v4337, %v4336
      %v4651 = vpack.c.b16 %v4339, %v4338
      %v4652 = vpack.c.b16 %v4341, %v4340
      %v4653 = vpack.c.b16 %v4343, %v4342
      %v4654 = vpack.c.b16 %v4345, %v4344
      %v4655 = vpack.c.b16 %v4347, %v4346
      %v4656 = vpack.c.b16 %v4349, %v4348
      %v4657 = vpack.c.b16 %v4351, %v4350
      %v4658 = vpack.c.b16 %v4353, %v4352
      %v4659 = vpack.c.b16 %v4355, %v4354
      %v4660 = vpack.c.b16 %v4357, %v4356
      %v4661 = vpack.c.b16 %v4359, %v4358
      %v4662 = vpack.c.b16 %v4361, %v4360
      %v4663 = vpack.c.b16 %v4363, %v4362
      %v4664 = vpack.c.b16 %v4365, %v4364
      %v4665 = vpack.c.b16 %v4367, %v4366
      %v4666 = vpack.c.b16 %v4369, %v4368
      %v4667 = vpack.c.b16 %v4371, %v4370
      %v4668 = vpack.c.b16 %v4373, %v4372
      %v4669 = vpack.c.b16 %v4375, %v4374
      %v4670 = vpack.c.b16 %v4377, %v4376
      %v4671 = vpack.c.b16 %v4379, %v4378
      %v4672 = vpack.c.b16 %v4381, %v4380
      %v4673 = vpack.c.b16 %v4383, %v4382
      %v4674 = vpack.c.b16 %v4385, %v4384
      %v4675 = vpack.c.b16 %v4387, %v4386
      %v4676 = vpack.c.b16 %v4389, %v4388
      %v4677 = vpack.c.b16 %v4391, %v4390
      %v4678 = vpack.c.b16 %v4393, %v4392
      %v4679 = vpack.c.b16 %v4395, %v4394
      %v4680 = vpack.c.b16 %v4397, %v4396
      %v4681 = vpack.c.b16 %v4399, %v4398
      %v4682 = vpack.c.b16 %v4401, %v4400
      %v4683 = vpack.c.b16 %v4403, %v4402
      %v4684 = vpack.c.b16 %v4405, %v4404
      %v4685 = vpack.c.b16 %v4407, %v4406
      %v4686 = vpack.c.b16 %v4409, %v4408
      %v4687 = vpack.c.b16 %v4411, %v4410
      %v4688 = vpack.c.b16 %v4413, %v4412
      %v4689 = vpack.c.b16 %v4415, %v4414
      %v4690 = vpack.c.b16 %v4417, %v4416
      %v4691 = vpack.c.b16 %v4419, %v4418
      %v4692 = vpack.c.b16 %v4421, %v4420
      %v4693 = vpack.c.b16 %v4423, %v4422
      %v4694 = vpack.c.b16 %v4425, %v4424
      %v4695 = vpack.c.b16 %v4427, %v4426
      %v4696 = vpack.c.b16 %v4429, %v4428
      %v4697 = vpack.c.b16 %v4431, %v4430
      %v4698 = vpack.c.b16 %v4433, %v4432
      %v4699 = vpack.c.b16 %v4435, %v4434
      %v4700 = vpack.c.b16 %v4437, %v4436
      %v4701 = vpack.c.b16 %v4439, %v4438
      %v4702 = vpack.c.b16 %v4441, %v4440
      %v4703 = vpack.c.b16 %v4443, %v4442
      %v4704 = vpack.c.b16 %v4445, %v4444
      %v4705 = vpack.c.b16 %v4447, %v4446
      %v4706 = vpack.c.b16 %v4449, %v4448
      %v4707 = vpack.c.b16 %v4451, %v4450
      %4964 = vmatprep.subr.bf16.mxu0 0
      %4965 = vmatpush1.bf16.msra.mxu0 %v4452
      %4966 = vmatprep.subr.bf16.mxu0 0
      %4967 = vmatpush1.bf16.msra.mxu0 %v4453
      %4968 = vmatprep.subr.bf16.mxu0 0
      %4969 = vmatpush1.bf16.msra.mxu0 %v4454
      %4970 = vmatprep.subr.bf16.mxu0 0
      %4971 = vmatpush1.bf16.msra.mxu0 %v4455
      %4972 = vmatprep.subr.bf16.mxu0 0
      %4973 = vmatpush1.bf16.msra.mxu0 %v4456
      %4974 = vmatprep.subr.bf16.mxu0 0
      %4975 = vmatpush1.bf16.msra.mxu0 %v4457
      %4976 = vmatprep.subr.bf16.mxu0 0
      %4977 = vmatpush1.bf16.msra.mxu0 %v4458
      %4978 = vmatprep.subr.bf16.mxu0 0
      %4979 = vmatpush1.bf16.msra.mxu0 %v4459
      %4980 = vmatprep.subr.bf16.mxu0 0
      %4981 = vmatpush1.bf16.msra.mxu0 %v4460
      %4982 = vmatprep.subr.bf16.mxu0 0
      %4983 = vmatpush1.bf16.msra.mxu0 %v4461
      %4984 = vmatprep.subr.bf16.mxu0 0
      %4985 = vmatpush1.bf16.msra.mxu0 %v4462
      %4986 = vmatprep.subr.bf16.mxu0 0
      %4987 = vmatpush1.bf16.msra.mxu0 %v4463
      %4988 = vmatprep.subr.bf16.mxu0 0
      %4989 = vmatpush1.bf16.msra.mxu0 %v4464
      %4990 = vmatprep.subr.bf16.mxu0 0
      %4991 = vmatpush1.bf16.msra.mxu0 %v4465
      %4992 = vmatprep.subr.bf16.mxu0 0
      %4993 = vmatpush1.bf16.msra.mxu0 %v4466
      %4994 = vmatprep.subr.bf16.mxu0 0
      %4995 = vmatpush1.bf16.msra.mxu0 %v4467
      %4996 = vmatprep.mubr.bf16.mxu0 %v2882
      %4997 = vmatmul.mubr.bf16.gmra.mrb[0].mxu0 %v2881
      %v4998 = vpop.f32.mrb[0].mxu0
      %v4999 = vadd.f32 0.0, %v4998
      %v5000 = vpop.f32.mrb[0].mxu0
      %v5001 = vpop.f32.mrb[0].mxu0
      %v5002 = vpop.f32.mrb[0].mxu0
      %5003 = vdwg.mxu0
      %5004 = vmatprep.subr.bf16.mxu0 0
      %5005 = vmatpush1.bf16.msra.mxu0 %v4468
      %5006 = vmatprep.subr.bf16.mxu0 0
      %5007 = vmatpush1.bf16.msra.mxu0 %v4469
      %5008 = vmatprep.subr.bf16.mxu0 0
      %5009 = vmatpush1.bf16.msra.mxu0 %v4470
      %5010 = vmatprep.subr.bf16.mxu0 0
      %5011 = vmatpush1.bf16.msra.mxu0 %v4471
      %5012 = vmatprep.subr.bf16.mxu0 0
      %5013 = vmatpush1.bf16.msra.mxu0 %v4472
      %5014 = vmatprep.subr.bf16.mxu0 0
      %5015 = vmatpush1.bf16.msra.mxu0 %v4473
      %5016 = vmatprep.subr.bf16.mxu0 0
      %5017 = vmatpush1.bf16.msra.mxu0 %v4474
      %5018 = vmatprep.subr.bf16.mxu0 0
      %5019 = vmatpush1.bf16.msra.mxu0 %v4475
      %5020 = vmatprep.subr.bf16.mxu0 0
      %5021 = vmatpush1.bf16.msra.mxu0 %v4476
      %5022 = vmatprep.subr.bf16.mxu0 0
      %5023 = vmatpush1.bf16.msra.mxu0 %v4477
      %5024 = vmatprep.subr.bf16.mxu0 0
      %5025 = vmatpush1.bf16.msra.mxu0 %v4478
      %5026 = vmatprep.subr.bf16.mxu0 0
      %5027 = vmatpush1.bf16.msra.mxu0 %v4479
      %5028 = vmatprep.subr.bf16.mxu0 0
      %5029 = vmatpush1.bf16.msra.mxu0 %v4480
      %5030 = vmatprep.subr.bf16.mxu0 0
      %5031 = vmatpush1.bf16.msra.mxu0 %v4481
      %5032 = vmatprep.subr.bf16.mxu0 0
      %5033 = vmatpush1.bf16.msra.mxu0 %v4482
      %5034 = vmatprep.subr.bf16.mxu0 0
      %5035 = vmatpush1.bf16.msra.mxu0 %v4483
      %5036 = vmatprep.mubr.bf16.mxu0 %v2884
      %5037 = vmatmul.mubr.bf16.gmra.mrb[0].mxu0 %v2883
      %v5038 = vpop.f32.mrb[0].mxu0
      %v5039 = vadd.f32 %v4999, %v5038
      %v5040 = vpop.f32.mrb[0].mxu0
      %v5041 = vpop.f32.mrb[0].mxu0
      %v5042 = vpop.f32.mrb[0].mxu0
      %5043 = vdwg.mxu0
      %5044 = vmatprep.subr.bf16.mxu0 0
      %5045 = vmatpush1.bf16.msra.mxu0 %v4484
      %5046 = vmatprep.subr.bf16.mxu0 0
      %5047 = vmatpush1.bf16.msra.mxu0 %v4485
      %5048 = vmatprep.subr.bf16.mxu0 0
      %5049 = vmatpush1.bf16.msra.mxu0 %v4486
      %5050 = vmatprep.subr.bf16.mxu0 0
      %5051 = vmatpush1.bf16.msra.mxu0 %v4487
      %5052 = vmatprep.subr.bf16.mxu0 0
      %5053 = vmatpush1.bf16.msra.mxu0 %v4488
      %5054 = vmatprep.subr.bf16.mxu0 0
      %5055 = vmatpush1.bf16.msra.mxu0 %v4489
      %5056 = vmatprep.subr.bf16.mxu0 0
      %5057 = vmatpush1.bf16.msra.mxu0 %v4490
      %5058 = vmatprep.subr.bf16.mxu0 0
      %5059 = vmatpush1.bf16.msra.mxu0 %v4491
      %5060 = vmatprep.subr.bf16.mxu0 0
      %5061 = vmatpush1.bf16.msra.mxu0 %v4492
      %5062 = vmatprep.subr.bf16.mxu0 0
      %5063 = vmatpush1.bf16.msra.mxu0 %v4493
      %5064 = vmatprep.subr.bf16.mxu0 0
      %5065 = vmatpush1.bf16.msra.mxu0 %v4494
      %5066 = vmatprep.subr.bf16.mxu0 0
      %5067 = vmatpush1.bf16.msra.mxu0 %v4495
      %5068 = vmatprep.subr.bf16.mxu0 0
      %5069 = vmatpush1.bf16.msra.mxu0 %v4496
      %5070 = vmatprep.subr.bf16.mxu0 0
      %5071 = vmatpush1.bf16.msra.mxu0 %v4497
      %5072 = vmatprep.subr.bf16.mxu0 0
      %5073 = vmatpush1.bf16.msra.mxu0 %v4498
      %5074 = vmatprep.subr.bf16.mxu0 0
      %5075 = vmatpush1.bf16.msra.mxu0 %v4499
      %5076 = vmatprep.mubr.bf16.mxu0 %v2886
      %5077 = vmatmul.mubr.bf16.gmra.mrb[0].mxu0 %v2885
      %v5078 = vpop.f32.mrb[0].mxu0
      %v5079 = vadd.f32 %v5039, %v5078
      %v5080 = vpop.f32.mrb[0].mxu0
      %v5081 = vpop.f32.mrb[0].mxu0
      %v5082 = vpop.f32.mrb[0].mxu0
      %5083 = vdwg.mxu0
      %5084 = vmatprep.subr.bf16.mxu0 0
      %5085 = vmatpush1.bf16.msra.mxu0 %v4500
      %5086 = vmatprep.subr.bf16.mxu0 0
      %5087 = vmatpush1.bf16.msra.mxu0 %v4501
      %5088 = vmatprep.subr.bf16.mxu0 0
      %5089 = vmatpush1.bf16.msra.mxu0 %v4502
      %5090 = vmatprep.subr.bf16.mxu0 0
      %5091 = vmatpush1.bf16.msra.mxu0 %v4503
      %5092 = vmatprep.subr.bf16.mxu0 0
      %5093 = vmatpush1.bf16.msra.mxu0 %v4504
      %5094 = vmatprep.subr.bf16.mxu0 0
      %5095 = vmatpush1.bf16.msra.mxu0 %v4505
      %5096 = vmatprep.subr.bf16.mxu0 0
      %5097 = vmatpush1.bf16.msra.mxu0 %v4506
      %5098 = vmatprep.subr.bf16.mxu0 0
      %5099 = vmatpush1.bf16.msra.mxu0 %v4507
      %5100 = vmatprep.subr.bf16.mxu0 0
      %5101 = vmatpush1.bf16.msra.mxu0 %v4508
      %5102 = vmatprep.subr.bf16.mxu0 0
      %5103 = vmatpush1.bf16.msra.mxu0 %v4509
      %5104 = vmatprep.subr.bf16.mxu0 0
      %5105 = vmatpush1.bf16.msra.mxu0 %v4510
      %5106 = vmatprep.subr.bf16.mxu0 0
      %5107 = vmatpush1.bf16.msra.mxu0 %v4511
      %5108 = vmatprep.subr.bf16.mxu0 0
      %5109 = vmatpush1.bf16.msra.mxu0 %v4512
      %5110 = vmatprep.subr.bf16.mxu0 0
      %5111 = vmatpush1.bf16.msra.mxu0 %v4513
      %5112 = vmatprep.subr.bf16.mxu0 0
      %5113 = vmatpush1.bf16.msra.mxu0 %v4514
      %5114 = vmatprep.subr.bf16.mxu0 0
      %5115 = vmatpush1.bf16.msra.mxu0 %v4515
      %5116 = vmatprep.mubr.bf16.mxu0 %v2888
      %5117 = vmatmul.mubr.bf16.gmra.mrb[0].mxu0 %v2887
      %v5118 = vpop.f32.mrb[0].mxu0
      %v5119 = vadd.f32 %v5079, %v5118
      %v5120 = vpop.f32.mrb[0].mxu0
      %v5121 = vpop.f32.mrb[0].mxu0
      %v5122 = vpop.f32.mrb[0].mxu0
      %5123 = vdwg.mxu0
      %5124 = vmatprep.subr.bf16.mxu0 0
      %5125 = vmatpush1.bf16.msra.mxu0 %v4516
      %5126 = vmatprep.subr.bf16.mxu0 0
      %5127 = vmatpush1.bf16.msra.mxu0 %v4517
      %5128 = vmatprep.subr.bf16.mxu0 0
      %5129 = vmatpush1.bf16.msra.mxu0 %v4518
      %5130 = vmatprep.subr.bf16.mxu0 0
      %5131 = vmatpush1.bf16.msra.mxu0 %v4519
      %5132 = vmatprep.subr.bf16.mxu0 0
      %5133 = vmatpush1.bf16.msra.mxu0 %v4520
      %5134 = vmatprep.subr.bf16.mxu0 0
      %5135 = vmatpush1.bf16.msra.mxu0 %v4521
      %5136 = vmatprep.subr.bf16.mxu0 0
      %5137 = vmatpush1.bf16.msra.mxu0 %v4522
      %5138 = vmatprep.subr.bf16.mxu0 0
      %5139 = vmatpush1.bf16.msra.mxu0 %v4523
      %5140 = vmatprep.subr.bf16.mxu0 0
      %5141 = vmatpush1.bf16.msra.mxu0 %v4524
      %5142 = vmatprep.subr.bf16.mxu0 0
      %5143 = vmatpush1.bf16.msra.mxu0 %v4525
      %5144 = vmatprep.subr.bf16.mxu0 0
      %5145 = vmatpush1.bf16.msra.mxu0 %v4526
      %5146 = vmatprep.subr.bf16.mxu0 0
      %5147 = vmatpush1.bf16.msra.mxu0 %v4527
      %5148 = vmatprep.subr.bf16.mxu0 0
      %5149 = vmatpush1.bf16.msra.mxu0 %v4528
      %5150 = vmatprep.subr.bf16.mxu0 0
      %5151 = vmatpush1.bf16.msra.mxu0 %v4529
      %5152 = vmatprep.subr.bf16.mxu0 0
      %5153 = vmatpush1.bf16.msra.mxu0 %v4530
      %5154 = vmatprep.subr.bf16.mxu0 0
      %5155 = vmatpush1.bf16.msra.mxu0 %v4531
      %5156 = vmatprep.mubr.bf16.mxu0 %v2890
      %5157 = vmatmul.mubr.bf16.gmra.mrb[0].mxu0 %v2889
      %v5158 = vpop.f32.mrb[0].mxu0
      %v5159 = vadd.f32 %v5119, %v5158
      %v5160 = vpop.f32.mrb[0].mxu0
      %v5161 = vpop.f32.mrb[0].mxu0
      %v5162 = vpop.f32.mrb[0].mxu0
      %5163 = vdwg.mxu0
      %5164 = vmatprep.subr.bf16.mxu0 0
      %5165 = vmatpush1.bf16.msra.mxu0 %v4532
      %5166 = vmatprep.subr.bf16.mxu0 0
      %5167 = vmatpush1.bf16.msra.mxu0 %v4533
      %5168 = vmatprep.subr.bf16.mxu0 0
      %5169 = vmatpush1.bf16.msra.mxu0 %v4534
      %5170 = vmatprep.subr.bf16.mxu0 0
      %5171 = vmatpush1.bf16.msra.mxu0 %v4535
      %5172 = vmatprep.subr.bf16.mxu0 0
      %5173 = vmatpush1.bf16.msra.mxu0 %v4536
      %5174 = vmatprep.subr.bf16.mxu0 0
      %5175 = vmatpush1.bf16.msra.mxu0 %v4537
      %5176 = vmatprep.subr.bf16.mxu0 0
      %5177 = vmatpush1.bf16.msra.mxu0 %v4538
      %5178 = vmatprep.subr.bf16.mxu0 0
      %5179 = vmatpush1.bf16.msra.mxu0 %v4539
      %5180 = vmatprep.subr.bf16.mxu0 0
      %5181 = vmatpush1.bf16.msra.mxu0 %v4540
      %5182 = vmatprep.subr.bf16.mxu0 0
      %5183 = vmatpush1.bf16.msra.mxu0 %v4541
      %5184 = vmatprep.subr.bf16.mxu0 0
      %5185 = vmatpush1.bf16.msra.mxu0 %v4542
      %5186 = vmatprep.subr.bf16.mxu0 0
      %5187 = vmatpush1.bf16.msra.mxu0 %v4543
      %5188 = vmatprep.subr.bf16.mxu0 0
      %5189 = vmatpush1.bf16.msra.mxu0 %v4544
      %5190 = vmatprep.subr.bf16.mxu0 0
      %5191 = vmatpush1.bf16.msra.mxu0 %v4545
      %5192 = vmatprep.subr.bf16.mxu0 0
      %5193 = vmatpush1.bf16.msra.mxu0 %v4546
      %5194 = vmatprep.subr.bf16.mxu0 0
      %5195 = vmatpush1.bf16.msra.mxu0 %v4547
      %5196 = vmatprep.mubr.bf16.mxu0 %v2892
      %5197 = vmatmul.mubr.bf16.gmra.mrb[0].mxu0 %v2891
      %v5198 = vpop.f32.mrb[0].mxu0
      %v5199 = vadd.f32 %v5159, %v5198
      %v5200 = vpop.f32.mrb[0].mxu0
      %v5201 = vpop.f32.mrb[0].mxu0
      %v5202 = vpop.f32.mrb[0].mxu0
      %5203 = vdwg.mxu0
      %5204 = vmatprep.subr.bf16.mxu0 0
      %5205 = vmatpush1.bf16.msra.mxu0 %v4548
      %5206 = vmatprep.subr.bf16.mxu0 0
      %5207 = vmatpush1.bf16.msra.mxu0 %v4549
      %5208 = vmatprep.subr.bf16.mxu0 0
      %5209 = vmatpush1.bf16.msra.mxu0 %v4550
      %5210 = vmatprep.subr.bf16.mxu0 0
      %5211 = vmatpush1.bf16.msra.mxu0 %v4551
      %5212 = vmatprep.subr.bf16.mxu0 0
      %5213 = vmatpush1.bf16.msra.mxu0 %v4552
      %5214 = vmatprep.subr.bf16.mxu0 0
      %5215 = vmatpush1.bf16.msra.mxu0 %v4553
      %5216 = vmatprep.subr.bf16.mxu0 0
      %5217 = vmatpush1.bf16.msra.mxu0 %v4554
      %5218 = vmatprep.subr.bf16.mxu0 0
      %5219 = vmatpush1.bf16.msra.mxu0 %v4555
      %5220 = vmatprep.subr.bf16.mxu0 0
      %5221 = vmatpush1.bf16.msra.mxu0 %v4556
      %5222 = vmatprep.subr.bf16.mxu0 0
      %5223 = vmatpush1.bf16.msra.mxu0 %v4557
      %5224 = vmatprep.subr.bf16.mxu0 0
      %5225 = vmatpush1.bf16.msra.mxu0 %v4558
      %5226 = vmatprep.subr.bf16.mxu0 0
      %5227 = vmatpush1.bf16.msra.mxu0 %v4559
      %5228 = vmatprep.subr.bf16.mxu0 0
      %5229 = vmatpush1.bf16.msra.mxu0 %v4560
      %5230 = vmatprep.subr.bf16.mxu0 0
      %5231 = vmatpush1.bf16.msra.mxu0 %v4561
      %5232 = vmatprep.subr.bf16.mxu0 0
      %5233 = vmatpush1.bf16.msra.mxu0 %v4562
      %5234 = vmatprep.subr.bf16.mxu0 0
      %5235 = vmatpush1.bf16.msra.mxu0 %v4563
      %5236 = vmatprep.mubr.bf16.mxu0 %v2894
      %5237 = vmatmul.mubr.bf16.gmra.mrb[0].mxu0 %v2893
      %v5238 = vpop.f32.mrb[0].mxu0
      %v5239 = vadd.f32 %v5199, %v5238
      %v5240 = vpop.f32.mrb[0].mxu0
      %v5241 = vpop.f32.mrb[0].mxu0
      %v5242 = vpop.f32.mrb[0].mxu0
      %5243 = vdwg.mxu0
      %5244 = vmatprep.subr.bf16.mxu0 0
      %5245 = vmatpush1.bf16.msra.mxu0 %v4564
      %5246 = vmatprep.subr.bf16.mxu0 0
      %5247 = vmatpush1.bf16.msra.mxu0 %v4565
      %5248 = vmatprep.subr.bf16.mxu0 0
      %5249 = vmatpush1.bf16.msra.mxu0 %v4566
      %5250 = vmatprep.subr.bf16.mxu0 0
      %5251 = vmatpush1.bf16.msra.mxu0 %v4567
      %5252 = vmatprep.subr.bf16.mxu0 0
      %5253 = vmatpush1.bf16.msra.mxu0 %v4568
      %5254 = vmatprep.subr.bf16.mxu0 0
      %5255 = vmatpush1.bf16.msra.mxu0 %v4569
      %5256 = vmatprep.subr.bf16.mxu0 0
      %5257 = vmatpush1.bf16.msra.mxu0 %v4570
      %5258 = vmatprep.subr.bf16.mxu0 0
      %5259 = vmatpush1.bf16.msra.mxu0 %v4571
      %5260 = vmatprep.subr.bf16.mxu0 0
      %5261 = vmatpush1.bf16.msra.mxu0 %v4572
      %5262 = vmatprep.subr.bf16.mxu0 0
      %5263 = vmatpush1.bf16.msra.mxu0 %v4573
      %5264 = vmatprep.subr.bf16.mxu0 0
      %5265 = vmatpush1.bf16.msra.mxu0 %v4574
      %5266 = vmatprep.subr.bf16.mxu0 0
      %5267 = vmatpush1.bf16.msra.mxu0 %v4575
      %5268 = vmatprep.subr.bf16.mxu0 0
      %5269 = vmatpush1.bf16.msra.mxu0 %v4576
      %5270 = vmatprep.subr.bf16.mxu0 0
      %5271 = vmatpush1.bf16.msra.mxu0 %v4577
      %5272 = vmatprep.subr.bf16.mxu0 0
      %5273 = vmatpush1.bf16.msra.mxu0 %v4578
      %5274 = vmatprep.subr.bf16.mxu0 0
      %5275 = vmatpush1.bf16.msra.mxu0 %v4579
      %5276 = vmatprep.mubr.bf16.mxu0 %v2896
      %5277 = vmatmul.mubr.bf16.gmra.mrb[0].mxu0 %v2895
      %v5278 = vpop.f32.mrb[0].mxu0
      %v5279 = vadd.f32 %v5239, %v5278
      %v5280 = vpop.f32.mrb[0].mxu0
      %v5281 = vpop.f32.mrb[0].mxu0
      %v5282 = vpop.f32.mrb[0].mxu0
      %5283 = vdwg.mxu0
      %5284 = vmatprep.subr.bf16.mxu0 0
      %5285 = vmatpush1.bf16.msra.mxu0 %v4580
      %5286 = vmatprep.subr.bf16.mxu0 0
      %5287 = vmatpush1.bf16.msra.mxu0 %v4581
      %5288 = vmatprep.subr.bf16.mxu0 0
      %5289 = vmatpush1.bf16.msra.mxu0 %v4582
      %5290 = vmatprep.subr.bf16.mxu0 0
      %5291 = vmatpush1.bf16.msra.mxu0 %v4583
      %5292 = vmatprep.subr.bf16.mxu0 0
      %5293 = vmatpush1.bf16.msra.mxu0 %v4584
      %5294 = vmatprep.subr.bf16.mxu0 0
      %5295 = vmatpush1.bf16.msra.mxu0 %v4585
      %5296 = vmatprep.subr.bf16.mxu0 0
      %5297 = vmatpush1.bf16.msra.mxu0 %v4586
      %5298 = vmatprep.subr.bf16.mxu0 0
      %5299 = vmatpush1.bf16.msra.mxu0 %v4587
      %5300 = vmatprep.subr.bf16.mxu0 0
      %5301 = vmatpush1.bf16.msra.mxu0 %v4588
      %5302 = vmatprep.subr.bf16.mxu0 0
      %5303 = vmatpush1.bf16.msra.mxu0 %v4589
      %5304 = vmatprep.subr.bf16.mxu0 0
      %5305 = vmatpush1.bf16.msra.mxu0 %v4590
      %5306 = vmatprep.subr.bf16.mxu0 0
      %5307 = vmatpush1.bf16.msra.mxu0 %v4591
      %5308 = vmatprep.subr.bf16.mxu0 0
      %5309 = vmatpush1.bf16.msra.mxu0 %v4592
      %5310 = vmatprep.subr.bf16.mxu0 0
      %5311 = vmatpush1.bf16.msra.mxu0 %v4593
      %5312 = vmatprep.subr.bf16.mxu0 0
      %5313 = vmatpush1.bf16.msra.mxu0 %v4594
      %5314 = vmatprep.subr.bf16.mxu0 0
      %5315 = vmatpush1.bf16.msra.mxu0 %v4595
      %5316 = vmatprep.mubr.bf16.mxu0 %v2898
      %5317 = vmatmul.mubr.bf16.gmra.mrb[0].mxu0 %v2897
      %v5318 = vpop.f32.mrb[0].mxu0
      %v5319 = vadd.f32 %v5279, %v5318
      %v5320 = vpop.f32.mrb[0].mxu0
      %v5321 = vpop.f32.mrb[0].mxu0
      %v5322 = vpop.f32.mrb[0].mxu0
      %5323 = vdwg.mxu0
      %5324 = vmatprep.subr.bf16.mxu0 0
      %5325 = vmatpush1.bf16.msra.mxu0 %v4596
      %5326 = vmatprep.subr.bf16.mxu0 0
      %5327 = vmatpush1.bf16.msra.mxu0 %v4597
      %5328 = vmatprep.subr.bf16.mxu0 0
      %5329 = vmatpush1.bf16.msra.mxu0 %v4598
      %5330 = vmatprep.subr.bf16.mxu0 0
      %5331 = vmatpush1.bf16.msra.mxu0 %v4599
      %5332 = vmatprep.subr.bf16.mxu0 0
      %5333 = vmatpush1.bf16.msra.mxu0 %v4600
      %5334 = vmatprep.subr.bf16.mxu0 0
      %5335 = vmatpush1.bf16.msra.mxu0 %v4601
      %5336 = vmatprep.subr.bf16.mxu0 0
      %5337 = vmatpush1.bf16.msra.mxu0 %v4602
      %5338 = vmatprep.subr.bf16.mxu0 0
      %5339 = vmatpush1.bf16.msra.mxu0 %v4603
      %5340 = vmatprep.subr.bf16.mxu0 0
      %5341 = vmatpush1.bf16.msra.mxu0 %v4604
      %5342 = vmatprep.subr.bf16.mxu0 0
      %5343 = vmatpush1.bf16.msra.mxu0 %v4605
      %5344 = vmatprep.subr.bf16.mxu0 0
      %5345 = vmatpush1.bf16.msra.mxu0 %v4606
      %5346 = vmatprep.subr.bf16.mxu0 0
      %5347 = vmatpush1.bf16.msra.mxu0 %v4607
      %5348 = vmatprep.subr.bf16.mxu0 0
      %5349 = vmatpush1.bf16.msra.mxu0 %v4608
      %5350 = vmatprep.subr.bf16.mxu0 0
      %5351 = vmatpush1.bf16.msra.mxu0 %v4609
      %5352 = vmatprep.subr.bf16.mxu0 0
      %5353 = vmatpush1.bf16.msra.mxu0 %v4610
      %5354 = vmatprep.subr.bf16.mxu0 0
      %5355 = vmatpush1.bf16.msra.mxu0 %v4611
      %5356 = vmatprep.mubr.bf16.mxu0 %v2900
      %5357 = vmatmul.mubr.bf16.gmra.mrb[0].mxu0 %v2899
      %v5358 = vpop.f32.mrb[0].mxu0
      %v5359 = vadd.f32 %v5319, %v5358
      %v5360 = vpop.f32.mrb[0].mxu0
      %v5361 = vpop.f32.mrb[0].mxu0
      %v5362 = vpop.f32.mrb[0].mxu0
      %5363 = vdwg.mxu0
      %5364 = vmatprep.subr.bf16.mxu0 0
      %5365 = vmatpush1.bf16.msra.mxu0 %v4612
      %5366 = vmatprep.subr.bf16.mxu0 0
      %5367 = vmatpush1.bf16.msra.mxu0 %v4613
      %5368 = vmatprep.subr.bf16.mxu0 0
      %5369 = vmatpush1.bf16.msra.mxu0 %v4614
      %5370 = vmatprep.subr.bf16.mxu0 0
      %5371 = vmatpush1.bf16.msra.mxu0 %v4615
      %5372 = vmatprep.subr.bf16.mxu0 0
      %5373 = vmatpush1.bf16.msra.mxu0 %v4616
      %5374 = vmatprep.subr.bf16.mxu0 0
      %5375 = vmatpush1.bf16.msra.mxu0 %v4617
      %5376 = vmatprep.subr.bf16.mxu0 0
      %5377 = vmatpush1.bf16.msra.mxu0 %v4618
      %5378 = vmatprep.subr.bf16.mxu0 0
      %5379 = vmatpush1.bf16.msra.mxu0 %v4619
      %5380 = vmatprep.subr.bf16.mxu0 0
      %5381 = vmatpush1.bf16.msra.mxu0 %v4620
      %5382 = vmatprep.subr.bf16.mxu0 0
      %5383 = vmatpush1.bf16.msra.mxu0 %v4621
      %5384 = vmatprep.subr.bf16.mxu0 0
      %5385 = vmatpush1.bf16.msra.mxu0 %v4622
      %5386 = vmatprep.subr.bf16.mxu0 0
      %5387 = vmatpush1.bf16.msra.mxu0 %v4623
      %5388 = vmatprep.subr.bf16.mxu0 0
      %5389 = vmatpush1.bf16.msra.mxu0 %v4624
      %5390 = vmatprep.subr.bf16.mxu0 0
      %5391 = vmatpush1.bf16.msra.mxu0 %v4625
      %5392 = vmatprep.subr.bf16.mxu0 0
      %5393 = vmatpush1.bf16.msra.mxu0 %v4626
      %5394 = vmatprep.subr.bf16.mxu0 0
      %5395 = vmatpush1.bf16.msra.mxu0 %v4627
      %5396 = vmatprep.mubr.bf16.mxu0 %v2902
      %5397 = vmatmul.mubr.bf16.gmra.mrb[0].mxu0 %v2901
      %v5398 = vpop.f32.mrb[0].mxu0
      %v5399 = vadd.f32 %v5359, %v5398
      %v5400 = vpop.f32.mrb[0].mxu0
      %v5401 = vpop.f32.mrb[0].mxu0
      %v5402 = vpop.f32.mrb[0].mxu0
      %5403 = vdwg.mxu0
      %5404 = vmatprep.subr.bf16.mxu0 0
      %5405 = vmatpush1.bf16.msra.mxu0 %v4628
      %5406 = vmatprep.subr.bf16.mxu0 0
      %5407 = vmatpush1.bf16.msra.mxu0 %v4629
      %5408 = vmatprep.subr.bf16.mxu0 0
      %5409 = vmatpush1.bf16.msra.mxu0 %v4630
      %5410 = vmatprep.subr.bf16.mxu0 0
      %5411 = vmatpush1.bf16.msra.mxu0 %v4631
      %5412 = vmatprep.subr.bf16.mxu0 0
      %5413 = vmatpush1.bf16.msra.mxu0 %v4632
      %5414 = vmatprep.subr.bf16.mxu0 0
      %5415 = vmatpush1.bf16.msra.mxu0 %v4633
      %5416 = vmatprep.subr.bf16.mxu0 0
      %5417 = vmatpush1.bf16.msra.mxu0 %v4634
      %5418 = vmatprep.subr.bf16.mxu0 0
      %5419 = vmatpush1.bf16.msra.mxu0 %v4635
      %5420 = vmatprep.subr.bf16.mxu0 0
      %5421 = vmatpush1.bf16.msra.mxu0 %v4636
      %5422 = vmatprep.subr.bf16.mxu0 0
      %5423 = vmatpush1.bf16.msra.mxu0 %v4637
      %5424 = vmatprep.subr.bf16.mxu0 0
      %5425 = vmatpush1.bf16.msra.mxu0 %v4638
      %5426 = vmatprep.subr.bf16.mxu0 0
      %5427 = vmatpush1.bf16.msra.mxu0 %v4639
      %5428 = vmatprep.subr.bf16.mxu0 0
      %5429 = vmatpush1.bf16.msra.mxu0 %v4640
      %5430 = vmatprep.subr.bf16.mxu0 0
      %5431 = vmatpush1.bf16.msra.mxu0 %v4641
      %5432 = vmatprep.subr.bf16.mxu0 0
      %5433 = vmatpush1.bf16.msra.mxu0 %v4642
      %5434 = vmatprep.subr.bf16.mxu0 0
      %5435 = vmatpush1.bf16.msra.mxu0 %v4643
      %5436 = vmatprep.mubr.bf16.mxu0 %v2904
      %5437 = vmatmul.mubr.bf16.gmra.mrb[0].mxu0 %v2903
      %v5438 = vpop.f32.mrb[0].mxu0
      %v5439 = vadd.f32 %v5399, %v5438
      %v5440 = vpop.f32.mrb[0].mxu0
      %v5441 = vpop.f32.mrb[0].mxu0
      %v5442 = vpop.f32.mrb[0].mxu0
      %5443 = vdwg.mxu0
      %5444 = vmatprep.subr.bf16.mxu0 0
      %5445 = vmatpush1.bf16.msra.mxu0 %v4644
      %5446 = vmatprep.subr.bf16.mxu0 0
      %5447 = vmatpush1.bf16.msra.mxu0 %v4645
      %5448 = vmatprep.subr.bf16.mxu0 0
      %5449 = vmatpush1.bf16.msra.mxu0 %v4646
      %5450 = vmatprep.subr.bf16.mxu0 0
      %5451 = vmatpush1.bf16.msra.mxu0 %v4647
      %5452 = vmatprep.subr.bf16.mxu0 0
      %5453 = vmatpush1.bf16.msra.mxu0 %v4648
      %5454 = vmatprep.subr.bf16.mxu0 0
      %5455 = vmatpush1.bf16.msra.mxu0 %v4649
      %5456 = vmatprep.subr.bf16.mxu0 0
      %5457 = vmatpush1.bf16.msra.mxu0 %v4650
      %5458 = vmatprep.subr.bf16.mxu0 0
      %5459 = vmatpush1.bf16.msra.mxu0 %v4651
      %5460 = vmatprep.subr.bf16.mxu0 0
      %5461 = vmatpush1.bf16.msra.mxu0 %v4652
      %5462 = vmatprep.subr.bf16.mxu0 0
      %5463 = vmatpush1.bf16.msra.mxu0 %v4653
      %5464 = vmatprep.subr.bf16.mxu0 0
      %5465 = vmatpush1.bf16.msra.mxu0 %v4654
      %5466 = vmatprep.subr.bf16.mxu0 0
      %5467 = vmatpush1.bf16.msra.mxu0 %v4655
      %5468 = vmatprep.subr.bf16.mxu0 0
      %5469 = vmatpush1.bf16.msra.mxu0 %v4656
      %5470 = vmatprep.subr.bf16.mxu0 0
      %5471 = vmatpush1.bf16.msra.mxu0 %v4657
      %5472 = vmatprep.subr.bf16.mxu0 0
      %5473 = vmatpush1.bf16.msra.mxu0 %v4658
      %5474 = vmatprep.subr.bf16.mxu0 0
      %5475 = vmatpush1.bf16.msra.mxu0 %v4659
      %5476 = vmatprep.mubr.bf16.mxu0 %v2906
      %5477 = vmatmul.mubr.bf16.gmra.mrb[0].mxu0 %v2905
      %v5478 = vpop.f32.mrb[0].mxu0
      %v5479 = vadd.f32 %v5439, %v5478
      %v5480 = vpop.f32.mrb[0].mxu0
      %v5481 = vpop.f32.mrb[0].mxu0
      %v5482 = vpop.f32.mrb[0].mxu0
      %5483 = vdwg.mxu0
      %5484 = vmatprep.subr.bf16.mxu0 0
      %5485 = vmatpush1.bf16.msra.mxu0 %v4660
      %5486 = vmatprep.subr.bf16.mxu0 0
      %5487 = vmatpush1.bf16.msra.mxu0 %v4661
      %5488 = vmatprep.subr.bf16.mxu0 0
      %5489 = vmatpush1.bf16.msra.mxu0 %v4662
      %5490 = vmatprep.subr.bf16.mxu0 0
      %5491 = vmatpush1.bf16.msra.mxu0 %v4663
      %5492 = vmatprep.subr.bf16.mxu0 0
      %5493 = vmatpush1.bf16.msra.mxu0 %v4664
      %5494 = vmatprep.subr.bf16.mxu0 0
      %5495 = vmatpush1.bf16.msra.mxu0 %v4665
      %5496 = vmatprep.subr.bf16.mxu0 0
      %5497 = vmatpush1.bf16.msra.mxu0 %v4666
      %5498 = vmatprep.subr.bf16.mxu0 0
      %5499 = vmatpush1.bf16.msra.mxu0 %v4667
      %5500 = vmatprep.subr.bf16.mxu0 0
      %5501 = vmatpush1.bf16.msra.mxu0 %v4668
      %5502 = vmatprep.subr.bf16.mxu0 0
      %5503 = vmatpush1.bf16.msra.mxu0 %v4669
      %5504 = vmatprep.subr.bf16.mxu0 0
      %5505 = vmatpush1.bf16.msra.mxu0 %v4670
      %5506 = vmatprep.subr.bf16.mxu0 0
      %5507 = vmatpush1.bf16.msra.mxu0 %v4671
      %5508 = vmatprep.subr.bf16.mxu0 0
      %5509 = vmatpush1.bf16.msra.mxu0 %v4672
      %5510 = vmatprep.subr.bf16.mxu0 0
      %5511 = vmatpush1.bf16.msra.mxu0 %v4673
      %5512 = vmatprep.subr.bf16.mxu0 0
      %5513 = vmatpush1.bf16.msra.mxu0 %v4674
      %5514 = vmatprep.subr.bf16.mxu0 0
      %5515 = vmatpush1.bf16.msra.mxu0 %v4675
      %5516 = vmatprep.mubr.bf16.mxu0 %v2908
      %5517 = vmatmul.mubr.bf16.gmra.mrb[0].mxu0 %v2907
      %v5518 = vpop.f32.mrb[0].mxu0
      %v5519 = vadd.f32 %v5479, %v5518
      %v5520 = vpop.f32.mrb[0].mxu0
      %v5521 = vpop.f32.mrb[0].mxu0
      %v5522 = vpop.f32.mrb[0].mxu0
      %5523 = vdwg.mxu0
      %5524 = vmatprep.subr.bf16.mxu0 0
      %5525 = vmatpush1.bf16.msra.mxu0 %v4676
      %5526 = vmatprep.subr.bf16.mxu0 0
      %5527 = vmatpush1.bf16.msra.mxu0 %v4677
      %5528 = vmatprep.subr.bf16.mxu0 0
      %5529 = vmatpush1.bf16.msra.mxu0 %v4678
      %5530 = vmatprep.subr.bf16.mxu0 0
      %5531 = vmatpush1.bf16.msra.mxu0 %v4679
      %5532 = vmatprep.subr.bf16.mxu0 0
      %5533 = vmatpush1.bf16.msra.mxu0 %v4680
      %5534 = vmatprep.subr.bf16.mxu0 0
      %5535 = vmatpush1.bf16.msra.mxu0 %v4681
      %5536 = vmatprep.subr.bf16.mxu0 0
      %5537 = vmatpush1.bf16.msra.mxu0 %v4682
      %5538 = vmatprep.subr.bf16.mxu0 0
      %5539 = vmatpush1.bf16.msra.mxu0 %v4683
      %5540 = vmatprep.subr.bf16.mxu0 0
      %5541 = vmatpush1.bf16.msra.mxu0 %v4684
      %5542 = vmatprep.subr.bf16.mxu0 0
      %5543 = vmatpush1.bf16.msra.mxu0 %v4685
      %5544 = vmatprep.subr.bf16.mxu0 0
      %5545 = vmatpush1.bf16.msra.mxu0 %v4686
      %5546 = vmatprep.subr.bf16.mxu0 0
      %5547 = vmatpush1.bf16.msra.mxu0 %v4687
      %5548 = vmatprep.subr.bf16.mxu0 0
      %5549 = vmatpush1.bf16.msra.mxu0 %v4688
      %5550 = vmatprep.subr.bf16.mxu0 0
      %5551 = vmatpush1.bf16.msra.mxu0 %v4689
      %5552 = vmatprep.subr.bf16.mxu0 0
      %5553 = vmatpush1.bf16.msra.mxu0 %v4690
      %5554 = vmatprep.subr.bf16.mxu0 0
      %5555 = vmatpush1.bf16.msra.mxu0 %v4691
      %5556 = vmatprep.mubr.bf16.mxu0 %v2910
      %5557 = vmatmul.mubr.bf16.gmra.mrb[0].mxu0 %v2909
      %v5558 = vpop.f32.mrb[0].mxu0
      %v5559 = vadd.f32 %v5519, %v5558
      %v5560 = vpop.f32.mrb[0].mxu0
      %v5561 = vpop.f32.mrb[0].mxu0
      %v5562 = vpop.f32.mrb[0].mxu0
      %5563 = vdwg.mxu0
      %5564 = vmatprep.subr.bf16.mxu0 0
      %5565 = vmatpush1.bf16.msra.mxu0 %v4692
      %5566 = vmatprep.subr.bf16.mxu0 0
      %5567 = vmatpush1.bf16.msra.mxu0 %v4693
      %5568 = vmatprep.subr.bf16.mxu0 0
      %5569 = vmatpush1.bf16.msra.mxu0 %v4694
      %5570 = vmatprep.subr.bf16.mxu0 0
      %5571 = vmatpush1.bf16.msra.mxu0 %v4695
      %5572 = vmatprep.subr.bf16.mxu0 0
      %5573 = vmatpush1.bf16.msra.mxu0 %v4696
      %5574 = vmatprep.subr.bf16.mxu0 0
      %5575 = vmatpush1.bf16.msra.mxu0 %v4697
      %5576 = vmatprep.subr.bf16.mxu0 0
      %5577 = vmatpush1.bf16.msra.mxu0 %v4698
      %5578 = vmatprep.subr.bf16.mxu0 0
      %5579 = vmatpush1.bf16.msra.mxu0 %v4699
      %5580 = vmatprep.subr.bf16.mxu0 0
      %5581 = vmatpush1.bf16.msra.mxu0 %v4700
      %5582 = vmatprep.subr.bf16.mxu0 0
      %5583 = vmatpush1.bf16.msra.mxu0 %v4701
      %5584 = vmatprep.subr.bf16.mxu0 0
      %5585 = vmatpush1.bf16.msra.mxu0 %v4702
      %5586 = vmatprep.subr.bf16.mxu0 0
      %5587 = vmatpush1.bf16.msra.mxu0 %v4703
      %5588 = vmatprep.subr.bf16.mxu0 0
      %5589 = vmatpush1.bf16.msra.mxu0 %v4704
      %5590 = vmatprep.subr.bf16.mxu0 0
      %5591 = vmatpush1.bf16.msra.mxu0 %v4705
      %5592 = vmatprep.subr.bf16.mxu0 0
      %5593 = vmatpush1.bf16.msra.mxu0 %v4706
      %5594 = vmatprep.subr.bf16.mxu0 0
      %5595 = vmatpush1.bf16.msra.mxu0 %v4707
      %5596 = vmatprep.mubr.bf16.mxu0 %v2912
      %5597 = vmatmul.mubr.bf16.gmra.mrb[0].mxu0 %v2911
      %v5598 = vpop.f32.mrb[0].mxu0
      %v5599 = vadd.f32 %v5559, %v5598
      %v5600 = vpop.f32.mrb[0].mxu0
      %v5601 = vpop.f32.mrb[0].mxu0
      %v5602 = vpop.f32.mrb[0].mxu0
      %5603 = vdwg.mxu0
      %v5604 = vadd.f32 %v2767, %v5599
    $region94: #{tpu_custom_call.1} parent=1 // loop_footer
      %s2766 = sadd.s32 1, %s2762
    $region95: #{tpu_custom_call.1} parent=1 // loop_footer_branch
      %2761 = sbr.rel target = $region91
    $region96: #{tpu_custom_call.1} parent=1 // loop_exit
      _
    %5605 = vst [vmem:[#allocation20] sm:$0xff] %v2767
    // Predicated region
    $region97: #{tpu_custom_call.1} parent=1 // pred_check
      _
    $region98: #{tpu_custom_call.1} parent=1 // pred_check_branch
      %5607 = sbr.rel (0) target = $region100
    $region99: #{tpu_custom_call.1} parent=1 // pred_region
      %s5609 = ssub.s32 128, 128
      %5610 = vsyncadd [#allocation4], %s5609
      %s5612 = sshll.u32 [#allocation20], 4
      %s5613 = int_to_ptr.vmem [resolvable:$true] %s5612
      %5615 = dma.vmem_to_hbm [thread:$0]  %s5613, 128, %s11, [#allocation4]
    $region100: #{tpu_custom_call.1} parent=1 // pred_fallthru
      _
    // Predicated region
    $region101: #{tpu_custom_call.1} parent=1 // pred_check
      _
    $region102: #{tpu_custom_call.1} parent=1 // pred_check_branch
      %5617 = sbr.rel (0) target = $region104
    $region103: #{tpu_custom_call.1} parent=1 // pred_region
      %5618 = dma.done [#allocation4], 128
    $region104: #{tpu_custom_call.1} parent=1 // pred_fallthru
      _
    %5619 = vsyncpa [#allocation3], 1
    %5620 = vsyncpa [#allocation6], 1
    %5621 = vsyncpa [#allocation9], 1
    %5622 = vsyncpa [#allocation12], 1
    %5623 = vsyncpa [#allocation15], 1
    %5624 = vsyncpa [#allocation18], 1
    %5625 = vsyncpa [#allocation4], 1

</llo_original>
